<compile_context>
chip_gen: v7x
topology: tpu7x:2x2x1
jax: 0.10.0
libtpu: 0.0.40
codegen_flags: <defaults>
</compile_context>

<pallas_src>
import math

import jax
import jax.numpy as jnp
from jax.experimental import pallas as pl
from jax.experimental.pallas import tpu as pltpu

EPS = 1e-5  # PyTorch nn.LayerNorm default eps


# ----------------------------- shared math helpers ----------------------------
def _layernorm(x, gamma, beta):
    mu = jnp.mean(x, axis=-1, keepdims=True)
    var = jnp.mean((x - mu) ** 2, axis=-1, keepdims=True)
    return (x - mu) * jax.lax.rsqrt(var + EPS) * gamma + beta


def _gelu(x):
    # exact erf GELU (PyTorch nn.GELU default)
    return 0.5 * x * (1.0 + jax.lax.erf(x * (2.0 ** -0.5)))


def timestep_embedding(timesteps, dim, max_period=10000):
    half = dim // 2
    freqs = jnp.exp(-math.log(max_period) * jnp.arange(half, dtype=jnp.float32) / half)
    args = timesteps[:, None].astype(jnp.float32) * freqs[None, :]
    emb = jnp.concatenate([jnp.cos(args), jnp.sin(args)], axis=-1)
    if dim % 2:
        emb = jnp.concatenate([emb, jnp.zeros_like(emb[:, :1])], axis=-1)
    return emb


# ----------------------------------- kernel -----------------------------------
def make_layer_kernel(B, N, D, H, DH):
    I = H * DH
    R = B * N
    scale = DH ** -0.5
    bf16 = jnp.bfloat16

    def layer_kernel(x_ref, t_ref,
                     ln1g_ref, ln1b_ref, wqkv_ref, wo_ref, bo_ref,
                     ln2g_ref, ln2b_ref, wf1_ref, bf1_ref, wf2_ref, bf2_ref,
                     lnfg_ref, lnfb_ref, out_ref):
        d_idx = pl.program_id(0)
        last = pl.num_programs(0) - 1

        # Residual stream lives in the resident output block (carry over depth).
        @pl.when(d_idx == 0)
        def _init():
            out_ref[...] = x_ref[...]

        # Work on row-major (B*N, D): all projections / FF are row-batched and
        # lane-dense MXU matmuls.
        x = out_ref[...].reshape(R, D)                          # f32

        # ---------------- attention: x = attn(LN(x)) + x ----------------
        xn = _layernorm(x, ln1g_ref[0], ln1b_ref[0])
        qkv = jnp.dot(xn.astype(bf16), wqkv_ref[0],
                      preferred_element_type=jnp.float32)       # (R, 3I) f32

        # Per-head attention core (H small, unrolled).  Each head uses only
        # lane slices + leading-dim reshapes + canonical batched einsums.
        head_outs = []
        for h in range(H):
            qh = qkv[:, 0 * I + h * DH:0 * I + (h + 1) * DH].reshape(B, N, DH)
            kh = qkv[:, 1 * I + h * DH:1 * I + (h + 1) * DH].reshape(B, N, DH)
            vh = qkv[:, 2 * I + h * DH:2 * I + (h + 1) * DH].reshape(B, N, DH)
            dots = jnp.einsum('bqd,bkd->bqk', qh, kh,
                              preferred_element_type=jnp.float32) * scale
            m = jnp.max(dots, axis=-1, keepdims=True)
            e = jnp.exp(dots - m)
            p = e / jnp.sum(e, axis=-1, keepdims=True)          # exact softmax
            oh = jnp.einsum('bqk,bkd->bqd', p, vh,
                            preferred_element_type=jnp.float32)
            head_outs.append(oh.reshape(R, DH))
        o = jnp.concatenate(head_outs, axis=-1)                 # (R, I), lane-dense

        attn_out = jnp.dot(o.astype(bf16), wo_ref[0],
                           preferred_element_type=jnp.float32) + bo_ref[0]
        x = x + attn_out

        # ---------------- feed-forward: x = ff(LN(x + t_emb)) + x ----------------
        t_rows = jnp.broadcast_to(t_ref[...], (B, N, D)).reshape(R, D)
        hn = _layernorm(x + t_rows, ln2g_ref[0], ln2b_ref[0])
        h1 = _gelu(jnp.dot(hn.astype(bf16), wf1_ref[0],
                           preferred_element_type=jnp.float32) + bf1_ref[0])
        ff = jnp.dot(h1.astype(bf16), wf2_ref[0],
                     preferred_element_type=jnp.float32) + bf2_ref[0]
        x = x + ff

        # Single store per step; final LayerNorm fused into the last depth step.
        @pl.when(d_idx != last)
        def _store():
            out_ref[...] = x.reshape(B, N, D)

        @pl.when(d_idx == last)
        def _store_final():
            out_ref[...] = _layernorm(x, lnfg_ref[...], lnfb_ref[...]).reshape(B, N, D)

    return layer_kernel


# ----------------------------------- glue ------------------------------------
def init_params(key, dim, depth, heads, dim_head, mlp_dim):
    I = heads * dim_head
    ks = jax.random.split(key, 16)
    bf16 = jnp.bfloat16

    def nrm(k, shape, s=0.02):
        return s * jax.random.normal(k, shape, jnp.float32)

    p = {}
    # per-layer attention params (stacked over depth, weights in (in, out))
    p["ln1_g"] = 1.0 + nrm(ks[0], (depth, 1, dim))
    p["ln1_b"] = nrm(ks[1], (depth, 1, dim))
    p["wqkv"] = nrm(ks[2], (depth, dim, 3 * I)).astype(bf16)
    p["wo"] = nrm(ks[3], (depth, I, dim)).astype(bf16)
    p["bo"] = nrm(ks[4], (depth, 1, dim))
    # per-layer feed-forward params
    p["ln2_g"] = 1.0 + nrm(ks[5], (depth, 1, dim))
    p["ln2_b"] = nrm(ks[6], (depth, 1, dim))
    p["wf1"] = nrm(ks[7], (depth, dim, mlp_dim)).astype(bf16)
    p["bf1"] = nrm(ks[8], (depth, 1, mlp_dim))
    p["wf2"] = nrm(ks[9], (depth, mlp_dim, dim)).astype(bf16)
    p["bf2"] = nrm(ks[10], (depth, 1, dim))
    # time-embedding MLP (runs in plain JAX, keep f32)
    p["wt1"] = nrm(ks[11], (dim, 4 * dim))
    p["bt1"] = nrm(ks[12], (1, 4 * dim))
    p["wt2"] = nrm(ks[13], (4 * dim, dim))
    p["bt2"] = nrm(ks[14], (1, dim))
    # final LayerNorm
    p["lnf_g"] = 1.0 + nrm(ks[15], (1, dim))
    p["lnf_b"] = jnp.zeros((1, dim), jnp.float32)
    return p


def diff_transformer_forward(x, timesteps, params, *, depth, heads, dim_head, mlp_dim):
    B, N, D = x.shape
    I = heads * dim_head
    M = mlp_dim

    # -- timestep embedding + time MLP in plain JAX (tiny; no kernel launch) --
    emb = timestep_embedding(timesteps, D)                               # (B, D)
    t = _gelu(emb @ params["wt1"] + params["bt1"]) @ params["wt2"] + params["bt2"]
    t3 = t.reshape(B, 1, D)   # broadcast over seq happens inside the kernel

    layer_kernel = make_layer_kernel(B, N, D, heads, dim_head)

    def xmap(d):      # activations / t_emb / carried output: one resident block
        return (0, 0, 0)

    def wmap(d):      # per-layer weights: indexed by depth only
        return (d, 0, 0)

    def cmap(d):      # final LayerNorm params (fetched once)
        return (0, 0)

    in_specs = [
        pl.BlockSpec((B, N, D), xmap),            # x
        pl.BlockSpec((B, 1, D), xmap),            # t_emb
        pl.BlockSpec((1, 1, D), wmap),            # ln1_g
        pl.BlockSpec((1, 1, D), wmap),            # ln1_b
        pl.BlockSpec((1, D, 3 * I), wmap),        # wqkv (bf16)
        pl.BlockSpec((1, I, D), wmap),            # wo   (bf16)
        pl.BlockSpec((1, 1, D), wmap),            # bo
        pl.BlockSpec((1, 1, D), wmap),            # ln2_g
        pl.BlockSpec((1, 1, D), wmap),            # ln2_b
        pl.BlockSpec((1, D, M), wmap),            # wf1  (bf16)
        pl.BlockSpec((1, 1, M), wmap),            # bf1
        pl.BlockSpec((1, M, D), wmap),            # wf2  (bf16)
        pl.BlockSpec((1, 1, D), wmap),            # bf2
        pl.BlockSpec((1, D), cmap),               # lnf_g
        pl.BlockSpec((1, D), cmap),               # lnf_b
    ]

    y = pl.pallas_call(
        layer_kernel,
        out_shape=jax.ShapeDtypeStruct((B, N, D), jnp.float32),
        grid=(depth,),
        in_specs=in_specs,
        out_specs=pl.BlockSpec((B, N, D), xmap),
        compiler_params=pltpu.CompilerParams(
            dimension_semantics=("arbitrary",)),
    )(x, t3,
      params["ln1_g"], params["ln1_b"], params["wqkv"], params["wo"], params["bo"],
      params["ln2_g"], params["ln2_b"], params["wf1"], params["bf1"],
      params["wf2"], params["bf2"], params["lnf_g"], params["lnf_b"])
    return y


# ------------------------- pure-JAX reference check --------------------------
def reference_forward(x, timesteps, params, *, depth, heads, dim_head, mlp_dim):
    B, N, D = x.shape
    I = heads * dim_head
    f32 = jnp.float32
    emb = timestep_embedding(timesteps, D)
    t = _gelu(emb @ params["wt1"] + params["bt1"]) @ params["wt2"] + params["bt2"]
    t3 = jnp.broadcast_to(t[:, None, :], (B, N, D))

    def split_heads(a):
        return a.reshape(B, N, heads, dim_head).transpose(0, 2, 1, 3)

    for d in range(depth):
        xn = _layernorm(x, params["ln1_g"][d], params["ln1_b"][d])
        qkv = xn @ params["wqkv"][d].astype(f32)                     # (B, N, 3I)
        q, k, v = map(split_heads, jnp.split(qkv, 3, axis=-1))
        dots = jnp.einsum("bhnd,bhmd->bhnm", q, k) * dim_head ** -0.5
        attn = jax.nn.softmax(dots, axis=-1)
        o = jnp.einsum("bhnm,bhmd->bhnd", attn, v).transpose(0, 2, 1, 3).reshape(B, N, I)
        x = x + (o @ params["wo"][d].astype(f32) + params["bo"][d])
        hn = _layernorm(x + t3, params["ln2_g"][d], params["ln2_b"][d])
        ff = (_gelu(hn @ params["wf1"][d].astype(f32) + params["bf1"][d])
              @ params["wf2"][d].astype(f32) + params["bf2"][d])
        x = x + ff
    return _layernorm(x, params["lnf_g"], params["lnf_b"])


# ----------------------------------- main -------------------------------------
if __name__ == "__main__":
    B, N = 2, 8
    dim, depth, heads, dim_head, mlp_dim = 128, 2, 4, 32, 256

    key = jax.random.PRNGKey(0)
    kx, kt, kp = jax.random.split(key, 3)
    x = jax.random.normal(kx, (B, N, dim), jnp.float32)
    timesteps = jax.random.randint(kt, (B,), 0, 1000).astype(jnp.float32)
    params = init_params(kp, dim, depth, heads, dim_head, mlp_dim)

    out = diff_transformer_forward(x, timesteps, params, depth=depth, heads=heads,
                                   dim_head=dim_head, mlp_dim=mlp_dim)
    out = jax.block_until_ready(out)

    ref = reference_forward(x, timesteps, params, depth=depth, heads=heads,
                            dim_head=dim_head, mlp_dim=mlp_dim)

    assert out.shape == (B, N, dim), out.shape
    assert bool(jnp.all(jnp.isfinite(out)))
    max_err = float(jnp.max(jnp.abs(out - ref)))
    assert max_err < 2e-2, f"mismatch vs reference, max abs err = {max_err}"
    print("KERNEL_OK")
</pallas_src>

<mosaic_0001>
module attributes {stable_mosaic.version = 11 : i64} {
  func.func @layer_kernel(%arg0: i32, %arg1: memref<2x8x128xf32, #tpu.memory_space<vmem>>, %arg2: memref<2x1x128xf32, #tpu.memory_space<vmem>>, %arg3: memref<1x1x128xf32, #tpu.memory_space<vmem>>, %arg4: memref<1x1x128xf32, #tpu.memory_space<vmem>>, %arg5: memref<1x128x384xbf16, #tpu.memory_space<vmem>>, %arg6: memref<1x128x128xbf16, #tpu.memory_space<vmem>>, %arg7: memref<1x1x128xf32, #tpu.memory_space<vmem>>, %arg8: memref<1x1x128xf32, #tpu.memory_space<vmem>>, %arg9: memref<1x1x128xf32, #tpu.memory_space<vmem>>, %arg10: memref<1x128x256xbf16, #tpu.memory_space<vmem>>, %arg11: memref<1x1x256xf32, #tpu.memory_space<vmem>>, %arg12: memref<1x256x128xbf16, #tpu.memory_space<vmem>>, %arg13: memref<1x1x128xf32, #tpu.memory_space<vmem>>, %arg14: memref<1x128xf32, #tpu.memory_space<vmem>>, %arg15: memref<1x128xf32, #tpu.memory_space<vmem>>, %arg16: memref<2x8x128xf32, #tpu.memory_space<vmem>>) attributes {dimension_semantics = [#tpu.dimension_semantics<arbitrary>], iteration_bounds = array<i64: 2>, scalar_prefetch = 0 : i64, scratch_operands = 0 : i64, tpu.core_type = #tpu.core_type<tc>, window_params = [{pipeline_mode = #tpu.pipeline_mode<synchronous>, transform_indices = @transform_0, window_bounds = array<i64: 2, 8, 128>}, {pipeline_mode = #tpu.pipeline_mode<synchronous>, transform_indices = @transform_1, window_bounds = array<i64: 2, 1, 128>}, {transform_indices = @transform_2, window_bounds = array<i64: 1, 1, 128>}, {transform_indices = @transform_3, window_bounds = array<i64: 1, 1, 128>}, {transform_indices = @transform_4, window_bounds = array<i64: 1, 128, 384>}, {transform_indices = @transform_5, window_bounds = array<i64: 1, 128, 128>}, {transform_indices = @transform_6, window_bounds = array<i64: 1, 1, 128>}, {transform_indices = @transform_7, window_bounds = array<i64: 1, 1, 128>}, {transform_indices = @transform_8, window_bounds = array<i64: 1, 1, 128>}, {transform_indices = @transform_9, window_bounds = array<i64: 1, 128, 256>}, {transform_indices = @transform_10, window_bounds = array<i64: 1, 1, 256>}, {transform_indices = @transform_11, window_bounds = array<i64: 1, 256, 128>}, {transform_indices = @transform_12, window_bounds = array<i64: 1, 1, 128>}, {pipeline_mode = #tpu.pipeline_mode<synchronous>, transform_indices = @transform_13, window_bounds = array<i64: 1, 128>}, {pipeline_mode = #tpu.pipeline_mode<synchronous>, transform_indices = @transform_14, window_bounds = array<i64: 1, 128>}, {pipeline_mode = #tpu.pipeline_mode<synchronous>, transform_indices = @transform_15, window_bounds = array<i64: 2, 8, 128>}]} {
    %c0_i32 = arith.constant 0 : i32
    %0 = arith.cmpi eq, %arg0, %c0_i32 : i32
    %1 = arith.extui %0 : i1 to i32
    %c0_i32_0 = arith.constant 0 : i32
    %2 = arith.cmpi ne, %1, %c0_i32_0 : i32
    scf.if %2 {
      %c0_78 = arith.constant 0 : index
      %c0_79 = arith.constant 0 : index
      %c0_80 = arith.constant 0 : index
      %187 = vector.load %arg1[%c0_78, %c0_79, %c0_80] : memref<2x8x128xf32, #tpu.memory_space<vmem>>, vector<2x8x128xf32>
      %c0_81 = arith.constant 0 : index
      %c0_82 = arith.constant 0 : index
      %c0_83 = arith.constant 0 : index
      %188 = vector.load %arg16[%c0_81, %c0_82, %c0_83] : memref<2x8x128xf32, #tpu.memory_space<vmem>>, vector<2x8x128xf32>
      tpu.vector_store %arg16[%c0_81, %c0_82, %c0_83], %187 {strides = array<i32>} : memref<2x8x128xf32, #tpu.memory_space<vmem>>, vector<2x8x128xf32>,
    } else {
    }
    %c0 = arith.constant 0 : index
    %c0_1 = arith.constant 0 : index
    %c0_2 = arith.constant 0 : index
    %3 = vector.load %arg16[%c0, %c0_1, %c0_2] : memref<2x8x128xf32, #tpu.memory_space<vmem>>, vector<2x8x128xf32>
    %4 = vector.shape_cast %3 : vector<2x8x128xf32> to vector<16x128xf32>
    %c0_3 = arith.constant 0 : index
    %c0_4 = arith.constant 0 : index
    %c0_5 = arith.constant 0 : index
    %5 = vector.load %arg3[%c0_3, %c0_4, %c0_5] : memref<1x1x128xf32, #tpu.memory_space<vmem>>, vector<1x1x128xf32>
    %6 = vector.shape_cast %5 : vector<1x1x128xf32> to vector<1x128xf32>
    %c0_6 = arith.constant 0 : index
    %c0_7 = arith.constant 0 : index
    %c0_8 = arith.constant 0 : index
    %7 = vector.load %arg4[%c0_6, %c0_7, %c0_8] : memref<1x1x128xf32, #tpu.memory_space<vmem>>, vector<1x1x128xf32>
    %8 = vector.shape_cast %7 : vector<1x1x128xf32> to vector<1x128xf32>
    %cst = arith.constant dense<0.000000e+00> : vector<16xf32>
    %9 = vector.multi_reduction <add>, %4, %cst [1] : vector<16x128xf32> to vector<16xf32>
    %10 = vector.shape_cast %9 : vector<16xf32> to vector<16x1xf32>
    %cst_9 = arith.constant 1.280000e+02 : f32
    %11 = vector.broadcast %cst_9 : f32 to vector<16x1xf32>
    %12 = arith.divf %10, %11 : vector<16x1xf32>
    %13 = vector.broadcast %12 : vector<16x1xf32> to vector<16x128xf32>
    %14 = arith.subf %4, %13 : vector<16x128xf32>
    %15 = arith.mulf %14, %14 : vector<16x128xf32>
    %cst_10 = arith.constant dense<0.000000e+00> : vector<16xf32>
    %16 = vector.multi_reduction <add>, %15, %cst_10 [1] : vector<16x128xf32> to vector<16xf32>
    %17 = vector.shape_cast %16 : vector<16xf32> to vector<16x1xf32>
    %cst_11 = arith.constant 1.280000e+02 : f32
    %18 = vector.broadcast %cst_11 : f32 to vector<16x1xf32>
    %19 = arith.divf %17, %18 : vector<16x1xf32>
    %20 = vector.broadcast %12 : vector<16x1xf32> to vector<16x128xf32>
    %21 = arith.subf %4, %20 : vector<16x128xf32>
    %cst_12 = arith.constant 9.99999974E-6 : f32
    %22 = vector.broadcast %cst_12 : f32 to vector<16x1xf32>
    %23 = arith.addf %19, %22 : vector<16x1xf32>
    %24 = math.rsqrt %23 : vector<16x1xf32>
    %25 = vector.broadcast %24 : vector<16x1xf32> to vector<16x128xf32>
    %26 = arith.mulf %21, %25 : vector<16x128xf32>
    %27 = vector.broadcast %6 : vector<1x128xf32> to vector<16x128xf32>
    %28 = arith.mulf %26, %27 : vector<16x128xf32>
    %29 = vector.broadcast %8 : vector<1x128xf32> to vector<16x128xf32>
    %30 = arith.addf %28, %29 : vector<16x128xf32>
    %31 = arith.truncf %30 : vector<16x128xf32> to vector<16x128xbf16>
    %c0_13 = arith.constant 0 : index
    %c0_14 = arith.constant 0 : index
    %c0_15 = arith.constant 0 : index
    %32 = vector.load %arg5[%c0_13, %c0_14, %c0_15] : memref<1x128x384xbf16, #tpu.memory_space<vmem>>, vector<1x128x384xbf16>
    %33 = vector.shape_cast %32 : vector<1x128x384xbf16> to vector<128x384xbf16>
    %cst_16 = arith.constant dense<0.000000e+00> : vector<16x384xf32>
    %34 = tpu.matmul %31, %33, %cst_16 {dimension_numbers = #tpu.dot_dimension_numbers<[1], [0], [0], [1], [0, 0, 1, 1], [], []>} : vector<16x128xbf16>, vector<128x384xbf16>, vector<16x384xf32> -> vector<16x384xf32>
    %35 = vector.extract_strided_slice %34 {offsets = [0, 0], sizes = [16, 32], strides = [1, 1]} : vector<16x384xf32> to vector<16x32xf32>
    %36 = vector.shape_cast %35 : vector<16x32xf32> to vector<2x8x32xf32>
    %37 = vector.extract_strided_slice %34 {offsets = [0, 128], sizes = [16, 32], strides = [1, 1]} : vector<16x384xf32> to vector<16x32xf32>
    %38 = vector.shape_cast %37 : vector<16x32xf32> to vector<2x8x32xf32>
    %39 = vector.extract_strided_slice %34 {offsets = [0, 256], sizes = [16, 32], strides = [1, 1]} : vector<16x384xf32> to vector<16x32xf32>
    %40 = vector.shape_cast %39 : vector<16x32xf32> to vector<2x8x32xf32>
    "tpu.trace_start"() <{level = 10 : i32, message = "bqd,bkd->bqk"}> : () -> ()
    %cst_17 = arith.constant dense<0.000000e+00> : vector<2x8x8xf32>
    %41 = tpu.matmul %36, %38, %cst_17 {dimension_numbers = #tpu.dot_dimension_numbers<[2], [2], [1], [1], [0, 0, 0, 1, 1, 1], [0], [0]>} : vector<2x8x32xf32>, vector<2x8x32xf32>, vector<2x8x8xf32> -> vector<2x8x8xf32>
    "tpu.trace_stop"() : () -> ()
    %cst_18 = arith.constant 0.176776692 : f32
    %42 = vector.broadcast %cst_18 : f32 to vector<2x8x8xf32>
    %43 = arith.mulf %41, %42 : vector<2x8x8xf32>
    %cst_19 = arith.constant dense<0xFF800000> : vector<2x8xf32>
    %44 = vector.multi_reduction <maximumf>, %43, %cst_19 [2] : vector<2x8x8xf32> to vector<2x8xf32>
    %45 = vector.shape_cast %44 : vector<2x8xf32> to vector<2x8x1xf32>
    %46 = vector.broadcast %45 : vector<2x8x1xf32> to vector<2x8x8xf32>
    %47 = arith.subf %43, %46 : vector<2x8x8xf32>
    %48 = math.exp %47 : vector<2x8x8xf32>
    %cst_20 = arith.constant dense<0.000000e+00> : vector<2x8xf32>
    %49 = vector.multi_reduction <add>, %48, %cst_20 [2] : vector<2x8x8xf32> to vector<2x8xf32>
    %50 = vector.shape_cast %49 : vector<2x8xf32> to vector<2x8x1xf32>
    %51 = vector.broadcast %50 : vector<2x8x1xf32> to vector<2x8x8xf32>
    %52 = arith.divf %48, %51 : vector<2x8x8xf32>
    "tpu.trace_start"() <{level = 10 : i32, message = "bqk,bkd->bqd"}> : () -> ()
    %cst_21 = arith.constant dense<0.000000e+00> : vector<2x8x32xf32>
    %53 = tpu.matmul %52, %40, %cst_21 {dimension_numbers = #tpu.dot_dimension_numbers<[2], [1], [1], [2], [0, 0, 0, 1, 1, 2], [0], [0]>} : vector<2x8x8xf32>, vector<2x8x32xf32>, vector<2x8x32xf32> -> vector<2x8x32xf32>
    "tpu.trace_stop"() : () -> ()
    %54 = vector.shape_cast %53 : vector<2x8x32xf32> to vector<16x32xf32>
    %55 = vector.extract_strided_slice %34 {offsets = [0, 32], sizes = [16, 32], strides = [1, 1]} : vector<16x384xf32> to vector<16x32xf32>
    %56 = vector.shape_cast %55 : vector<16x32xf32> to vector<2x8x32xf32>
    %57 = vector.extract_strided_slice %34 {offsets = [0, 160], sizes = [16, 32], strides = [1, 1]} : vector<16x384xf32> to vector<16x32xf32>
    %58 = vector.shape_cast %57 : vector<16x32xf32> to vector<2x8x32xf32>
    %59 = vector.extract_strided_slice %34 {offsets = [0, 288], sizes = [16, 32], strides = [1, 1]} : vector<16x384xf32> to vector<16x32xf32>
    %60 = vector.shape_cast %59 : vector<16x32xf32> to vector<2x8x32xf32>
    "tpu.trace_start"() <{level = 10 : i32, message = "bqd,bkd->bqk"}> : () -> ()
    %cst_22 = arith.constant dense<0.000000e+00> : vector<2x8x8xf32>
    %61 = tpu.matmul %56, %58, %cst_22 {dimension_numbers = #tpu.dot_dimension_numbers<[2], [2], [1], [1], [0, 0, 0, 1, 1, 1], [0], [0]>} : vector<2x8x32xf32>, vector<2x8x32xf32>, vector<2x8x8xf32> -> vector<2x8x8xf32>
    "tpu.trace_stop"() : () -> ()
    %cst_23 = arith.constant 0.176776692 : f32
    %62 = vector.broadcast %cst_23 : f32 to vector<2x8x8xf32>
    %63 = arith.mulf %61, %62 : vector<2x8x8xf32>
    %cst_24 = arith.constant dense<0xFF800000> : vector<2x8xf32>
    %64 = vector.multi_reduction <maximumf>, %63, %cst_24 [2] : vector<2x8x8xf32> to vector<2x8xf32>
    %65 = vector.shape_cast %64 : vector<2x8xf32> to vector<2x8x1xf32>
    %66 = vector.broadcast %65 : vector<2x8x1xf32> to vector<2x8x8xf32>
    %67 = arith.subf %63, %66 : vector<2x8x8xf32>
    %68 = math.exp %67 : vector<2x8x8xf32>
    %cst_25 = arith.constant dense<0.000000e+00> : vector<2x8xf32>
    %69 = vector.multi_reduction <add>, %68, %cst_25 [2] : vector<2x8x8xf32> to vector<2x8xf32>
    %70 = vector.shape_cast %69 : vector<2x8xf32> to vector<2x8x1xf32>
    %71 = vector.broadcast %70 : vector<2x8x1xf32> to vector<2x8x8xf32>
    %72 = arith.divf %68, %71 : vector<2x8x8xf32>
    "tpu.trace_start"() <{level = 10 : i32, message = "bqk,bkd->bqd"}> : () -> ()
    %cst_26 = arith.constant dense<0.000000e+00> : vector<2x8x32xf32>
    %73 = tpu.matmul %72, %60, %cst_26 {dimension_numbers = #tpu.dot_dimension_numbers<[2], [1], [1], [2], [0, 0, 0, 1, 1, 2], [0], [0]>} : vector<2x8x8xf32>, vector<2x8x32xf32>, vector<2x8x32xf32> -> vector<2x8x32xf32>
    "tpu.trace_stop"() : () -> ()
    %74 = vector.shape_cast %73 : vector<2x8x32xf32> to vector<16x32xf32>
    %75 = vector.extract_strided_slice %34 {offsets = [0, 64], sizes = [16, 32], strides = [1, 1]} : vector<16x384xf32> to vector<16x32xf32>
    %76 = vector.shape_cast %75 : vector<16x32xf32> to vector<2x8x32xf32>
    %77 = vector.extract_strided_slice %34 {offsets = [0, 192], sizes = [16, 32], strides = [1, 1]} : vector<16x384xf32> to vector<16x32xf32>
    %78 = vector.shape_cast %77 : vector<16x32xf32> to vector<2x8x32xf32>
    %79 = vector.extract_strided_slice %34 {offsets = [0, 320], sizes = [16, 32], strides = [1, 1]} : vector<16x384xf32> to vector<16x32xf32>
    %80 = vector.shape_cast %79 : vector<16x32xf32> to vector<2x8x32xf32>
    "tpu.trace_start"() <{level = 10 : i32, message = "bqd,bkd->bqk"}> : () -> ()
    %cst_27 = arith.constant dense<0.000000e+00> : vector<2x8x8xf32>
    %81 = tpu.matmul %76, %78, %cst_27 {dimension_numbers = #tpu.dot_dimension_numbers<[2], [2], [1], [1], [0, 0, 0, 1, 1, 1], [0], [0]>} : vector<2x8x32xf32>, vector<2x8x32xf32>, vector<2x8x8xf32> -> vector<2x8x8xf32>
    "tpu.trace_stop"() : () -> ()
    %cst_28 = arith.constant 0.176776692 : f32
    %82 = vector.broadcast %cst_28 : f32 to vector<2x8x8xf32>
    %83 = arith.mulf %81, %82 : vector<2x8x8xf32>
    %cst_29 = arith.constant dense<0xFF800000> : vector<2x8xf32>
    %84 = vector.multi_reduction <maximumf>, %83, %cst_29 [2] : vector<2x8x8xf32> to vector<2x8xf32>
    %85 = vector.shape_cast %84 : vector<2x8xf32> to vector<2x8x1xf32>
    %86 = vector.broadcast %85 : vector<2x8x1xf32> to vector<2x8x8xf32>
    %87 = arith.subf %83, %86 : vector<2x8x8xf32>
    %88 = math.exp %87 : vector<2x8x8xf32>
    %cst_30 = arith.constant dense<0.000000e+00> : vector<2x8xf32>
    %89 = vector.multi_reduction <add>, %88, %cst_30 [2] : vector<2x8x8xf32> to vector<2x8xf32>
    %90 = vector.shape_cast %89 : vector<2x8xf32> to vector<2x8x1xf32>
    %91 = vector.broadcast %90 : vector<2x8x1xf32> to vector<2x8x8xf32>
    %92 = arith.divf %88, %91 : vector<2x8x8xf32>
    "tpu.trace_start"() <{level = 10 : i32, message = "bqk,bkd->bqd"}> : () -> ()
    %cst_31 = arith.constant dense<0.000000e+00> : vector<2x8x32xf32>
    %93 = tpu.matmul %92, %80, %cst_31 {dimension_numbers = #tpu.dot_dimension_numbers<[2], [1], [1], [2], [0, 0, 0, 1, 1, 2], [0], [0]>} : vector<2x8x8xf32>, vector<2x8x32xf32>, vector<2x8x32xf32> -> vector<2x8x32xf32>
    "tpu.trace_stop"() : () -> ()
    %94 = vector.shape_cast %93 : vector<2x8x32xf32> to vector<16x32xf32>
    %95 = vector.extract_strided_slice %34 {offsets = [0, 96], sizes = [16, 32], strides = [1, 1]} : vector<16x384xf32> to vector<16x32xf32>
    %96 = vector.shape_cast %95 : vector<16x32xf32> to vector<2x8x32xf32>
    %97 = vector.extract_strided_slice %34 {offsets = [0, 224], sizes = [16, 32], strides = [1, 1]} : vector<16x384xf32> to vector<16x32xf32>
    %98 = vector.shape_cast %97 : vector<16x32xf32> to vector<2x8x32xf32>
    %99 = vector.extract_strided_slice %34 {offsets = [0, 352], sizes = [16, 32], strides = [1, 1]} : vector<16x384xf32> to vector<16x32xf32>
    %100 = vector.shape_cast %99 : vector<16x32xf32> to vector<2x8x32xf32>
    "tpu.trace_start"() <{level = 10 : i32, message = "bqd,bkd->bqk"}> : () -> ()
    %cst_32 = arith.constant dense<0.000000e+00> : vector<2x8x8xf32>
    %101 = tpu.matmul %96, %98, %cst_32 {dimension_numbers = #tpu.dot_dimension_numbers<[2], [2], [1], [1], [0, 0, 0, 1, 1, 1], [0], [0]>} : vector<2x8x32xf32>, vector<2x8x32xf32>, vector<2x8x8xf32> -> vector<2x8x8xf32>
    "tpu.trace_stop"() : () -> ()
    %cst_33 = arith.constant 0.176776692 : f32
    %102 = vector.broadcast %cst_33 : f32 to vector<2x8x8xf32>
    %103 = arith.mulf %101, %102 : vector<2x8x8xf32>
    %cst_34 = arith.constant dense<0xFF800000> : vector<2x8xf32>
    %104 = vector.multi_reduction <maximumf>, %103, %cst_34 [2] : vector<2x8x8xf32> to vector<2x8xf32>
    %105 = vector.shape_cast %104 : vector<2x8xf32> to vector<2x8x1xf32>
    %106 = vector.broadcast %105 : vector<2x8x1xf32> to vector<2x8x8xf32>
    %107 = arith.subf %103, %106 : vector<2x8x8xf32>
    %108 = math.exp %107 : vector<2x8x8xf32>
    %cst_35 = arith.constant dense<0.000000e+00> : vector<2x8xf32>
    %109 = vector.multi_reduction <add>, %108, %cst_35 [2] : vector<2x8x8xf32> to vector<2x8xf32>
    %110 = vector.shape_cast %109 : vector<2x8xf32> to vector<2x8x1xf32>
    %111 = vector.broadcast %110 : vector<2x8x1xf32> to vector<2x8x8xf32>
    %112 = arith.divf %108, %111 : vector<2x8x8xf32>
    "tpu.trace_start"() <{level = 10 : i32, message = "bqk,bkd->bqd"}> : () -> ()
    %cst_36 = arith.constant dense<0.000000e+00> : vector<2x8x32xf32>
    %113 = tpu.matmul %112, %100, %cst_36 {dimension_numbers = #tpu.dot_dimension_numbers<[2], [1], [1], [2], [0, 0, 0, 1, 1, 2], [0], [0]>} : vector<2x8x8xf32>, vector<2x8x32xf32>, vector<2x8x32xf32> -> vector<2x8x32xf32>
    "tpu.trace_stop"() : () -> ()
    %114 = vector.shape_cast %113 : vector<2x8x32xf32> to vector<16x32xf32>
    %115 = tpu.concatenate %54, %74, %94, %114 in 1 : vector<16x32xf32>, vector<16x32xf32>, vector<16x32xf32>, vector<16x32xf32> -> vector<16x128xf32>
    %116 = arith.truncf %115 : vector<16x128xf32> to vector<16x128xbf16>
    %c0_37 = arith.constant 0 : index
    %c0_38 = arith.constant 0 : index
    %c0_39 = arith.constant 0 : index
    %117 = vector.load %arg6[%c0_37, %c0_38, %c0_39] : memref<1x128x128xbf16, #tpu.memory_space<vmem>>, vector<1x128x128xbf16>
    %118 = vector.shape_cast %117 : vector<1x128x128xbf16> to vector<128x128xbf16>
    %cst_40 = arith.constant dense<0.000000e+00> : vector<16x128xf32>
    %119 = tpu.matmul %116, %118, %cst_40 {dimension_numbers = #tpu.dot_dimension_numbers<[1], [0], [0], [1], [0, 0, 1, 1], [], []>} : vector<16x128xbf16>, vector<128x128xbf16>, vector<16x128xf32> -> vector<16x128xf32>
    %c0_41 = arith.constant 0 : index
    %c0_42 = arith.constant 0 : index
    %c0_43 = arith.constant 0 : index
    %120 = vector.load %arg7[%c0_41, %c0_42, %c0_43] : memref<1x1x128xf32, #tpu.memory_space<vmem>>, vector<1x1x128xf32>
    %121 = vector.shape_cast %120 : vector<1x1x128xf32> to vector<1x128xf32>
    %122 = vector.broadcast %121 : vector<1x128xf32> to vector<16x128xf32>
    %123 = arith.addf %119, %122 : vector<16x128xf32>
    %124 = arith.addf %4, %123 : vector<16x128xf32>
    %c0_44 = arith.constant 0 : index
    %c0_45 = arith.constant 0 : index
    %c0_46 = arith.constant 0 : index
    %125 = vector.load %arg2[%c0_44, %c0_45, %c0_46] : memref<2x1x128xf32, #tpu.memory_space<vmem>>, vector<2x1x128xf32>
    %126 = vector.shape_cast %125 : vector<2x1x128xf32> to vector<2x1x128xf32>
    %127 = vector.broadcast %126 : vector<2x1x128xf32> to vector<2x8x128xf32>
    %128 = vector.shape_cast %127 : vector<2x8x128xf32> to vector<16x128xf32>
    %129 = arith.addf %124, %128 : vector<16x128xf32>
    %c0_47 = arith.constant 0 : index
    %c0_48 = arith.constant 0 : index
    %c0_49 = arith.constant 0 : index
    %130 = vector.load %arg8[%c0_47, %c0_48, %c0_49] : memref<1x1x128xf32, #tpu.memory_space<vmem>>, vector<1x1x128xf32>
    %131 = vector.shape_cast %130 : vector<1x1x128xf32> to vector<1x128xf32>
    %c0_50 = arith.constant 0 : index
    %c0_51 = arith.constant 0 : index
    %c0_52 = arith.constant 0 : index
    %132 = vector.load %arg9[%c0_50, %c0_51, %c0_52] : memref<1x1x128xf32, #tpu.memory_space<vmem>>, vector<1x1x128xf32>
    %133 = vector.shape_cast %132 : vector<1x1x128xf32> to vector<1x128xf32>
    %cst_53 = arith.constant dense<0.000000e+00> : vector<16xf32>
    %134 = vector.multi_reduction <add>, %129, %cst_53 [1] : vector<16x128xf32> to vector<16xf32>
    %135 = vector.shape_cast %134 : vector<16xf32> to vector<16x1xf32>
    %cst_54 = arith.constant 1.280000e+02 : f32
    %136 = vector.broadcast %cst_54 : f32 to vector<16x1xf32>
    %137 = arith.divf %135, %136 : vector<16x1xf32>
    %138 = vector.broadcast %137 : vector<16x1xf32> to vector<16x128xf32>
    %139 = arith.subf %129, %138 : vector<16x128xf32>
    %140 = arith.mulf %139, %139 : vector<16x128xf32>
    %cst_55 = arith.constant dense<0.000000e+00> : vector<16xf32>
    %141 = vector.multi_reduction <add>, %140, %cst_55 [1] : vector<16x128xf32> to vector<16xf32>
    %142 = vector.shape_cast %141 : vector<16xf32> to vector<16x1xf32>
    %cst_56 = arith.constant 1.280000e+02 : f32
    %143 = vector.broadcast %cst_56 : f32 to vector<16x1xf32>
    %144 = arith.divf %142, %143 : vector<16x1xf32>
    %145 = vector.broadcast %137 : vector<16x1xf32> to vector<16x128xf32>
    %146 = arith.subf %129, %145 : vector<16x128xf32>
    %cst_57 = arith.constant 9.99999974E-6 : f32
    %147 = vector.broadcast %cst_57 : f32 to vector<16x1xf32>
    %148 = arith.addf %144, %147 : vector<16x1xf32>
    %149 = math.rsqrt %148 : vector<16x1xf32>
    %150 = vector.broadcast %149 : vector<16x1xf32> to vector<16x128xf32>
    %151 = arith.mulf %146, %150 : vector<16x128xf32>
    %152 = vector.broadcast %131 : vector<1x128xf32> to vector<16x128xf32>
    %153 = arith.mulf %151, %152 : vector<16x128xf32>
    %154 = vector.broadcast %133 : vector<1x128xf32> to vector<16x128xf32>
    %155 = arith.addf %153, %154 : vector<16x128xf32>
    %156 = arith.truncf %155 : vector<16x128xf32> to vector<16x128xbf16>
    %c0_58 = arith.constant 0 : index
    %c0_59 = arith.constant 0 : index
    %c0_60 = arith.constant 0 : index
    %157 = vector.load %arg10[%c0_58, %c0_59, %c0_60] : memref<1x128x256xbf16, #tpu.memory_space<vmem>>, vector<1x128x256xbf16>
    %158 = vector.shape_cast %157 : vector<1x128x256xbf16> to vector<128x256xbf16>
    %cst_61 = arith.constant dense<0.000000e+00> : vector<16x256xf32>
    %159 = tpu.matmul %156, %158, %cst_61 {dimension_numbers = #tpu.dot_dimension_numbers<[1], [0], [0], [1], [0, 0, 1, 1], [], []>} : vector<16x128xbf16>, vector<128x256xbf16>, vector<16x256xf32> -> vector<16x256xf32>
    %c0_62 = arith.constant 0 : index
    %c0_63 = arith.constant 0 : index
    %c0_64 = arith.constant 0 : index
    %160 = vector.load %arg11[%c0_62, %c0_63, %c0_64] : memref<1x1x256xf32, #tpu.memory_space<vmem>>, vector<1x1x256xf32>
    %161 = vector.shape_cast %160 : vector<1x1x256xf32> to vector<1x256xf32>
    %162 = vector.broadcast %161 : vector<1x256xf32> to vector<16x256xf32>
    %163 = arith.addf %159, %162 : vector<16x256xf32>
    %cst_65 = arith.constant 5.000000e-01 : f32
    %164 = vector.broadcast %cst_65 : f32 to vector<16x256xf32>
    %165 = arith.mulf %164, %163 : vector<16x256xf32>
    %cst_66 = arith.constant 0.707106769 : f32
    %166 = vector.broadcast %cst_66 : f32 to vector<16x256xf32>
    %167 = arith.mulf %163, %166 : vector<16x256xf32>
    %168 = math.erf %167 : vector<16x256xf32>
    %cst_67 = arith.constant 1.000000e+00 : f32
    %169 = vector.broadcast %cst_67 : f32 to vector<16x256xf32>
    %170 = arith.addf %169, %168 : vector<16x256xf32>
    %171 = arith.mulf %165, %170 : vector<16x256xf32>
    %172 = arith.truncf %171 : vector<16x256xf32> to vector<16x256xbf16>
    %c0_68 = arith.constant 0 : index
    %c0_69 = arith.constant 0 : index
    %c0_70 = arith.constant 0 : index
    %173 = vector.load %arg12[%c0_68, %c0_69, %c0_70] : memref<1x256x128xbf16, #tpu.memory_space<vmem>>, vector<1x256x128xbf16>
    %174 = vector.shape_cast %173 : vector<1x256x128xbf16> to vector<256x128xbf16>
    %cst_71 = arith.constant dense<0.000000e+00> : vector<16x128xf32>
    %175 = tpu.matmul %172, %174, %cst_71 {dimension_numbers = #tpu.dot_dimension_numbers<[1], [0], [0], [1], [0, 0, 1, 1], [], []>} : vector<16x256xbf16>, vector<256x128xbf16>, vector<16x128xf32> -> vector<16x128xf32>
    %c0_72 = arith.constant 0 : index
    %c0_73 = arith.constant 0 : index
    %c0_74 = arith.constant 0 : index
    %176 = vector.load %arg13[%c0_72, %c0_73, %c0_74] : memref<1x1x128xf32, #tpu.memory_space<vmem>>, vector<1x1x128xf32>
    %177 = vector.shape_cast %176 : vector<1x1x128xf32> to vector<1x128xf32>
    %178 = vector.broadcast %177 : vector<1x128xf32> to vector<16x128xf32>
    %179 = arith.addf %175, %178 : vector<16x128xf32>
    %180 = arith.addf %124, %179 : vector<16x128xf32>
    %c1_i32 = arith.constant 1 : i32
    %181 = arith.cmpi ne, %arg0, %c1_i32 : i32
    %182 = arith.extui %181 : i1 to i32
    %c0_i32_75 = arith.constant 0 : i32
    %183 = arith.cmpi ne, %182, %c0_i32_75 : i32
    scf.if %183 {
      %187 = vector.shape_cast %180 : vector<16x128xf32> to vector<2x8x128xf32>
      %c0_78 = arith.constant 0 : index
      %c0_79 = arith.constant 0 : index
      %c0_80 = arith.constant 0 : index
      %188 = vector.load %arg16[%c0_78, %c0_79, %c0_80] : memref<2x8x128xf32, #tpu.memory_space<vmem>>, vector<2x8x128xf32>
      tpu.vector_store %arg16[%c0_78, %c0_79, %c0_80], %187 {strides = array<i32>} : memref<2x8x128xf32, #tpu.memory_space<vmem>>, vector<2x8x128xf32>,
    } else {
    }
    %c1_i32_76 = arith.constant 1 : i32
    %184 = arith.cmpi eq, %arg0, %c1_i32_76 : i32
    %185 = arith.extui %184 : i1 to i32
    %c0_i32_77 = arith.constant 0 : i32
    %186 = arith.cmpi ne, %185, %c0_i32_77 : i32
    scf.if %186 {
      %c0_78 = arith.constant 0 : index
      %c0_79 = arith.constant 0 : index
      %187 = vector.load %arg14[%c0_78, %c0_79] : memref<1x128xf32, #tpu.memory_space<vmem>>, vector<1x128xf32>
      %c0_80 = arith.constant 0 : index
      %c0_81 = arith.constant 0 : index
      %188 = vector.load %arg15[%c0_80, %c0_81] : memref<1x128xf32, #tpu.memory_space<vmem>>, vector<1x128xf32>
      %cst_82 = arith.constant dense<0.000000e+00> : vector<16xf32>
      %189 = vector.multi_reduction <add>, %180, %cst_82 [1] : vector<16x128xf32> to vector<16xf32>
      %190 = vector.shape_cast %189 : vector<16xf32> to vector<16x1xf32>
      %cst_83 = arith.constant 1.280000e+02 : f32
      %191 = vector.broadcast %cst_83 : f32 to vector<16x1xf32>
      %192 = arith.divf %190, %191 : vector<16x1xf32>
      %193 = vector.broadcast %192 : vector<16x1xf32> to vector<16x128xf32>
      %194 = arith.subf %180, %193 : vector<16x128xf32>
      %195 = arith.mulf %194, %194 : vector<16x128xf32>
      %cst_84 = arith.constant dense<0.000000e+00> : vector<16xf32>
      %196 = vector.multi_reduction <add>, %195, %cst_84 [1] : vector<16x128xf32> to vector<16xf32>
      %197 = vector.shape_cast %196 : vector<16xf32> to vector<16x1xf32>
      %cst_85 = arith.constant 1.280000e+02 : f32
      %198 = vector.broadcast %cst_85 : f32 to vector<16x1xf32>
      %199 = arith.divf %197, %198 : vector<16x1xf32>
      %200 = vector.broadcast %192 : vector<16x1xf32> to vector<16x128xf32>
      %201 = arith.subf %180, %200 : vector<16x128xf32>
      %cst_86 = arith.constant 9.99999974E-6 : f32
      %202 = vector.broadcast %cst_86 : f32 to vector<16x1xf32>
      %203 = arith.addf %199, %202 : vector<16x1xf32>
      %204 = math.rsqrt %203 : vector<16x1xf32>
      %205 = vector.broadcast %204 : vector<16x1xf32> to vector<16x128xf32>
      %206 = arith.mulf %201, %205 : vector<16x128xf32>
      %207 = vector.broadcast %187 : vector<1x128xf32> to vector<16x128xf32>
      %208 = arith.mulf %206, %207 : vector<16x128xf32>
      %209 = vector.broadcast %188 : vector<1x128xf32> to vector<16x128xf32>
      %210 = arith.addf %208, %209 : vector<16x128xf32>
      %211 = vector.shape_cast %210 : vector<16x128xf32> to vector<2x8x128xf32>
      %c0_87 = arith.constant 0 : index
      %c0_88 = arith.constant 0 : index
      %c0_89 = arith.constant 0 : index
      %212 = vector.load %arg16[%c0_87, %c0_88, %c0_89] : memref<2x8x128xf32, #tpu.memory_space<vmem>>, vector<2x8x128xf32>
      tpu.vector_store %arg16[%c0_87, %c0_88, %c0_89], %211 {strides = array<i32>} : memref<2x8x128xf32, #tpu.memory_space<vmem>>, vector<2x8x128xf32>,
    } else {
    }
    return
  }
  func.func @transform_0(%arg0: i32) -> (i32, i32, i32) {
    %c0_i32 = arith.constant 0 : i32
    %c0_i32_0 = arith.constant 0 : i32
    %c0_i32_1 = arith.constant 0 : i32
    %c0_i32_2 = arith.constant 0 : i32
    return %c0_i32, %c0_i32_0, %c0_i32_1 : i32, i32, i32
  }
  func.func @transform_1(%arg0: i32) -> (i32, i32, i32) {
    %c0_i32 = arith.constant 0 : i32
    %c0_i32_0 = arith.constant 0 : i32
    %c0_i32_1 = arith.constant 0 : i32
    %c0_i32_2 = arith.constant 0 : i32
    return %c0_i32, %c0_i32_0, %c0_i32_1 : i32, i32, i32
  }
  func.func @transform_2(%arg0: i32) -> (i32, i32, i32) {
    %c0_i32 = arith.constant 0 : i32
    %c0_i32_0 = arith.constant 0 : i32
    %c0_i32_1 = arith.constant 0 : i32
    return %arg0, %c0_i32, %c0_i32_0 : i32, i32, i32
  }
  func.func @transform_3(%arg0: i32) -> (i32, i32, i32) {
    %c0_i32 = arith.constant 0 : i32
    %c0_i32_0 = arith.constant 0 : i32
    %c0_i32_1 = arith.constant 0 : i32
    return %arg0, %c0_i32, %c0_i32_0 : i32, i32, i32
  }
  func.func @transform_4(%arg0: i32) -> (i32, i32, i32) {
    %c0_i32 = arith.constant 0 : i32
    %c0_i32_0 = arith.constant 0 : i32
    %c0_i32_1 = arith.constant 0 : i32
    return %arg0, %c0_i32, %c0_i32_0 : i32, i32, i32
  }
  func.func @transform_5(%arg0: i32) -> (i32, i32, i32) {
    %c0_i32 = arith.constant 0 : i32
    %c0_i32_0 = arith.constant 0 : i32
    %c0_i32_1 = arith.constant 0 : i32
    return %arg0, %c0_i32, %c0_i32_0 : i32, i32, i32
  }
  func.func @transform_6(%arg0: i32) -> (i32, i32, i32) {
    %c0_i32 = arith.constant 0 : i32
    %c0_i32_0 = arith.constant 0 : i32
    %c0_i32_1 = arith.constant 0 : i32
    return %arg0, %c0_i32, %c0_i32_0 : i32, i32, i32
  }
  func.func @transform_7(%arg0: i32) -> (i32, i32, i32) {
    %c0_i32 = arith.constant 0 : i32
    %c0_i32_0 = arith.constant 0 : i32
    %c0_i32_1 = arith.constant 0 : i32
    return %arg0, %c0_i32, %c0_i32_0 : i32, i32, i32
  }
  func.func @transform_8(%arg0: i32) -> (i32, i32, i32) {
    %c0_i32 = arith.constant 0 : i32
    %c0_i32_0 = arith.constant 0 : i32
    %c0_i32_1 = arith.constant 0 : i32
    return %arg0, %c0_i32, %c0_i32_0 : i32, i32, i32
  }
  func.func @transform_9(%arg0: i32) -> (i32, i32, i32) {
    %c0_i32 = arith.constant 0 : i32
    %c0_i32_0 = arith.constant 0 : i32
    %c0_i32_1 = arith.constant 0 : i32
    return %arg0, %c0_i32, %c0_i32_0 : i32, i32, i32
  }
  func.func @transform_10(%arg0: i32) -> (i32, i32, i32) {
    %c0_i32 = arith.constant 0 : i32
    %c0_i32_0 = arith.constant 0 : i32
    %c0_i32_1 = arith.constant 0 : i32
    return %arg0, %c0_i32, %c0_i32_0 : i32, i32, i32
  }
  func.func @transform_11(%arg0: i32) -> (i32, i32, i32) {
    %c0_i32 = arith.constant 0 : i32
    %c0_i32_0 = arith.constant 0 : i32
    %c0_i32_1 = arith.constant 0 : i32
    return %arg0, %c0_i32, %c0_i32_0 : i32, i32, i32
  }
  func.func @transform_12(%arg0: i32) -> (i32, i32, i32) {
    %c0_i32 = arith.constant 0 : i32
    %c0_i32_0 = arith.constant 0 : i32
    %c0_i32_1 = arith.constant 0 : i32
    return %arg0, %c0_i32, %c0_i32_0 : i32, i32, i32
  }
  func.func @transform_13(%arg0: i32) -> (i32, i32) {
    %c0_i32 = arith.constant 0 : i32
    %c0_i32_0 = arith.constant 0 : i32
    %c0_i32_1 = arith.constant 0 : i32
    return %c0_i32, %c0_i32_0 : i32, i32
  }
  func.func @transform_14(%arg0: i32) -> (i32, i32) {
    %c0_i32 = arith.constant 0 : i32
    %c0_i32_0 = arith.constant 0 : i32
    %c0_i32_1 = arith.constant 0 : i32
    return %c0_i32, %c0_i32_0 : i32, i32
  }
  func.func @transform_15(%arg0: i32) -> (i32, i32, i32) {
    %c0_i32 = arith.constant 0 : i32
    %c0_i32_0 = arith.constant 0 : i32
    %c0_i32_1 = arith.constant 0 : i32
    %c0_i32_2 = arith.constant 0 : i32
    return %c0_i32, %c0_i32_0, %c0_i32_1 : i32, i32, i32
  }
}

</mosaic_0001>

<llo_original>
// kernel: tpu_custom_call.1
$region0: #{tpu_custom_call.1}
  #allocation0 [shape = 'u32[]', space=smem, size = 0x4, offset = 0x4, fixed_abs, tag = 'smem constant byte address 0x4 - core index']
  #allocation1 [shape = 'u32[144,128]{1,0:T(1,128)}', space=vmem, size = 0x12000, scoped, tag = 'internal scratch']
  %s0 = inlined_call_operand.hbm [shape: f32[2,8,128], index: 0, kind: input, shape index: {}]
  %s1 = inlined_call_operand.vmem [shape: f32[2,1,128], index: 1, kind: input, shape index: {}]
  %s2 = inlined_call_operand.hbm [shape: f32[2,1,128], index: 2, kind: input, shape index: {}]
  %s3 = inlined_call_operand.vmem [shape: f32[2,1,128], index: 3, kind: input, shape index: {}]
  %s4 = inlined_call_operand.hbm [shape: bf16[2,128,384], index: 4, kind: input, shape index: {}]
  %s5 = inlined_call_operand.hbm [shape: bf16[2,128,128], index: 5, kind: input, shape index: {}]
  %s6 = inlined_call_operand.vmem [shape: f32[2,1,128], index: 6, kind: input, shape index: {}]
  %s7 = inlined_call_operand.vmem [shape: f32[2,1,128], index: 7, kind: input, shape index: {}]
  %s8 = inlined_call_operand.vmem [shape: f32[2,1,128], index: 8, kind: input, shape index: {}]
  %s9 = inlined_call_operand.hbm [shape: bf16[2,128,256], index: 9, kind: input, shape index: {}]
  %s10 = inlined_call_operand.vmem [shape: f32[2,1,256], index: 10, kind: input, shape index: {}]
  %s11 = inlined_call_operand.hbm [shape: bf16[2,256,128], index: 11, kind: input, shape index: {}]
  %s12 = inlined_call_operand.vmem [shape: f32[2,1,128], index: 12, kind: input, shape index: {}]
  %s13 = inlined_call_operand.vmem [shape: f32[1,128], index: 13, kind: input, shape index: {}]
  %s14 = inlined_call_operand.vmem [shape: f32[1,128], index: 14, kind: input, shape index: {}]
  %s15 = inlined_call_operand.hbm [shape: f32[2,8,128], index: 15, kind: output, shape index: {}]
  %s16 = sld [smem:[#allocation0]]
  $region129: #{tpu_custom_call.1} parent=0
    _
  %s18 = ssub.s32 1, %s16
  %s19 = scalar_select 0, %s18, %s16
  $region1: #{tpu_custom_call.1} parent=0
    #allocation2 [shape = 'u8[8192]{0}', space=vmem, size = 0x2000, scoped, tag = 'input window, operand 0, single buffered']
    #allocation3 [shape = 's32[2]{0}', space=sflag, size = 0x8, scoped, tag = 'scoped memory for tpu_custom_call.1']
    #allocation4 [shape = 's32[2]{0}', space=sflag, size = 0x8, scoped, tag = 'scoped memory for tpu_custom_call.1']
    #allocation5 [shape = 'u8[1024]{0}', space=vmem, size = 0x400, scoped, tag = 'input window, operand 2']
    #allocation6 [shape = 's32[2]{0}', space=sflag, size = 0x8, scoped, tag = 'scoped memory for tpu_custom_call.1']
    #allocation7 [shape = 'u8[196608]{0}', space=vmem, size = 0x30000, scoped, tag = 'input window, operand 4']
    #allocation8 [shape = 'u8[65536]{0}', space=vmem, size = 0x10000, scoped, tag = 'input window, operand 5']
    #allocation9 [shape = 's32[2]{0}', space=sflag, size = 0x8, scoped, tag = 'scoped memory for tpu_custom_call.1']
    #allocation10 [shape = 'u8[131072]{0}', space=vmem, size = 0x20000, scoped, tag = 'input window, operand 9']
    #allocation11 [shape = 'u8[131072]{0}', space=vmem, size = 0x20000, scoped, tag = 'input window, operand 11']
    #allocation12 [shape = 's32[2]{0}', space=sflag, size = 0x8, scoped, tag = 'scoped memory for tpu_custom_call.1']
    #allocation13 [shape = 'u8[8192]{0}', space=vmem, size = 0x2000, scoped, tag = 'output window, operand 0, single buffered']
    %20 = vsyncpa [#allocation3], 0
    %21 = vsyncpa [#allocation6], 0
    %s22 = scalar_lea.sflag [#allocation6], 1
    %23 = vsyncpa %s22, 0
    %24 = vsyncpa [#allocation9], 0
    %s25 = scalar_lea.sflag [#allocation9], 1
    %26 = vsyncpa %s25, 0
    %27 = vsyncpa [#allocation12], 0
    %s28 = scalar_lea.sflag [#allocation12], 1
    %29 = vsyncpa %s28, 0
    %30 = vsyncpa [#allocation4], 0
    loop: start=0, step=1, limit=4
    $region2: #{tpu_custom_call.1} parent=1 // loop_pre_header
      _
    $region3: #{tpu_custom_call.1} parent=1 // loop_header
      %s32 = sphi 0, %s36
      %p33 = scmp.ge.s32.totalorder %s32, 4
      %s40 = sphi 0, %s40
      %s42 = sphi 0, %s40
      %s43 = sphi 0, %s42
      %s57 = sphi 0, %s43
      %s61 = sphi 0, %s61
      %s63 = sphi 0, %s61
      %s64 = sphi 0, %s63
      %s78 = sphi 0, %s64
      %s84 = sphi 0, %s86
      %s87 = sphi 0, %s84
      %s88 = sphi 0, %s87
      %s104 = sphi 0, %s88
      %s110 = sphi 0, %s112
      %s113 = sphi 0, %s110
      %s114 = sphi 0, %s113
      %s130 = sphi 0, %s114
      %s136 = sphi 0, %s138
      %s139 = sphi 0, %s136
      %s140 = sphi 0, %s139
      %s156 = sphi 0, %s140
      %s162 = sphi 0, %s164
      %s165 = sphi 0, %s162
      %s166 = sphi 0, %s165
      %s182 = sphi 0, %s166
      %s188 = sphi 0, %s190
      %s191 = sphi 0, %s188
      %s192 = sphi 0, %s191
      %s208 = sphi 0, %s192
      %s214 = sphi 0, %s216
      %s217 = sphi 0, %s214
      %s218 = sphi 0, %s217
      %s234 = sphi 0, %s218
      %s240 = sphi 0, %s242
      %s243 = sphi 0, %s240
      %s244 = sphi 0, %s243
      %s260 = sphi 0, %s244
      %s266 = sphi 0, %s268
      %s269 = sphi 0, %s266
      %s270 = sphi 0, %s269
      %s286 = sphi 0, %s270
      %s292 = sphi 0, %s294
      %s295 = sphi 0, %s292
      %s296 = sphi 0, %s295
      %s312 = sphi 0, %s296
      %s318 = sphi 0, %s320
      %s321 = sphi 0, %s318
      %s322 = sphi 0, %s321
      %s338 = sphi 0, %s322
      %s344 = sphi 0, %s346
      %s347 = sphi 0, %s344
      %s348 = sphi 0, %s347
      %s364 = sphi 0, %s348
      %s368 = sphi 0, %s368
      %s370 = sphi 0, %s368
      %s371 = sphi 0, %s370
      %s385 = sphi 0, %s371
      %s389 = sphi 0, %s389
      %s391 = sphi 0, %s389
      %s392 = sphi 0, %s391
      %s406 = sphi 0, %s392
      %s410 = sphi 0, %s410
      %s412 = sphi 0, %s410
      %s413 = sphi 0, %s412
      %s427 = sphi 0, %s413
    $region4: #{tpu_custom_call.1} parent=1 // loop_header_branch
      %35 = sbr.rel (%p33) target = $region8
    $region5: #{tpu_custom_call.1} parent=1 // loop_body
      %s37 = ssub.s32 %s32, 1
      %s38 = ssub.s32 %s32, 2
      %s39 = sadd.s32 %s32, 1
      %s41 = sadd.s32 %s40, 1
      %p44 = scmp.eq.s32.totalorder %s32, 1
      %p45 = scmp.ne.s32.totalorder %s40, %s42
      %p46 = scmp.eq.s32.totalorder %s32, 0
      %p47 = por %p45, %p46
      %p48 = scmp.ne.s32.totalorder %s40, %s42
      %p49 = scmp.eq.s32.totalorder %s37, 1
      %p50 = por %p48, %p49
      %p51 = scmp.ne.s32.totalorder %s42, %s43
      %p52 = scmp.eq.s32.totalorder %s37, 0
      %p53 = por %p51, %p52
      %p54 = scmp.ne.s32.totalorder %s42, %s43
      %p55 = scmp.eq.s32.totalorder %s38, 1
      %p56 = por %p54, %p55
      %p58 = scmp.ne.s32.totalorder %s43, %s57
      %p59 = scmp.eq.s32.totalorder %s38, 0
      %p60 = por %p58, %p59
      %s62 = sadd.s32 %s61, 1
      %p65 = scmp.eq.s32.totalorder %s32, 1
      %p66 = scmp.ne.s32.totalorder %s61, %s63
      %p67 = scmp.eq.s32.totalorder %s32, 0
      %p68 = por %p66, %p67
      %p69 = scmp.ne.s32.totalorder %s61, %s63
      %p70 = scmp.eq.s32.totalorder %s37, 1
      %p71 = por %p69, %p70
      %p72 = scmp.ne.s32.totalorder %s63, %s64
      %p73 = scmp.eq.s32.totalorder %s37, 0
      %p74 = por %p72, %p73
      %p75 = scmp.ne.s32.totalorder %s63, %s64
      %p76 = scmp.eq.s32.totalorder %s38, 1
      %p77 = por %p75, %p76
      %p79 = scmp.ne.s32.totalorder %s64, %s78
      %p80 = scmp.eq.s32.totalorder %s38, 0
      %p81 = por %p79, %p80
      %s82 = ssub.s32 %s32, %s39
      %p83 = scmp.eq.s32.totalorder %s82, 0
      %s85 = sadd.s32 %s84, 1
      %s86 = scalar_select %p83, %s84, %s85
      %p89 = pneg %p83
      %p90 = scmp.eq.s32.totalorder %s32, 1
      %p91 = por %p89, %p90
      %p92 = scmp.ne.s32.totalorder %s84, %s87
      %p93 = scmp.eq.s32.totalorder %s32, 0
      %p94 = por %p92, %p93
      %p95 = scmp.ne.s32.totalorder %s84, %s87
      %p96 = scmp.eq.s32.totalorder %s37, 1
      %p97 = por %p95, %p96
      %p98 = scmp.ne.s32.totalorder %s87, %s88
      %p99 = scmp.eq.s32.totalorder %s37, 0
      %p100 = por %p98, %p99
      %p101 = scmp.ne.s32.totalorder %s87, %s88
      %p102 = scmp.eq.s32.totalorder %s38, 1
      %p103 = por %p101, %p102
      %p105 = scmp.ne.s32.totalorder %s88, %s104
      %p106 = scmp.eq.s32.totalorder %s38, 0
      %p107 = por %p105, %p106
      %s108 = ssub.s32 %s32, %s39
      %p109 = scmp.eq.s32.totalorder %s108, 0
      %s111 = sadd.s32 %s110, 1
      %s112 = scalar_select %p109, %s110, %s111
      %p115 = pneg %p109
      %p116 = scmp.eq.s32.totalorder %s32, 1
      %p117 = por %p115, %p116
      %p118 = scmp.ne.s32.totalorder %s110, %s113
      %p119 = scmp.eq.s32.totalorder %s32, 0
      %p120 = por %p118, %p119
      %p121 = scmp.ne.s32.totalorder %s110, %s113
      %p122 = scmp.eq.s32.totalorder %s37, 1
      %p123 = por %p121, %p122
      %p124 = scmp.ne.s32.totalorder %s113, %s114
      %p125 = scmp.eq.s32.totalorder %s37, 0
      %p126 = por %p124, %p125
      %p127 = scmp.ne.s32.totalorder %s113, %s114
      %p128 = scmp.eq.s32.totalorder %s38, 1
      %p129 = por %p127, %p128
      %p131 = scmp.ne.s32.totalorder %s114, %s130
      %p132 = scmp.eq.s32.totalorder %s38, 0
      %p133 = por %p131, %p132
      %s134 = ssub.s32 %s32, %s39
      %p135 = scmp.eq.s32.totalorder %s134, 0
      %s137 = sadd.s32 %s136, 1
      %s138 = scalar_select %p135, %s136, %s137
      %p141 = pneg %p135
      %p142 = scmp.eq.s32.totalorder %s32, 1
      %p143 = por %p141, %p142
      %p144 = scmp.ne.s32.totalorder %s136, %s139
      %p145 = scmp.eq.s32.totalorder %s32, 0
      %p146 = por %p144, %p145
      %p147 = scmp.ne.s32.totalorder %s136, %s139
      %p148 = scmp.eq.s32.totalorder %s37, 1
      %p149 = por %p147, %p148
      %p150 = scmp.ne.s32.totalorder %s139, %s140
      %p151 = scmp.eq.s32.totalorder %s37, 0
      %p152 = por %p150, %p151
      %p153 = scmp.ne.s32.totalorder %s139, %s140
      %p154 = scmp.eq.s32.totalorder %s38, 1
      %p155 = por %p153, %p154
      %p157 = scmp.ne.s32.totalorder %s140, %s156
      %p158 = scmp.eq.s32.totalorder %s38, 0
      %p159 = por %p157, %p158
      %s160 = ssub.s32 %s32, %s39
      %p161 = scmp.eq.s32.totalorder %s160, 0
      %s163 = sadd.s32 %s162, 1
      %s164 = scalar_select %p161, %s162, %s163
      %p167 = pneg %p161
      %p168 = scmp.eq.s32.totalorder %s32, 1
      %p169 = por %p167, %p168
      %p170 = scmp.ne.s32.totalorder %s162, %s165
      %p171 = scmp.eq.s32.totalorder %s32, 0
      %p172 = por %p170, %p171
      %p173 = scmp.ne.s32.totalorder %s162, %s165
      %p174 = scmp.eq.s32.totalorder %s37, 1
      %p175 = por %p173, %p174
      %p176 = scmp.ne.s32.totalorder %s165, %s166
      %p177 = scmp.eq.s32.totalorder %s37, 0
      %p178 = por %p176, %p177
      %p179 = scmp.ne.s32.totalorder %s165, %s166
      %p180 = scmp.eq.s32.totalorder %s38, 1
      %p181 = por %p179, %p180
      %p183 = scmp.ne.s32.totalorder %s166, %s182
      %p184 = scmp.eq.s32.totalorder %s38, 0
      %p185 = por %p183, %p184
      %s186 = ssub.s32 %s32, %s39
      %p187 = scmp.eq.s32.totalorder %s186, 0
      %s189 = sadd.s32 %s188, 1
      %s190 = scalar_select %p187, %s188, %s189
      %p193 = pneg %p187
      %p194 = scmp.eq.s32.totalorder %s32, 1
      %p195 = por %p193, %p194
      %p196 = scmp.ne.s32.totalorder %s188, %s191
      %p197 = scmp.eq.s32.totalorder %s32, 0
      %p198 = por %p196, %p197
      %p199 = scmp.ne.s32.totalorder %s188, %s191
      %p200 = scmp.eq.s32.totalorder %s37, 1
      %p201 = por %p199, %p200
      %p202 = scmp.ne.s32.totalorder %s191, %s192
      %p203 = scmp.eq.s32.totalorder %s37, 0
      %p204 = por %p202, %p203
      %p205 = scmp.ne.s32.totalorder %s191, %s192
      %p206 = scmp.eq.s32.totalorder %s38, 1
      %p207 = por %p205, %p206
      %p209 = scmp.ne.s32.totalorder %s192, %s208
      %p210 = scmp.eq.s32.totalorder %s38, 0
      %p211 = por %p209, %p210
      %s212 = ssub.s32 %s32, %s39
      %p213 = scmp.eq.s32.totalorder %s212, 0
      %s215 = sadd.s32 %s214, 1
      %s216 = scalar_select %p213, %s214, %s215
      %p219 = pneg %p213
      %p220 = scmp.eq.s32.totalorder %s32, 1
      %p221 = por %p219, %p220
      %p222 = scmp.ne.s32.totalorder %s214, %s217
      %p223 = scmp.eq.s32.totalorder %s32, 0
      %p224 = por %p222, %p223
      %p225 = scmp.ne.s32.totalorder %s214, %s217
      %p226 = scmp.eq.s32.totalorder %s37, 1
      %p227 = por %p225, %p226
      %p228 = scmp.ne.s32.totalorder %s217, %s218
      %p229 = scmp.eq.s32.totalorder %s37, 0
      %p230 = por %p228, %p229
      %p231 = scmp.ne.s32.totalorder %s217, %s218
      %p232 = scmp.eq.s32.totalorder %s38, 1
      %p233 = por %p231, %p232
      %p235 = scmp.ne.s32.totalorder %s218, %s234
      %p236 = scmp.eq.s32.totalorder %s38, 0
      %p237 = por %p235, %p236
      %s238 = ssub.s32 %s32, %s39
      %p239 = scmp.eq.s32.totalorder %s238, 0
      %s241 = sadd.s32 %s240, 1
      %s242 = scalar_select %p239, %s240, %s241
      %p245 = pneg %p239
      %p246 = scmp.eq.s32.totalorder %s32, 1
      %p247 = por %p245, %p246
      %p248 = scmp.ne.s32.totalorder %s240, %s243
      %p249 = scmp.eq.s32.totalorder %s32, 0
      %p250 = por %p248, %p249
      %p251 = scmp.ne.s32.totalorder %s240, %s243
      %p252 = scmp.eq.s32.totalorder %s37, 1
      %p253 = por %p251, %p252
      %p254 = scmp.ne.s32.totalorder %s243, %s244
      %p255 = scmp.eq.s32.totalorder %s37, 0
      %p256 = por %p254, %p255
      %p257 = scmp.ne.s32.totalorder %s243, %s244
      %p258 = scmp.eq.s32.totalorder %s38, 1
      %p259 = por %p257, %p258
      %p261 = scmp.ne.s32.totalorder %s244, %s260
      %p262 = scmp.eq.s32.totalorder %s38, 0
      %p263 = por %p261, %p262
      %s264 = ssub.s32 %s32, %s39
      %p265 = scmp.eq.s32.totalorder %s264, 0
      %s267 = sadd.s32 %s266, 1
      %s268 = scalar_select %p265, %s266, %s267
      %p271 = pneg %p265
      %p272 = scmp.eq.s32.totalorder %s32, 1
      %p273 = por %p271, %p272
      %p274 = scmp.ne.s32.totalorder %s266, %s269
      %p275 = scmp.eq.s32.totalorder %s32, 0
      %p276 = por %p274, %p275
      %p277 = scmp.ne.s32.totalorder %s266, %s269
      %p278 = scmp.eq.s32.totalorder %s37, 1
      %p279 = por %p277, %p278
      %p280 = scmp.ne.s32.totalorder %s269, %s270
      %p281 = scmp.eq.s32.totalorder %s37, 0
      %p282 = por %p280, %p281
      %p283 = scmp.ne.s32.totalorder %s269, %s270
      %p284 = scmp.eq.s32.totalorder %s38, 1
      %p285 = por %p283, %p284
      %p287 = scmp.ne.s32.totalorder %s270, %s286
      %p288 = scmp.eq.s32.totalorder %s38, 0
      %p289 = por %p287, %p288
      %s290 = ssub.s32 %s32, %s39
      %p291 = scmp.eq.s32.totalorder %s290, 0
      %s293 = sadd.s32 %s292, 1
      %s294 = scalar_select %p291, %s292, %s293
      %p297 = pneg %p291
      %p298 = scmp.eq.s32.totalorder %s32, 1
      %p299 = por %p297, %p298
      %p300 = scmp.ne.s32.totalorder %s292, %s295
      %p301 = scmp.eq.s32.totalorder %s32, 0
      %p302 = por %p300, %p301
      %p303 = scmp.ne.s32.totalorder %s292, %s295
      %p304 = scmp.eq.s32.totalorder %s37, 1
      %p305 = por %p303, %p304
      %p306 = scmp.ne.s32.totalorder %s295, %s296
      %p307 = scmp.eq.s32.totalorder %s37, 0
      %p308 = por %p306, %p307
      %p309 = scmp.ne.s32.totalorder %s295, %s296
      %p310 = scmp.eq.s32.totalorder %s38, 1
      %p311 = por %p309, %p310
      %p313 = scmp.ne.s32.totalorder %s296, %s312
      %p314 = scmp.eq.s32.totalorder %s38, 0
      %p315 = por %p313, %p314
      %s316 = ssub.s32 %s32, %s39
      %p317 = scmp.eq.s32.totalorder %s316, 0
      %s319 = sadd.s32 %s318, 1
      %s320 = scalar_select %p317, %s318, %s319
      %p323 = pneg %p317
      %p324 = scmp.eq.s32.totalorder %s32, 1
      %p325 = por %p323, %p324
      %p326 = scmp.ne.s32.totalorder %s318, %s321
      %p327 = scmp.eq.s32.totalorder %s32, 0
      %p328 = por %p326, %p327
      %p329 = scmp.ne.s32.totalorder %s318, %s321
      %p330 = scmp.eq.s32.totalorder %s37, 1
      %p331 = por %p329, %p330
      %p332 = scmp.ne.s32.totalorder %s321, %s322
      %p333 = scmp.eq.s32.totalorder %s37, 0
      %p334 = por %p332, %p333
      %p335 = scmp.ne.s32.totalorder %s321, %s322
      %p336 = scmp.eq.s32.totalorder %s38, 1
      %p337 = por %p335, %p336
      %p339 = scmp.ne.s32.totalorder %s322, %s338
      %p340 = scmp.eq.s32.totalorder %s38, 0
      %p341 = por %p339, %p340
      %s342 = ssub.s32 %s32, %s39
      %p343 = scmp.eq.s32.totalorder %s342, 0
      %s345 = sadd.s32 %s344, 1
      %s346 = scalar_select %p343, %s344, %s345
      %p349 = pneg %p343
      %p350 = scmp.eq.s32.totalorder %s32, 1
      %p351 = por %p349, %p350
      %p352 = scmp.ne.s32.totalorder %s344, %s347
      %p353 = scmp.eq.s32.totalorder %s32, 0
      %p354 = por %p352, %p353
      %p355 = scmp.ne.s32.totalorder %s344, %s347
      %p356 = scmp.eq.s32.totalorder %s37, 1
      %p357 = por %p355, %p356
      %p358 = scmp.ne.s32.totalorder %s347, %s348
      %p359 = scmp.eq.s32.totalorder %s37, 0
      %p360 = por %p358, %p359
      %p361 = scmp.ne.s32.totalorder %s347, %s348
      %p362 = scmp.eq.s32.totalorder %s38, 1
      %p363 = por %p361, %p362
      %p365 = scmp.ne.s32.totalorder %s348, %s364
      %p366 = scmp.eq.s32.totalorder %s38, 0
      %p367 = por %p365, %p366
      %s369 = sadd.s32 %s368, 1
      %p372 = scmp.eq.s32.totalorder %s32, 1
      %p373 = scmp.ne.s32.totalorder %s368, %s370
      %p374 = scmp.eq.s32.totalorder %s32, 0
      %p375 = por %p373, %p374
      %p376 = scmp.ne.s32.totalorder %s368, %s370
      %p377 = scmp.eq.s32.totalorder %s37, 1
      %p378 = por %p376, %p377
      %p379 = scmp.ne.s32.totalorder %s370, %s371
      %p380 = scmp.eq.s32.totalorder %s37, 0
      %p381 = por %p379, %p380
      %p382 = scmp.ne.s32.totalorder %s370, %s371
      %p383 = scmp.eq.s32.totalorder %s38, 1
      %p384 = por %p382, %p383
      %p386 = scmp.ne.s32.totalorder %s371, %s385
      %p387 = scmp.eq.s32.totalorder %s38, 0
      %p388 = por %p386, %p387
      %s390 = sadd.s32 %s389, 1
      %p393 = scmp.eq.s32.totalorder %s32, 1
      %p394 = scmp.ne.s32.totalorder %s389, %s391
      %p395 = scmp.eq.s32.totalorder %s32, 0
      %p396 = por %p394, %p395
      %p397 = scmp.ne.s32.totalorder %s389, %s391
      %p398 = scmp.eq.s32.totalorder %s37, 1
      %p399 = por %p397, %p398
      %p400 = scmp.ne.s32.totalorder %s391, %s392
      %p401 = scmp.eq.s32.totalorder %s37, 0
      %p402 = por %p400, %p401
      %p403 = scmp.ne.s32.totalorder %s391, %s392
      %p404 = scmp.eq.s32.totalorder %s38, 1
      %p405 = por %p403, %p404
      %p407 = scmp.ne.s32.totalorder %s392, %s406
      %p408 = scmp.eq.s32.totalorder %s38, 0
      %p409 = por %p407, %p408
      %s411 = sadd.s32 %s410, 1
      %p414 = scmp.eq.s32.totalorder %s32, 1
      %p415 = scmp.ne.s32.totalorder %s410, %s412
      %p416 = scmp.eq.s32.totalorder %s32, 0
      %p417 = por %p415, %p416
      %p418 = scmp.ne.s32.totalorder %s410, %s412
      %p419 = scmp.eq.s32.totalorder %s37, 1
      %p420 = por %p418, %p419
      %p421 = scmp.ne.s32.totalorder %s412, %s413
      %p422 = scmp.eq.s32.totalorder %s37, 0
      %p423 = por %p421, %p422
      %p424 = scmp.ne.s32.totalorder %s412, %s413
      %p425 = scmp.eq.s32.totalorder %s38, 1
      %p426 = por %p424, %p425
      %p428 = scmp.ne.s32.totalorder %s413, %s427
      %p429 = scmp.eq.s32.totalorder %s38, 0
      %p430 = por %p428, %p429
      %p431 = scmp.le.s32.totalorder 1, %s32
      %p432 = scmp.lt.s32.totalorder %s32, 3
      %p433 = pnand %p431, %p432
      %p434 = pneg %p433
      // Predicated region
      $region9: #{tpu_custom_call.1} parent=5 // pred_check
        _
      $region10: #{tpu_custom_call.1} parent=5 // pred_check_branch
        %436 = sbr.rel (%p433) target = $region12
      $region11: #{tpu_custom_call.1} parent=5 // pred_region
        %s437 = ssub.s32 %s32, 1
        // Predicated region
        $region13: #{tpu_custom_call.1} parent=11 // pred_check
          %p438 = pneg %p53
        $region14: #{tpu_custom_call.1} parent=11 // pred_check_branch
          %440 = sbr.rel (%p438) target = $region16
        $region15: #{tpu_custom_call.1} parent=11 // pred_region
          %s442 = ssub.s32 256, 256
          %443 = vsyncadd [#allocation3], %s442
          %s444 = sshll.u32 [#allocation2], 4
          %s445 = int_to_ptr.vmem [resolvable:$true] %s444
          %450 = dma.hbm_to_vmem [thread:$0]  %s0, 256, %s445, [#allocation3], 128, 128, 8
        $region16: #{tpu_custom_call.1} parent=11 // pred_fallthru
          _
        // Predicated region
        $region17: #{tpu_custom_call.1} parent=11 // pred_check
          %p451 = pneg %p74
        $region18: #{tpu_custom_call.1} parent=11 // pred_check_branch
          %453 = sbr.rel (%p451) target = $region20
        $region19: #{tpu_custom_call.1} parent=11 // pred_region
          _
        $region20: #{tpu_custom_call.1} parent=11 // pred_fallthru
          _
        // Predicated region
        $region21: #{tpu_custom_call.1} parent=11 // pred_check
          %p454 = pneg %p381
        $region22: #{tpu_custom_call.1} parent=11 // pred_check_branch
          %456 = sbr.rel (%p454) target = $region24
        $region23: #{tpu_custom_call.1} parent=11 // pred_region
          _
        $region24: #{tpu_custom_call.1} parent=11 // pred_fallthru
          _
        // Predicated region
        $region25: #{tpu_custom_call.1} parent=11 // pred_check
          %p457 = pneg %p402
        $region26: #{tpu_custom_call.1} parent=11 // pred_check_branch
          %459 = sbr.rel (%p457) target = $region28
        $region27: #{tpu_custom_call.1} parent=11 // pred_region
          _
        $region28: #{tpu_custom_call.1} parent=11 // pred_fallthru
          _
      $region12: #{tpu_custom_call.1} parent=5 // pred_fallthru
        _
      %p460 = scmp.lt.s32.totalorder %s32, 2
      // Predicated region
      $region29: #{tpu_custom_call.1} parent=5 // pred_check
        %p461 = pneg %p460
      $region30: #{tpu_custom_call.1} parent=5 // pred_check_branch
        %463 = sbr.rel (%p461) target = $region32
      $region31: #{tpu_custom_call.1} parent=5 // pred_region
        // Predicated region
        $region33: #{tpu_custom_call.1} parent=31 // pred_check
          %p464 = pneg %p94
        $region34: #{tpu_custom_call.1} parent=31 // pred_check_branch
          %466 = sbr.rel (%p464) target = $region36
        $region35: #{tpu_custom_call.1} parent=31 // pred_region
          %s467 = sand.u32 %s32, 1
          %s468 = scalar_lea.sflag [#allocation6], %s467
          %s469 = sand.u32 %s84, 1
          %s470 = scalar_lea.vmem [#allocation5], %s469
          %s472 = ssub.s32 16, 16
          %473 = vsyncadd %s468, %s472
          %s474 = smul.addr %s32, 16
          %s475 = scalar_lea.hbm %s2, %s474
          %s477 = sshll.u32 %s470, 4
          %s478 = int_to_ptr.vmem [resolvable:$true] %s477
          %480 = dma.hbm_to_vmem [thread:$0]  %s475, 16, %s478, %s468
        $region36: #{tpu_custom_call.1} parent=31 // pred_fallthru
          _
        // Predicated region
        $region37: #{tpu_custom_call.1} parent=31 // pred_check
          %p481 = pneg %p120
        $region38: #{tpu_custom_call.1} parent=31 // pred_check_branch
          %483 = sbr.rel (%p481) target = $region40
        $region39: #{tpu_custom_call.1} parent=31 // pred_region
          %p484 = scmp.lt.s32.totalorder %s32, 1
          %s485 = scalar_select %p484, %s32, 1
          %s486 = scalar_lea.vmem %s3, %s485
        $region40: #{tpu_custom_call.1} parent=31 // pred_fallthru
          _
        // Predicated region
        $region41: #{tpu_custom_call.1} parent=31 // pred_check
          %p487 = pneg %p146
        $region42: #{tpu_custom_call.1} parent=31 // pred_check_branch
          %489 = sbr.rel (%p487) target = $region44
        $region43: #{tpu_custom_call.1} parent=31 // pred_region
          %s490 = sand.u32 %s32, 1
          %s491 = scalar_lea.sflag [#allocation6], %s490
          %s492 = sand.u32 %s136, 1
          %s493 = smul.addr %s492, 192
          %s494 = scalar_lea.vmem [#allocation7], %s493
          %s496 = ssub.s32 3072, 3072
          %497 = vsyncadd %s491, %s496
          %s498 = smul.addr %s32, 48
          %s499 = smul.addr %s498, 64
          %s500 = scalar_lea.hbm %s4, %s499
          %s501 = sshll.u32 %s494, 4
          %s502 = int_to_ptr.vmem [resolvable:$true] %s501
          %507 = dma.hbm_to_vmem [thread:$0]  %s500, 3072, %s502, %s491, 192, 192, 12
        $region44: #{tpu_custom_call.1} parent=31 // pred_fallthru
          _
        // Predicated region
        $region45: #{tpu_custom_call.1} parent=31 // pred_check
          %p508 = pneg %p172
        $region46: #{tpu_custom_call.1} parent=31 // pred_check_branch
          %510 = sbr.rel (%p508) target = $region48
        $region47: #{tpu_custom_call.1} parent=31 // pred_region
          %s511 = sand.u32 %s32, 1
          %s512 = scalar_lea.sflag [#allocation9], %s511
          %s513 = sand.u32 %s162, 1
          %s514 = smul.addr %s513, 64
          %s515 = scalar_lea.vmem [#allocation8], %s514
          %s517 = ssub.s32 1024, 1024
          %518 = vsyncadd %s512, %s517
          %s519 = smul.addr %s32, 16
          %s520 = smul.addr %s519, 64
          %s521 = scalar_lea.hbm %s5, %s520
          %s522 = sshll.u32 %s515, 4
          %s523 = int_to_ptr.vmem [resolvable:$true] %s522
          %528 = dma.hbm_to_vmem [thread:$0]  %s521, 1024, %s523, %s512, 64, 64, 4
        $region48: #{tpu_custom_call.1} parent=31 // pred_fallthru
          _
        // Predicated region
        $region49: #{tpu_custom_call.1} parent=31 // pred_check
          %p529 = pneg %p198
        $region50: #{tpu_custom_call.1} parent=31 // pred_check_branch
          %531 = sbr.rel (%p529) target = $region52
        $region51: #{tpu_custom_call.1} parent=31 // pred_region
          %p532 = scmp.lt.s32.totalorder %s32, 1
          %s533 = scalar_select %p532, %s32, 1
          %s534 = scalar_lea.vmem %s6, %s533
        $region52: #{tpu_custom_call.1} parent=31 // pred_fallthru
          _
        // Predicated region
        $region53: #{tpu_custom_call.1} parent=31 // pred_check
          %p535 = pneg %p224
        $region54: #{tpu_custom_call.1} parent=31 // pred_check_branch
          %537 = sbr.rel (%p535) target = $region56
        $region55: #{tpu_custom_call.1} parent=31 // pred_region
          %p538 = scmp.lt.s32.totalorder %s32, 1
          %s539 = scalar_select %p538, %s32, 1
          %s540 = scalar_lea.vmem %s7, %s539
        $region56: #{tpu_custom_call.1} parent=31 // pred_fallthru
          _
        // Predicated region
        $region57: #{tpu_custom_call.1} parent=31 // pred_check
          %p541 = pneg %p250
        $region58: #{tpu_custom_call.1} parent=31 // pred_check_branch
          %543 = sbr.rel (%p541) target = $region60
        $region59: #{tpu_custom_call.1} parent=31 // pred_region
          %p544 = scmp.lt.s32.totalorder %s32, 1
          %s545 = scalar_select %p544, %s32, 1
          %s546 = scalar_lea.vmem %s8, %s545
        $region60: #{tpu_custom_call.1} parent=31 // pred_fallthru
          _
        // Predicated region
        $region61: #{tpu_custom_call.1} parent=31 // pred_check
          %p547 = pneg %p276
        $region62: #{tpu_custom_call.1} parent=31 // pred_check_branch
          %549 = sbr.rel (%p547) target = $region64
        $region63: #{tpu_custom_call.1} parent=31 // pred_region
          %s550 = sand.u32 %s32, 1
          %s551 = scalar_lea.sflag [#allocation9], %s550
          %s552 = sand.u32 %s266, 1
          %s553 = smul.addr %s552, 128
          %s554 = scalar_lea.vmem [#allocation10], %s553
          %s556 = ssub.s32 2048, 2048
          %557 = vsyncadd %s551, %s556
          %s558 = smul.addr %s32, 32
          %s559 = smul.addr %s558, 64
          %s560 = scalar_lea.hbm %s9, %s559
          %s561 = sshll.u32 %s554, 4
          %s562 = int_to_ptr.vmem [resolvable:$true] %s561
          %567 = dma.hbm_to_vmem [thread:$0]  %s560, 2048, %s562, %s551, 128, 128, 8
        $region64: #{tpu_custom_call.1} parent=31 // pred_fallthru
          _
        // Predicated region
        $region65: #{tpu_custom_call.1} parent=31 // pred_check
          %p568 = pneg %p302
        $region66: #{tpu_custom_call.1} parent=31 // pred_check_branch
          %570 = sbr.rel (%p568) target = $region68
        $region67: #{tpu_custom_call.1} parent=31 // pred_region
          %p571 = scmp.lt.s32.totalorder %s32, 1
          %s572 = scalar_select %p571, %s32, 1
          %s573 = smul.addr %s572, 2
          %s574 = scalar_lea.vmem %s10, %s573
        $region68: #{tpu_custom_call.1} parent=31 // pred_fallthru
          _
        // Predicated region
        $region69: #{tpu_custom_call.1} parent=31 // pred_check
          %p575 = pneg %p328
        $region70: #{tpu_custom_call.1} parent=31 // pred_check_branch
          %577 = sbr.rel (%p575) target = $region72
        $region71: #{tpu_custom_call.1} parent=31 // pred_region
          %s578 = sand.u32 %s318, 1
          %s579 = scalar_lea.sflag [#allocation12], %s578
          %s580 = sand.u32 %s318, 1
          %s581 = smul.addr %s580, 128
          %s582 = scalar_lea.vmem [#allocation11], %s581
          %s584 = ssub.s32 2048, 2048
          %585 = vsyncadd %s579, %s584
          %s586 = smul.addr %s32, 32
          %s587 = smul.addr %s586, 64
          %s588 = scalar_lea.hbm %s11, %s587
          %s589 = sshll.u32 %s582, 4
          %s590 = int_to_ptr.vmem [resolvable:$true] %s589
          %595 = dma.hbm_to_vmem [thread:$0]  %s588, 2048, %s590, %s579, 64, 64, 4
        $region72: #{tpu_custom_call.1} parent=31 // pred_fallthru
          _
        // Predicated region
        $region73: #{tpu_custom_call.1} parent=31 // pred_check
          %p596 = pneg %p354
        $region74: #{tpu_custom_call.1} parent=31 // pred_check_branch
          %598 = sbr.rel (%p596) target = $region76
        $region75: #{tpu_custom_call.1} parent=31 // pred_region
          %p599 = scmp.lt.s32.totalorder %s32, 1
          %s600 = scalar_select %p599, %s32, 1
          %s601 = scalar_lea.vmem %s12, %s600
        $region76: #{tpu_custom_call.1} parent=31 // pred_fallthru
          _
      $region32: #{tpu_custom_call.1} parent=5 // pred_fallthru
        _
      %p602 = scmp.le.s32.totalorder 1, %s32
      %p603 = scmp.lt.s32.totalorder %s32, 3
      %p604 = pnand %p602, %p603
      %p605 = pneg %p604
      // Predicated region
      $region77: #{tpu_custom_call.1} parent=5 // pred_check
        _
      $region78: #{tpu_custom_call.1} parent=5 // pred_check_branch
        %607 = sbr.rel (%p604) target = $region80
      $region79: #{tpu_custom_call.1} parent=5 // pred_region
        %s608 = ssub.s32 %s32, 1
        // Predicated region
        $region81: #{tpu_custom_call.1} parent=79 // pred_check
          %p609 = pneg %p53
        $region82: #{tpu_custom_call.1} parent=79 // pred_check_branch
          %611 = sbr.rel (%p609) target = $region84
        $region83: #{tpu_custom_call.1} parent=79 // pred_region
          %612 = dma.done [#allocation3], 256
        $region84: #{tpu_custom_call.1} parent=79 // pred_fallthru
          _
        %s613 = sand.u32 %s37, 1
        %s614 = scalar_lea.sflag [#allocation6], %s613
        %s615 = sand.u32 %s87, 1
        %s616 = scalar_lea.vmem [#allocation5], %s615
        // Predicated region
        $region85: #{tpu_custom_call.1} parent=79 // pred_check
          %p617 = pneg %p100
        $region86: #{tpu_custom_call.1} parent=79 // pred_check_branch
          %619 = sbr.rel (%p617) target = $region88
        $region87: #{tpu_custom_call.1} parent=79 // pred_region
          %620 = dma.done %s614, 16
        $region88: #{tpu_custom_call.1} parent=79 // pred_fallthru
          _
        %s621 = sand.u32 %s37, 1
        %s622 = scalar_lea.sflag [#allocation6], %s621
        %s623 = sand.u32 %s139, 1
        %s624 = smul.addr %s623, 192
        %s625 = scalar_lea.vmem [#allocation7], %s624
        // Predicated region
        $region89: #{tpu_custom_call.1} parent=79 // pred_check
          %p626 = pneg %p152
        $region90: #{tpu_custom_call.1} parent=79 // pred_check_branch
          %628 = sbr.rel (%p626) target = $region92
        $region91: #{tpu_custom_call.1} parent=79 // pred_region
          %629 = dma.done %s622, 3072
        $region92: #{tpu_custom_call.1} parent=79 // pred_fallthru
          _
        %s630 = sand.u32 %s37, 1
        %s631 = scalar_lea.sflag [#allocation9], %s630
        %s632 = sand.u32 %s165, 1
        %s633 = smul.addr %s632, 64
        %s634 = scalar_lea.vmem [#allocation8], %s633
        // Predicated region
        $region93: #{tpu_custom_call.1} parent=79 // pred_check
          %p635 = pneg %p178
        $region94: #{tpu_custom_call.1} parent=79 // pred_check_branch
          %637 = sbr.rel (%p635) target = $region96
        $region95: #{tpu_custom_call.1} parent=79 // pred_region
          %638 = dma.done %s631, 1024
        $region96: #{tpu_custom_call.1} parent=79 // pred_fallthru
          _
        %s639 = sand.u32 %s37, 1
        %s640 = scalar_lea.sflag [#allocation9], %s639
        %s641 = sand.u32 %s269, 1
        %s642 = smul.addr %s641, 128
        %s643 = scalar_lea.vmem [#allocation10], %s642
        // Predicated region
        $region97: #{tpu_custom_call.1} parent=79 // pred_check
          %p644 = pneg %p282
        $region98: #{tpu_custom_call.1} parent=79 // pred_check_branch
          %646 = sbr.rel (%p644) target = $region100
        $region99: #{tpu_custom_call.1} parent=79 // pred_region
          %647 = dma.done %s640, 2048
        $region100: #{tpu_custom_call.1} parent=79 // pred_fallthru
          _
        %s648 = sand.u32 %s321, 1
        %s649 = scalar_lea.sflag [#allocation12], %s648
        %s650 = sand.u32 %s321, 1
        %s651 = smul.addr %s650, 128
        %s652 = scalar_lea.vmem [#allocation11], %s651
        // Predicated region
        $region101: #{tpu_custom_call.1} parent=79 // pred_check
          %p653 = pneg %p334
        $region102: #{tpu_custom_call.1} parent=79 // pred_check_branch
          %655 = sbr.rel (%p653) target = $region104
        $region103: #{tpu_custom_call.1} parent=79 // pred_region
          %656 = dma.done %s649, 2048
        $region104: #{tpu_custom_call.1} parent=79 // pred_fallthru
          _
        %p657 = pneg %p53
        %p658 = pneg %p50
        %p659 = pneg %p74
        %p660 = pneg %p71
        %s661 = sand.u32 %s37, 1
        %s662 = scalar_lea.sflag [#allocation6], %s661
        %s663 = sand.u32 %s87, 1
        %s664 = scalar_lea.vmem [#allocation5], %s663
        %p665 = pneg %p100
        %p666 = pneg %p97
        %p667 = scmp.lt.s32.totalorder %s37, 1
        %s668 = scalar_select %p667, %s37, 1
        %s669 = scalar_lea.vmem %s3, %s668
        %p670 = pneg %p126
        %p671 = pneg %p123
        %s672 = sand.u32 %s37, 1
        %s673 = scalar_lea.sflag [#allocation6], %s672
        %s674 = sand.u32 %s139, 1
        %s675 = smul.addr %s674, 192
        %s676 = scalar_lea.vmem [#allocation7], %s675
        %p677 = pneg %p152
        %p678 = pneg %p149
        %s679 = sand.u32 %s37, 1
        %s680 = scalar_lea.sflag [#allocation9], %s679
        %s681 = sand.u32 %s165, 1
        %s682 = smul.addr %s681, 64
        %s683 = scalar_lea.vmem [#allocation8], %s682
        %p684 = pneg %p178
        %p685 = pneg %p175
        %p686 = scmp.lt.s32.totalorder %s37, 1
        %s687 = scalar_select %p686, %s37, 1
        %s688 = scalar_lea.vmem %s6, %s687
        %p689 = pneg %p204
        %p690 = pneg %p201
        %p691 = scmp.lt.s32.totalorder %s37, 1
        %s692 = scalar_select %p691, %s37, 1
        %s693 = scalar_lea.vmem %s7, %s692
        %p694 = pneg %p230
        %p695 = pneg %p227
        %p696 = scmp.lt.s32.totalorder %s37, 1
        %s697 = scalar_select %p696, %s37, 1
        %s698 = scalar_lea.vmem %s8, %s697
        %p699 = pneg %p256
        %p700 = pneg %p253
        %s701 = sand.u32 %s37, 1
        %s702 = scalar_lea.sflag [#allocation9], %s701
        %s703 = sand.u32 %s269, 1
        %s704 = smul.addr %s703, 128
        %s705 = scalar_lea.vmem [#allocation10], %s704
        %p706 = pneg %p282
        %p707 = pneg %p279
        %p708 = scmp.lt.s32.totalorder %s37, 1
        %s709 = scalar_select %p708, %s37, 1
        %s710 = smul.addr %s709, 2
        %s711 = scalar_lea.vmem %s10, %s710
        %p712 = pneg %p308
        %p713 = pneg %p305
        %s714 = sand.u32 %s321, 1
        %s715 = scalar_lea.sflag [#allocation12], %s714
        %s716 = sand.u32 %s321, 1
        %s717 = smul.addr %s716, 128
        %s718 = scalar_lea.vmem [#allocation11], %s717
        %p719 = pneg %p334
        %p720 = pneg %p331
        %p721 = scmp.lt.s32.totalorder %s37, 1
        %s722 = scalar_select %p721, %s37, 1
        %s723 = scalar_lea.vmem %s12, %s722
        %p724 = pneg %p360
        %p725 = pneg %p357
        %p726 = pneg %p381
        %p727 = pneg %p378
        %p728 = pneg %p402
        %p729 = pneg %p399
        %p730 = pneg %p423
        %p731 = pneg %p420
        %p732 = scmp.lt.s32.totalorder %s37, 1
        %s733 = scalar_select %p732, %s37, 1
        %s734 = scalar_lea.vmem %s3, %s733
        %p735 = scmp.lt.s32.totalorder %s37, 1
        %s736 = scalar_select %p735, %s37, 1
        %s737 = scalar_lea.vmem %s6, %s736
        %p738 = scmp.lt.s32.totalorder %s37, 1
        %s739 = scalar_select %p738, %s37, 1
        %s740 = scalar_lea.vmem %s7, %s739
        %p741 = scmp.lt.s32.totalorder %s37, 1
        %s742 = scalar_select %p741, %s37, 1
        %s743 = scalar_lea.vmem %s8, %s742
        %p744 = scmp.lt.s32.totalorder %s37, 1
        %s745 = scalar_select %p744, %s37, 1
        %s746 = smul.addr %s745, 2
        %s747 = scalar_lea.vmem %s10, %s746
        %p748 = scmp.lt.s32.totalorder %s37, 1
        %s749 = scalar_select %p748, %s37, 1
        %s750 = scalar_lea.vmem %s12, %s749
        %p752 = scmp.eq.s32.totalorder %s37, 0
        // Predicated region
        $region105: #{tpu_custom_call.1} parent=79 // pred_check
          %p753 = pneg %p752
        $region106: #{tpu_custom_call.1} parent=79 // pred_check_branch
          %755 = sbr.rel (%p753) target = $region108
        $region107: #{tpu_custom_call.1} parent=79 // pred_region
          %v756 = vld [vmem:[#allocation2] sm:$0xff]
          %v757 = vld [vmem:[#allocation2 + $0x8] sm:$0xff]
          %758 = vst [vmem:[#allocation13] sm:$0xff] %v756
          %759 = vst [vmem:[#allocation13 + $0x8] sm:$0xff] %v757
        $region108: #{tpu_custom_call.1} parent=79 // pred_fallthru
          _
        %v760 = vld [vmem:[#allocation13] sm:$0xff]
        %v761 = vld [vmem:[#allocation13 + $0x8] sm:$0xff]
        %v762 = vld [vmem:[%s616] sm:$0x1]
        %v763 = vld [vmem:[%s734] sm:$0x1]
        %764 = vadd.xlane.f32.xlu0 %v760
        %v765 = vpop.xlane.xlu0 %764
        %766 = vadd.xlane.f32.xlu0 %v761
        %v767 = vpop.xlane.xlu0 %766
        %v768 = vrcp.pop 128.0
        %v769 = vmul.f32 %v765, %v768
        %v770 = vmul.f32 %v767, %v768
        %v771 = vsub.f32 %v760, %v769
        %v772 = vsub.f32 %v761, %v770
        %v773 = vmul.f32 %v771, %v771
        %v774 = vmul.f32 %v772, %v772
        %775 = vadd.xlane.f32.xlu0 %v773
        %v776 = vpop.xlane.xlu0 %775
        %777 = vadd.xlane.f32.xlu0 %v774
        %v778 = vpop.xlane.xlu0 %777
        %v779 = vmul.f32 %v776, %v768
        %v780 = vmul.f32 %v778, %v768
        %v781 = vadd.f32 %v779, 1e-05
        %v782 = vadd.f32 %v780, 1e-05
        %v783 = vrsqrt.pop %v781
        %v784 = vrsqrt.pop %v782
        %v785 = vmul.f32 %v771, %v783
        %v786 = vmul.f32 %v772, %v784
        %v788 = vlaneseq
        %v789 = vshrl.u32 %v788, 7
        %v790 = vsub.s32 0, %v789
        %v791 = vrot.slane %v762, %v790
        %v793 = vmul.f32 %v785, %v791
        %v794 = vmul.f32 %v786, %v791
        %v796 = vlaneseq
        %v797 = vshrl.u32 %v796, 7
        %v798 = vsub.s32 0, %v797
        %v799 = vrot.slane %v763, %v798
        %v801 = vadd.f32 %v793, %v799
        %v802 = vadd.f32 %v794, %v799
        %v803 = vpack.c.bf16 %v802, %v801
        %v804 = vld [vmem:[%s625] sm:$0xff]
        %v805 = vld [vmem:[%s625 + $0x8] sm:$0xf]
        %v806 = vld [vmem:[%s625 + $0xc] sm:$0xff]
        %v807 = vld [vmem:[%s625 + $0x14] sm:$0xf]
        %v808 = vld [vmem:[%s625 + $0x18] sm:$0xff]
        %v809 = vld [vmem:[%s625 + $0x20] sm:$0xf]
        %v810 = vld [vmem:[%s625 + $0x24] sm:$0xff]
        %v811 = vld [vmem:[%s625 + $0x2c] sm:$0xf]
        %v812 = vld [vmem:[%s625 + $0x30] sm:$0xff]
        %v813 = vld [vmem:[%s625 + $0x38] sm:$0xf]
        %v814 = vld [vmem:[%s625 + $0x3c] sm:$0xff]
        %v815 = vld [vmem:[%s625 + $0x44] sm:$0xf]
        %v816 = vld [vmem:[%s625 + $0x48] sm:$0xff]
        %v817 = vld [vmem:[%s625 + $0x50] sm:$0xf]
        %v818 = vld [vmem:[%s625 + $0x54] sm:$0xff]
        %v819 = vld [vmem:[%s625 + $0x5c] sm:$0xf]
        %v820 = vld [vmem:[%s625 + $0x60] sm:$0xff]
        %v821 = vld [vmem:[%s625 + $0x68] sm:$0xf]
        %v822 = vld [vmem:[%s625 + $0x6c] sm:$0xff]
        %v823 = vld [vmem:[%s625 + $0x74] sm:$0xf]
        %v824 = vld [vmem:[%s625 + $0x78] sm:$0xff]
        %v825 = vld [vmem:[%s625 + $0x80] sm:$0xf]
        %v826 = vld [vmem:[%s625 + $0x84] sm:$0xff]
        %v827 = vld [vmem:[%s625 + $0x8c] sm:$0xf]
        %v828 = vld [vmem:[%s625 + $0x90] sm:$0xff]
        %v829 = vld [vmem:[%s625 + $0x98] sm:$0xf]
        %v830 = vld [vmem:[%s625 + $0x9c] sm:$0xff]
        %v831 = vld [vmem:[%s625 + $0xa4] sm:$0xf]
        %v832 = vld [vmem:[%s625 + $0xa8] sm:$0xff]
        %v833 = vld [vmem:[%s625 + $0xb0] sm:$0xf]
        %v834 = vld [vmem:[%s625 + $0xb4] sm:$0xff]
        %v835 = vld [vmem:[%s625 + $0xbc] sm:$0xf]
        %v868 = vunpack.c.l.b16 %v804
        %v869 = vunpack.c.h.b16 %v804
        %v870 = vunpack.c.l.b16 %v805
        %v871 = vunpack.c.l.b16 %v806
        %v872 = vunpack.c.h.b16 %v806
        %v873 = vunpack.c.l.b16 %v807
        %v874 = vunpack.c.l.b16 %v808
        %v875 = vunpack.c.h.b16 %v808
        %v876 = vunpack.c.l.b16 %v809
        %v877 = vunpack.c.l.b16 %v810
        %v878 = vunpack.c.h.b16 %v810
        %v879 = vunpack.c.l.b16 %v811
        %v880 = vunpack.c.l.b16 %v812
        %v881 = vunpack.c.h.b16 %v812
        %v882 = vunpack.c.l.b16 %v813
        %v883 = vunpack.c.l.b16 %v814
        %v884 = vunpack.c.h.b16 %v814
        %v885 = vunpack.c.l.b16 %v815
        %v886 = vunpack.c.l.b16 %v816
        %v887 = vunpack.c.h.b16 %v816
        %v888 = vunpack.c.l.b16 %v817
        %v889 = vunpack.c.l.b16 %v818
        %v890 = vunpack.c.h.b16 %v818
        %v891 = vunpack.c.l.b16 %v819
        %v892 = vunpack.c.l.b16 %v820
        %v893 = vunpack.c.h.b16 %v820
        %v894 = vunpack.c.l.b16 %v821
        %v895 = vunpack.c.l.b16 %v822
        %v896 = vunpack.c.h.b16 %v822
        %v897 = vunpack.c.l.b16 %v823
        %v898 = vunpack.c.l.b16 %v824
        %v899 = vunpack.c.h.b16 %v824
        %v900 = vunpack.c.l.b16 %v825
        %v901 = vunpack.c.l.b16 %v826
        %v902 = vunpack.c.h.b16 %v826
        %v903 = vunpack.c.l.b16 %v827
        %v904 = vunpack.c.l.b16 %v828
        %v905 = vunpack.c.h.b16 %v828
        %v906 = vunpack.c.l.b16 %v829
        %v907 = vunpack.c.l.b16 %v830
        %v908 = vunpack.c.h.b16 %v830
        %v909 = vunpack.c.l.b16 %v831
        %v910 = vunpack.c.l.b16 %v832
        %v911 = vunpack.c.h.b16 %v832
        %v912 = vunpack.c.l.b16 %v833
        %v913 = vunpack.c.l.b16 %v834
        %v914 = vunpack.c.h.b16 %v834
        %v915 = vunpack.c.l.b16 %v835
        %v916 = vpack.c.b16 %v871, %v868
        %v917 = vpack.c.b16 %v872, %v869
        %v918 = vpack.c.b16 %v873, %v870
        %v919 = vpack.c.b16 %v877, %v874
        %v920 = vpack.c.b16 %v878, %v875
        %v921 = vpack.c.b16 %v879, %v876
        %v922 = vpack.c.b16 %v883, %v880
        %v923 = vpack.c.b16 %v884, %v881
        %v924 = vpack.c.b16 %v885, %v882
        %v925 = vpack.c.b16 %v889, %v886
        %v926 = vpack.c.b16 %v890, %v887
        %v927 = vpack.c.b16 %v891, %v888
        %v928 = vpack.c.b16 %v895, %v892
        %v929 = vpack.c.b16 %v896, %v893
        %v930 = vpack.c.b16 %v897, %v894
        %v931 = vpack.c.b16 %v901, %v898
        %v932 = vpack.c.b16 %v902, %v899
        %v933 = vpack.c.b16 %v903, %v900
        %v934 = vpack.c.b16 %v907, %v904
        %v935 = vpack.c.b16 %v908, %v905
        %v936 = vpack.c.b16 %v909, %v906
        %v937 = vpack.c.b16 %v913, %v910
        %v938 = vpack.c.b16 %v914, %v911
        %v939 = vpack.c.b16 %v915, %v912
        %964 = vmatprep.subr.bf16.mxu0 %v917
        %965 = vmatpush1.bf16.msra.mxu0 %v916
        %966 = vmatprep.subr.bf16.mxu0 %v920
        %967 = vmatpush1.bf16.msra.mxu0 %v919
        %968 = vmatprep.subr.bf16.mxu0 %v923
        %969 = vmatpush1.bf16.msra.mxu0 %v922
        %970 = vmatprep.subr.bf16.mxu0 %v926
        %971 = vmatpush1.bf16.msra.mxu0 %v925
        %972 = vmatprep.subr.bf16.mxu0 %v929
        %973 = vmatpush1.bf16.msra.mxu0 %v928
        %974 = vmatprep.subr.bf16.mxu0 %v932
        %975 = vmatpush1.bf16.msra.mxu0 %v931
        %976 = vmatprep.subr.bf16.mxu0 %v935
        %977 = vmatpush1.bf16.msra.mxu0 %v934
        %978 = vmatprep.subr.bf16.mxu0 %v938
        %979 = vmatpush1.bf16.msra.mxu0 %v937
        %980 = vmatprep.subr.bf16.mxu0 0
        %981 = vmatpush1.bf16.msra.mxu0 0
        %982 = vmatprep.subr.bf16.mxu0 0
        %983 = vmatpush1.bf16.msra.mxu0 0
        %984 = vmatprep.subr.bf16.mxu0 0
        %985 = vmatpush1.bf16.msra.mxu0 0
        %986 = vmatprep.subr.bf16.mxu0 0
        %987 = vmatpush1.bf16.msra.mxu0 0
        %988 = vmatprep.subr.bf16.mxu0 0
        %989 = vmatpush1.bf16.msra.mxu0 0
        %990 = vmatprep.subr.bf16.mxu0 0
        %991 = vmatpush1.bf16.msra.mxu0 0
        %992 = vmatprep.subr.bf16.mxu0 0
        %993 = vmatpush1.bf16.msra.mxu0 0
        %994 = vmatprep.subr.bf16.mxu0 0
        %995 = vmatpush1.bf16.msra.mxu0 0
        %996 = vmatprep.mubr.bf16.mxu0 0
        %997 = vmatmul.mubr.bf16.gmra.mrb[0].mxu0 %v803
        %v998 = vpop.f32.mrb[0].mxu0
        %v999 = vadd.f32 0.0, %v998
        %v1000 = vpop.f32.mrb[0].mxu0
        %v1001 = vadd.f32 0.0, %v1000
        %v1002 = vpop.f32.mrb[0].mxu0
        %v1003 = vadd.f32 0.0, %v1002
        %v1004 = vpop.f32.mrb[0].mxu0
        %v1005 = vadd.f32 0.0, %v1004
        %1006 = vdwg.mxu0
        %1007 = vmatprep.subr.bf16.mxu0 0
        %1008 = vmatpush1.bf16.msra.mxu0 %v918
        %1009 = vmatprep.subr.bf16.mxu0 0
        %1010 = vmatpush1.bf16.msra.mxu0 %v921
        %1011 = vmatprep.subr.bf16.mxu0 0
        %1012 = vmatpush1.bf16.msra.mxu0 %v924
        %1013 = vmatprep.subr.bf16.mxu0 0
        %1014 = vmatpush1.bf16.msra.mxu0 %v927
        %1015 = vmatprep.subr.bf16.mxu0 0
        %1016 = vmatpush1.bf16.msra.mxu0 %v930
        %1017 = vmatprep.subr.bf16.mxu0 0
        %1018 = vmatpush1.bf16.msra.mxu0 %v933
        %1019 = vmatprep.subr.bf16.mxu0 0
        %1020 = vmatpush1.bf16.msra.mxu0 %v936
        %1021 = vmatprep.subr.bf16.mxu0 0
        %1022 = vmatpush1.bf16.msra.mxu0 %v939
        %1023 = vmatprep.subr.bf16.mxu0 0
        %1024 = vmatpush1.bf16.msra.mxu0 0
        %1025 = vmatprep.subr.bf16.mxu0 0
        %1026 = vmatpush1.bf16.msra.mxu0 0
        %1027 = vmatprep.subr.bf16.mxu0 0
        %1028 = vmatpush1.bf16.msra.mxu0 0
        %1029 = vmatprep.subr.bf16.mxu0 0
        %1030 = vmatpush1.bf16.msra.mxu0 0
        %1031 = vmatprep.subr.bf16.mxu0 0
        %1032 = vmatpush1.bf16.msra.mxu0 0
        %1033 = vmatprep.subr.bf16.mxu0 0
        %1034 = vmatpush1.bf16.msra.mxu0 0
        %1035 = vmatprep.subr.bf16.mxu0 0
        %1036 = vmatpush1.bf16.msra.mxu0 0
        %1037 = vmatprep.subr.bf16.mxu0 0
        %1038 = vmatpush1.bf16.msra.mxu0 0
        %1039 = vmatprep.mubr.bf16.mxu0 0
        %1040 = vmatmul.mubr.bf16.gmra.mrb[0].mxu0 %v803
        %v1041 = vpop.f32.mrb[0].mxu0
        %v1042 = vadd.f32 0.0, %v1041
        %v1043 = vpop.f32.mrb[0].mxu0
        %v1044 = vpop.f32.mrb[0].mxu0
        %v1045 = vadd.f32 0.0, %v1044
        %v1046 = vpop.f32.mrb[0].mxu0
        %1047 = vdwg.mxu0
        %vm1048 = vcmask 261120
        %v1050 = vsel %vm1048, %v999, 0
        %v1053 = vsel %vm1048, %v1001, 0
        %1055 = vmatprep.subr.mxu0 0.0
        %1056 = vmatpush1.xpose.msra.mxu0 %v1053
        %1057 = vmatprep.subr.mxu0 0.0
        %1058 = vmatpush1.xpose.msra.mxu0 0.0
        %1059 = vmatprep.subr.mxu0 0.0
        %1060 = vmatpush1.xpose.msra.mxu0 0.0
        %1061 = vmatprep.subr.mxu0 0.0
        %1062 = vmatpush1.xpose.msra.mxu0 0.0
        %1063 = vmatprep.subr.mxu0 0.0
        %1064 = vmatpush1.xpose.msra.mxu0 0.0
        %1065 = vmatprep.subr.mxu0 0.0
        %1066 = vmatpush1.xpose.msra.mxu0 0.0
        %1067 = vmatprep.subr.mxu0 0.0
        %1068 = vmatpush1.xpose.msra.mxu0 0.0
        %1069 = vmatprep.subr.mxu0 0.0
        %1070 = vmatpush1.xpose.msra.mxu0 0.0
        %1071 = vmatprep.subr.mxu0 0.0
        %1072 = vmatpush1.xpose.msra.mxu0 0.0
        %1073 = vmatprep.subr.mxu0 0.0
        %1074 = vmatpush1.xpose.msra.mxu0 0.0
        %1075 = vmatprep.subr.mxu0 0.0
        %1076 = vmatpush1.xpose.msra.mxu0 0.0
        %1077 = vmatprep.subr.mxu0 0.0
        %1078 = vmatpush1.xpose.msra.mxu0 0.0
        %1079 = vmatprep.subr.mxu0 0.0
        %1080 = vmatpush1.xpose.msra.mxu0 0.0
        %1081 = vmatprep.subr.mxu0 0.0
        %1082 = vmatpush1.xpose.msra.mxu0 0.0
        %1083 = vmatprep.subr.mxu0 0.0
        %1084 = vmatpush1.xpose.msra.mxu0 0.0
        %1085 = vmatprep.subr.mxu0 0.0
        %1086 = vmatpush1.xpose.msra.mxu0 0.0
        %1087 = vmatprep.subr.mxu0 0.0
        %1088 = vmatpush1.xpose.msra.mxu0 0.0
        %1089 = vmatprep.subr.mxu0 0.0
        %1090 = vmatpush1.xpose.msra.mxu0 0.0
        %1091 = vmatprep.subr.mxu0 0.0
        %1092 = vmatpush1.xpose.msra.mxu0 0.0
        %1093 = vmatprep.subr.mxu0 0.0
        %1094 = vmatpush1.xpose.msra.mxu0 0.0
        %1095 = vmatprep.subr.mxu0 0.0
        %1096 = vmatpush1.xpose.msra.mxu0 0.0
        %1097 = vmatprep.subr.mxu0 0.0
        %1098 = vmatpush1.xpose.msra.mxu0 0.0
        %1099 = vmatprep.subr.mxu0 0.0
        %1100 = vmatpush1.xpose.msra.mxu0 0.0
        %1101 = vmatprep.subr.mxu0 0.0
        %1102 = vmatpush1.xpose.msra.mxu0 0.0
        %1103 = vmatprep.subr.mxu0 0.0
        %1104 = vmatpush1.xpose.msra.mxu0 0.0
        %1105 = vmatprep.subr.mxu0 0.0
        %1106 = vmatpush1.xpose.msra.mxu0 0.0
        %1107 = vmatprep.subr.mxu0 0.0
        %1108 = vmatpush1.xpose.msra.mxu0 0.0
        %1109 = vmatprep.subr.mxu0 0.0
        %1110 = vmatpush1.xpose.msra.mxu0 0.0
        %1111 = vmatprep.subr.mxu0 0.0
        %1112 = vmatpush1.xpose.msra.mxu0 0.0
        %1113 = vmatprep.subr.mxu0 0.0
        %1114 = vmatpush1.xpose.msra.mxu0 0.0
        %1115 = vmatprep.subr.mxu0 0.0
        %1116 = vmatpush1.xpose.msra.mxu0 0.0
        %1117 = vmatprep.subr.mxu0 0.0
        %1118 = vmatpush1.xpose.msra.mxu0 0.0
        %1119 = vmatprep.mubr.f32.mxu0 0.0
        %1120 = vmatmul.mubr.f32.gmra.mrb[0].mxu0 %v1050
        %v1121 = vpop.f32.mrb[0].mxu0
        %v1122 = vadd.f32 0.0, %v1121
        %v1123 = vpop.f32.mrb[0].mxu0
        %1124 = vdwg.mxu0
        %v1126 = vsel %vm1048, %v1003, 0
        %v1129 = vsel %vm1048, %v1005, 0
        %1131 = vmatprep.subr.mxu0 0.0
        %1132 = vmatpush1.xpose.msra.mxu0 %v1129
        %1133 = vmatprep.subr.mxu0 0.0
        %1134 = vmatpush1.xpose.msra.mxu0 0.0
        %1135 = vmatprep.subr.mxu0 0.0
        %1136 = vmatpush1.xpose.msra.mxu0 0.0
        %1137 = vmatprep.subr.mxu0 0.0
        %1138 = vmatpush1.xpose.msra.mxu0 0.0
        %1139 = vmatprep.subr.mxu0 0.0
        %1140 = vmatpush1.xpose.msra.mxu0 0.0
        %1141 = vmatprep.subr.mxu0 0.0
        %1142 = vmatpush1.xpose.msra.mxu0 0.0
        %1143 = vmatprep.subr.mxu0 0.0
        %1144 = vmatpush1.xpose.msra.mxu0 0.0
        %1145 = vmatprep.subr.mxu0 0.0
        %1146 = vmatpush1.xpose.msra.mxu0 0.0
        %1147 = vmatprep.subr.mxu0 0.0
        %1148 = vmatpush1.xpose.msra.mxu0 0.0
        %1149 = vmatprep.subr.mxu0 0.0
        %1150 = vmatpush1.xpose.msra.mxu0 0.0
        %1151 = vmatprep.subr.mxu0 0.0
        %1152 = vmatpush1.xpose.msra.mxu0 0.0
        %1153 = vmatprep.subr.mxu0 0.0
        %1154 = vmatpush1.xpose.msra.mxu0 0.0
        %1155 = vmatprep.subr.mxu0 0.0
        %1156 = vmatpush1.xpose.msra.mxu0 0.0
        %1157 = vmatprep.subr.mxu0 0.0
        %1158 = vmatpush1.xpose.msra.mxu0 0.0
        %1159 = vmatprep.subr.mxu0 0.0
        %1160 = vmatpush1.xpose.msra.mxu0 0.0
        %1161 = vmatprep.subr.mxu0 0.0
        %1162 = vmatpush1.xpose.msra.mxu0 0.0
        %1163 = vmatprep.subr.mxu0 0.0
        %1164 = vmatpush1.xpose.msra.mxu0 0.0
        %1165 = vmatprep.subr.mxu0 0.0
        %1166 = vmatpush1.xpose.msra.mxu0 0.0
        %1167 = vmatprep.subr.mxu0 0.0
        %1168 = vmatpush1.xpose.msra.mxu0 0.0
        %1169 = vmatprep.subr.mxu0 0.0
        %1170 = vmatpush1.xpose.msra.mxu0 0.0
        %1171 = vmatprep.subr.mxu0 0.0
        %1172 = vmatpush1.xpose.msra.mxu0 0.0
        %1173 = vmatprep.subr.mxu0 0.0
        %1174 = vmatpush1.xpose.msra.mxu0 0.0
        %1175 = vmatprep.subr.mxu0 0.0
        %1176 = vmatpush1.xpose.msra.mxu0 0.0
        %1177 = vmatprep.subr.mxu0 0.0
        %1178 = vmatpush1.xpose.msra.mxu0 0.0
        %1179 = vmatprep.subr.mxu0 0.0
        %1180 = vmatpush1.xpose.msra.mxu0 0.0
        %1181 = vmatprep.subr.mxu0 0.0
        %1182 = vmatpush1.xpose.msra.mxu0 0.0
        %1183 = vmatprep.subr.mxu0 0.0
        %1184 = vmatpush1.xpose.msra.mxu0 0.0
        %1185 = vmatprep.subr.mxu0 0.0
        %1186 = vmatpush1.xpose.msra.mxu0 0.0
        %1187 = vmatprep.subr.mxu0 0.0
        %1188 = vmatpush1.xpose.msra.mxu0 0.0
        %1189 = vmatprep.subr.mxu0 0.0
        %1190 = vmatpush1.xpose.msra.mxu0 0.0
        %1191 = vmatprep.subr.mxu0 0.0
        %1192 = vmatpush1.xpose.msra.mxu0 0.0
        %1193 = vmatprep.subr.mxu0 0.0
        %1194 = vmatpush1.xpose.msra.mxu0 0.0
        %1195 = vmatprep.mubr.f32.mxu0 0.0
        %1196 = vmatmul.mubr.f32.gmra.mrb[0].mxu0 %v1126
        %v1197 = vpop.f32.mrb[0].mxu0
        %v1198 = vadd.f32 0.0, %v1197
        %v1199 = vpop.f32.mrb[0].mxu0
        %1200 = vdwg.mxu0
        %v1201 = vmul.f32 %v1122, 0.17677669
        %v1202 = vmul.f32 %v1198, 0.17677669
        %vm1203 = vcmask 64512
        %v1204 = vsel %vm1203, %v1201, -inf
        %1205 = vmax.xlane.f32.xlu0 %v1204
        %v1206 = vpop.xlane.xlu0 %1205
        %v1207 = vsel %vm1203, %v1202, -inf
        %1208 = vmax.xlane.f32.xlu0 %v1207
        %v1209 = vpop.xlane.xlu0 %1208
        %v1210 = vsub.f32 %v1201, %v1206
        %v1211 = vsub.f32 %v1202, %v1209
        %v1212 = vmul.f32 %v1210, 1.442695
        %v1213 = vpow.pop %v1212
        %v1214 = vmul.f32 %v1211, 1.442695
        %v1215 = vpow.pop %v1214
        %v1216 = vsel %vm1203, %v1213, 0.0
        %1217 = vadd.xlane.f32.xlu0 %v1216
        %v1218 = vpop.xlane.xlu0 %1217
        %v1219 = vsel %vm1203, %v1215, 0.0
        %1220 = vadd.xlane.f32.xlu0 %v1219
        %v1221 = vpop.xlane.xlu0 %1220
        %v1222 = vrcp.pop %v1218
        %v1223 = vmul.f32 %v1213, %v1222
        %v1224 = vrcp.pop %v1221
        %v1225 = vmul.f32 %v1215, %v1224
        %v1227 = vsel %vm1203, %v1223, 0
        %1229 = vmatprep.subr.mxu0 0.0
        %1230 = vmatpush1.msra.mxu0 %v1042
        %1231 = vmatprep.subr.mxu0 0.0
        %1232 = vmatpush1.msra.mxu0 0.0
        %1233 = vmatprep.subr.mxu0 0.0
        %1234 = vmatpush1.msra.mxu0 0.0
        %1235 = vmatprep.subr.mxu0 0.0
        %1236 = vmatpush1.msra.mxu0 0.0
        %1237 = vmatprep.subr.mxu0 0.0
        %1238 = vmatpush1.msra.mxu0 0.0
        %1239 = vmatprep.subr.mxu0 0.0
        %1240 = vmatpush1.msra.mxu0 0.0
        %1241 = vmatprep.subr.mxu0 0.0
        %1242 = vmatpush1.msra.mxu0 0.0
        %1243 = vmatprep.subr.mxu0 0.0
        %1244 = vmatpush1.msra.mxu0 0.0
        %1245 = vmatprep.subr.mxu0 0.0
        %1246 = vmatpush1.msra.mxu0 0.0
        %1247 = vmatprep.subr.mxu0 0.0
        %1248 = vmatpush1.msra.mxu0 0.0
        %1249 = vmatprep.subr.mxu0 0.0
        %1250 = vmatpush1.msra.mxu0 0.0
        %1251 = vmatprep.subr.mxu0 0.0
        %1252 = vmatpush1.msra.mxu0 0.0
        %1253 = vmatprep.subr.mxu0 0.0
        %1254 = vmatpush1.msra.mxu0 0.0
        %1255 = vmatprep.subr.mxu0 0.0
        %1256 = vmatpush1.msra.mxu0 0.0
        %1257 = vmatprep.subr.mxu0 0.0
        %1258 = vmatpush1.msra.mxu0 0.0
        %1259 = vmatprep.subr.mxu0 0.0
        %1260 = vmatpush1.msra.mxu0 0.0
        %1261 = vmatprep.subr.mxu0 0.0
        %1262 = vmatpush1.msra.mxu0 0.0
        %1263 = vmatprep.subr.mxu0 0.0
        %1264 = vmatpush1.msra.mxu0 0.0
        %1265 = vmatprep.subr.mxu0 0.0
        %1266 = vmatpush1.msra.mxu0 0.0
        %1267 = vmatprep.subr.mxu0 0.0
        %1268 = vmatpush1.msra.mxu0 0.0
        %1269 = vmatprep.subr.mxu0 0.0
        %1270 = vmatpush1.msra.mxu0 0.0
        %1271 = vmatprep.subr.mxu0 0.0
        %1272 = vmatpush1.msra.mxu0 0.0
        %1273 = vmatprep.subr.mxu0 0.0
        %1274 = vmatpush1.msra.mxu0 0.0
        %1275 = vmatprep.subr.mxu0 0.0
        %1276 = vmatpush1.msra.mxu0 0.0
        %1277 = vmatprep.subr.mxu0 0.0
        %1278 = vmatpush1.msra.mxu0 0.0
        %1279 = vmatprep.subr.mxu0 0.0
        %1280 = vmatpush1.msra.mxu0 0.0
        %1281 = vmatprep.subr.mxu0 0.0
        %1282 = vmatpush1.msra.mxu0 0.0
        %1283 = vmatprep.subr.mxu0 0.0
        %1284 = vmatpush1.msra.mxu0 0.0
        %1285 = vmatprep.subr.mxu0 0.0
        %1286 = vmatpush1.msra.mxu0 0.0
        %1287 = vmatprep.subr.mxu0 0.0
        %1288 = vmatpush1.msra.mxu0 0.0
        %1289 = vmatprep.subr.mxu0 0.0
        %1290 = vmatpush1.msra.mxu0 0.0
        %1291 = vmatprep.subr.mxu0 0.0
        %1292 = vmatpush1.msra.mxu0 0.0
        %1293 = vmatprep.mubr.f32.mxu0 0.0
        %1294 = vmatmul.mubr.f32.gmra.mrb[0].mxu0 %v1227
        %v1295 = vpop.f32.mrb[0].mxu0
        %v1296 = vadd.f32 0.0, %v1295
        %v1297 = vpop.f32.mrb[0].mxu0
        %1298 = vdwg.mxu0
        %v1300 = vsel %vm1203, %v1225, 0
        %1302 = vmatprep.subr.mxu0 0.0
        %1303 = vmatpush1.msra.mxu0 %v1045
        %1304 = vmatprep.subr.mxu0 0.0
        %1305 = vmatpush1.msra.mxu0 0.0
        %1306 = vmatprep.subr.mxu0 0.0
        %1307 = vmatpush1.msra.mxu0 0.0
        %1308 = vmatprep.subr.mxu0 0.0
        %1309 = vmatpush1.msra.mxu0 0.0
        %1310 = vmatprep.subr.mxu0 0.0
        %1311 = vmatpush1.msra.mxu0 0.0
        %1312 = vmatprep.subr.mxu0 0.0
        %1313 = vmatpush1.msra.mxu0 0.0
        %1314 = vmatprep.subr.mxu0 0.0
        %1315 = vmatpush1.msra.mxu0 0.0
        %1316 = vmatprep.subr.mxu0 0.0
        %1317 = vmatpush1.msra.mxu0 0.0
        %1318 = vmatprep.subr.mxu0 0.0
        %1319 = vmatpush1.msra.mxu0 0.0
        %1320 = vmatprep.subr.mxu0 0.0
        %1321 = vmatpush1.msra.mxu0 0.0
        %1322 = vmatprep.subr.mxu0 0.0
        %1323 = vmatpush1.msra.mxu0 0.0
        %1324 = vmatprep.subr.mxu0 0.0
        %1325 = vmatpush1.msra.mxu0 0.0
        %1326 = vmatprep.subr.mxu0 0.0
        %1327 = vmatpush1.msra.mxu0 0.0
        %1328 = vmatprep.subr.mxu0 0.0
        %1329 = vmatpush1.msra.mxu0 0.0
        %1330 = vmatprep.subr.mxu0 0.0
        %1331 = vmatpush1.msra.mxu0 0.0
        %1332 = vmatprep.subr.mxu0 0.0
        %1333 = vmatpush1.msra.mxu0 0.0
        %1334 = vmatprep.subr.mxu0 0.0
        %1335 = vmatpush1.msra.mxu0 0.0
        %1336 = vmatprep.subr.mxu0 0.0
        %1337 = vmatpush1.msra.mxu0 0.0
        %1338 = vmatprep.subr.mxu0 0.0
        %1339 = vmatpush1.msra.mxu0 0.0
        %1340 = vmatprep.subr.mxu0 0.0
        %1341 = vmatpush1.msra.mxu0 0.0
        %1342 = vmatprep.subr.mxu0 0.0
        %1343 = vmatpush1.msra.mxu0 0.0
        %1344 = vmatprep.subr.mxu0 0.0
        %1345 = vmatpush1.msra.mxu0 0.0
        %1346 = vmatprep.subr.mxu0 0.0
        %1347 = vmatpush1.msra.mxu0 0.0
        %1348 = vmatprep.subr.mxu0 0.0
        %1349 = vmatpush1.msra.mxu0 0.0
        %1350 = vmatprep.subr.mxu0 0.0
        %1351 = vmatpush1.msra.mxu0 0.0
        %1352 = vmatprep.subr.mxu0 0.0
        %1353 = vmatpush1.msra.mxu0 0.0
        %1354 = vmatprep.subr.mxu0 0.0
        %1355 = vmatpush1.msra.mxu0 0.0
        %1356 = vmatprep.subr.mxu0 0.0
        %1357 = vmatpush1.msra.mxu0 0.0
        %1358 = vmatprep.subr.mxu0 0.0
        %1359 = vmatpush1.msra.mxu0 0.0
        %1360 = vmatprep.subr.mxu0 0.0
        %1361 = vmatpush1.msra.mxu0 0.0
        %1362 = vmatprep.subr.mxu0 0.0
        %1363 = vmatpush1.msra.mxu0 0.0
        %1364 = vmatprep.subr.mxu0 0.0
        %1365 = vmatpush1.msra.mxu0 0.0
        %1366 = vmatprep.mubr.f32.mxu0 0.0
        %1367 = vmatmul.mubr.f32.gmra.mrb[0].mxu0 %v1300
        %v1368 = vpop.f32.mrb[0].mxu0
        %v1369 = vadd.f32 0.0, %v1368
        %v1370 = vpop.f32.mrb[0].mxu0
        %1371 = vdwg.mxu0
        %1372 = vrot.lane.b32.xlu0 %v999, 96
        %v1373 = vpop.permute.xlu0 %1372
        %1374 = vrot.lane.b32.xlu0 %v1001, 96
        %v1375 = vpop.permute.xlu0 %1374
        %v1376 = vsel %vm1048, %v1373, 0
        %v1378 = vsel %vm1048, %v1375, 0
        %1380 = vmatprep.subr.mxu0 0.0
        %1381 = vmatpush1.xpose.msra.mxu0 %v1378
        %1382 = vmatprep.subr.mxu0 0.0
        %1383 = vmatpush1.xpose.msra.mxu0 0.0
        %1384 = vmatprep.subr.mxu0 0.0
        %1385 = vmatpush1.xpose.msra.mxu0 0.0
        %1386 = vmatprep.subr.mxu0 0.0
        %1387 = vmatpush1.xpose.msra.mxu0 0.0
        %1388 = vmatprep.subr.mxu0 0.0
        %1389 = vmatpush1.xpose.msra.mxu0 0.0
        %1390 = vmatprep.subr.mxu0 0.0
        %1391 = vmatpush1.xpose.msra.mxu0 0.0
        %1392 = vmatprep.subr.mxu0 0.0
        %1393 = vmatpush1.xpose.msra.mxu0 0.0
        %1394 = vmatprep.subr.mxu0 0.0
        %1395 = vmatpush1.xpose.msra.mxu0 0.0
        %1396 = vmatprep.subr.mxu0 0.0
        %1397 = vmatpush1.xpose.msra.mxu0 0.0
        %1398 = vmatprep.subr.mxu0 0.0
        %1399 = vmatpush1.xpose.msra.mxu0 0.0
        %1400 = vmatprep.subr.mxu0 0.0
        %1401 = vmatpush1.xpose.msra.mxu0 0.0
        %1402 = vmatprep.subr.mxu0 0.0
        %1403 = vmatpush1.xpose.msra.mxu0 0.0
        %1404 = vmatprep.subr.mxu0 0.0
        %1405 = vmatpush1.xpose.msra.mxu0 0.0
        %1406 = vmatprep.subr.mxu0 0.0
        %1407 = vmatpush1.xpose.msra.mxu0 0.0
        %1408 = vmatprep.subr.mxu0 0.0
        %1409 = vmatpush1.xpose.msra.mxu0 0.0
        %1410 = vmatprep.subr.mxu0 0.0
        %1411 = vmatpush1.xpose.msra.mxu0 0.0
        %1412 = vmatprep.subr.mxu0 0.0
        %1413 = vmatpush1.xpose.msra.mxu0 0.0
        %1414 = vmatprep.subr.mxu0 0.0
        %1415 = vmatpush1.xpose.msra.mxu0 0.0
        %1416 = vmatprep.subr.mxu0 0.0
        %1417 = vmatpush1.xpose.msra.mxu0 0.0
        %1418 = vmatprep.subr.mxu0 0.0
        %1419 = vmatpush1.xpose.msra.mxu0 0.0
        %1420 = vmatprep.subr.mxu0 0.0
        %1421 = vmatpush1.xpose.msra.mxu0 0.0
        %1422 = vmatprep.subr.mxu0 0.0
        %1423 = vmatpush1.xpose.msra.mxu0 0.0
        %1424 = vmatprep.subr.mxu0 0.0
        %1425 = vmatpush1.xpose.msra.mxu0 0.0
        %1426 = vmatprep.subr.mxu0 0.0
        %1427 = vmatpush1.xpose.msra.mxu0 0.0
        %1428 = vmatprep.subr.mxu0 0.0
        %1429 = vmatpush1.xpose.msra.mxu0 0.0
        %1430 = vmatprep.subr.mxu0 0.0
        %1431 = vmatpush1.xpose.msra.mxu0 0.0
        %1432 = vmatprep.subr.mxu0 0.0
        %1433 = vmatpush1.xpose.msra.mxu0 0.0
        %1434 = vmatprep.subr.mxu0 0.0
        %1435 = vmatpush1.xpose.msra.mxu0 0.0
        %1436 = vmatprep.subr.mxu0 0.0
        %1437 = vmatpush1.xpose.msra.mxu0 0.0
        %1438 = vmatprep.subr.mxu0 0.0
        %1439 = vmatpush1.xpose.msra.mxu0 0.0
        %1440 = vmatprep.subr.mxu0 0.0
        %1441 = vmatpush1.xpose.msra.mxu0 0.0
        %1442 = vmatprep.subr.mxu0 0.0
        %1443 = vmatpush1.xpose.msra.mxu0 0.0
        %1444 = vmatprep.mubr.f32.mxu0 0.0
        %1445 = vmatmul.mubr.f32.gmra.mrb[0].mxu0 %v1376
        %v1446 = vpop.f32.mrb[0].mxu0
        %v1447 = vadd.f32 0.0, %v1446
        %v1448 = vpop.f32.mrb[0].mxu0
        %1449 = vdwg.mxu0
        %1450 = vrot.lane.b32.xlu0 %v1003, 96
        %v1451 = vpop.permute.xlu0 %1450
        %1452 = vrot.lane.b32.xlu0 %v1005, 96
        %v1453 = vpop.permute.xlu0 %1452
        %v1454 = vsel %vm1048, %v1451, 0
        %v1456 = vsel %vm1048, %v1453, 0
        %1458 = vmatprep.subr.mxu0 0.0
        %1459 = vmatpush1.xpose.msra.mxu0 %v1456
        %1460 = vmatprep.subr.mxu0 0.0
        %1461 = vmatpush1.xpose.msra.mxu0 0.0
        %1462 = vmatprep.subr.mxu0 0.0
        %1463 = vmatpush1.xpose.msra.mxu0 0.0
        %1464 = vmatprep.subr.mxu0 0.0
        %1465 = vmatpush1.xpose.msra.mxu0 0.0
        %1466 = vmatprep.subr.mxu0 0.0
        %1467 = vmatpush1.xpose.msra.mxu0 0.0
        %1468 = vmatprep.subr.mxu0 0.0
        %1469 = vmatpush1.xpose.msra.mxu0 0.0
        %1470 = vmatprep.subr.mxu0 0.0
        %1471 = vmatpush1.xpose.msra.mxu0 0.0
        %1472 = vmatprep.subr.mxu0 0.0
        %1473 = vmatpush1.xpose.msra.mxu0 0.0
        %1474 = vmatprep.subr.mxu0 0.0
        %1475 = vmatpush1.xpose.msra.mxu0 0.0
        %1476 = vmatprep.subr.mxu0 0.0
        %1477 = vmatpush1.xpose.msra.mxu0 0.0
        %1478 = vmatprep.subr.mxu0 0.0
        %1479 = vmatpush1.xpose.msra.mxu0 0.0
        %1480 = vmatprep.subr.mxu0 0.0
        %1481 = vmatpush1.xpose.msra.mxu0 0.0
        %1482 = vmatprep.subr.mxu0 0.0
        %1483 = vmatpush1.xpose.msra.mxu0 0.0
        %1484 = vmatprep.subr.mxu0 0.0
        %1485 = vmatpush1.xpose.msra.mxu0 0.0
        %1486 = vmatprep.subr.mxu0 0.0
        %1487 = vmatpush1.xpose.msra.mxu0 0.0
        %1488 = vmatprep.subr.mxu0 0.0
        %1489 = vmatpush1.xpose.msra.mxu0 0.0
        %1490 = vmatprep.subr.mxu0 0.0
        %1491 = vmatpush1.xpose.msra.mxu0 0.0
        %1492 = vmatprep.subr.mxu0 0.0
        %1493 = vmatpush1.xpose.msra.mxu0 0.0
        %1494 = vmatprep.subr.mxu0 0.0
        %1495 = vmatpush1.xpose.msra.mxu0 0.0
        %1496 = vmatprep.subr.mxu0 0.0
        %1497 = vmatpush1.xpose.msra.mxu0 0.0
        %1498 = vmatprep.subr.mxu0 0.0
        %1499 = vmatpush1.xpose.msra.mxu0 0.0
        %1500 = vmatprep.subr.mxu0 0.0
        %1501 = vmatpush1.xpose.msra.mxu0 0.0
        %1502 = vmatprep.subr.mxu0 0.0
        %1503 = vmatpush1.xpose.msra.mxu0 0.0
        %1504 = vmatprep.subr.mxu0 0.0
        %1505 = vmatpush1.xpose.msra.mxu0 0.0
        %1506 = vmatprep.subr.mxu0 0.0
        %1507 = vmatpush1.xpose.msra.mxu0 0.0
        %1508 = vmatprep.subr.mxu0 0.0
        %1509 = vmatpush1.xpose.msra.mxu0 0.0
        %1510 = vmatprep.subr.mxu0 0.0
        %1511 = vmatpush1.xpose.msra.mxu0 0.0
        %1512 = vmatprep.subr.mxu0 0.0
        %1513 = vmatpush1.xpose.msra.mxu0 0.0
        %1514 = vmatprep.subr.mxu0 0.0
        %1515 = vmatpush1.xpose.msra.mxu0 0.0
        %1516 = vmatprep.subr.mxu0 0.0
        %1517 = vmatpush1.xpose.msra.mxu0 0.0
        %1518 = vmatprep.subr.mxu0 0.0
        %1519 = vmatpush1.xpose.msra.mxu0 0.0
        %1520 = vmatprep.subr.mxu0 0.0
        %1521 = vmatpush1.xpose.msra.mxu0 0.0
        %1522 = vmatprep.mubr.f32.mxu0 0.0
        %1523 = vmatmul.mubr.f32.gmra.mrb[0].mxu0 %v1454
        %v1524 = vpop.f32.mrb[0].mxu0
        %v1525 = vadd.f32 0.0, %v1524
        %v1526 = vpop.f32.mrb[0].mxu0
        %1527 = vdwg.mxu0
        %v1528 = vmul.f32 %v1447, 0.17677669
        %v1529 = vmul.f32 %v1525, 0.17677669
        %v1530 = vsel %vm1203, %v1528, -inf
        %1531 = vmax.xlane.f32.xlu0 %v1530
        %v1532 = vpop.xlane.xlu0 %1531
        %v1533 = vsel %vm1203, %v1529, -inf
        %1534 = vmax.xlane.f32.xlu0 %v1533
        %v1535 = vpop.xlane.xlu0 %1534
        %v1536 = vsub.f32 %v1528, %v1532
        %v1537 = vsub.f32 %v1529, %v1535
        %v1538 = vmul.f32 %v1536, 1.442695
        %v1539 = vpow.pop %v1538
        %v1540 = vmul.f32 %v1537, 1.442695
        %v1541 = vpow.pop %v1540
        %v1542 = vsel %vm1203, %v1539, 0.0
        %1543 = vadd.xlane.f32.xlu0 %v1542
        %v1544 = vpop.xlane.xlu0 %1543
        %v1545 = vsel %vm1203, %v1541, 0.0
        %1546 = vadd.xlane.f32.xlu0 %v1545
        %v1547 = vpop.xlane.xlu0 %1546
        %v1548 = vrcp.pop %v1544
        %v1549 = vmul.f32 %v1539, %v1548
        %v1550 = vrcp.pop %v1547
        %v1551 = vmul.f32 %v1541, %v1550
        %1553 = vrot.lane.b32.xlu0 %v1042, 96
        %v1554 = vpop.permute.xlu0 %1553
        %v1557 = vsel %vm1203, %v1549, 0
        %1559 = vmatprep.subr.mxu0 0.0
        %1560 = vmatpush1.msra.mxu0 %v1554
        %1561 = vmatprep.subr.mxu0 0.0
        %1562 = vmatpush1.msra.mxu0 0.0
        %1563 = vmatprep.subr.mxu0 0.0
        %1564 = vmatpush1.msra.mxu0 0.0
        %1565 = vmatprep.subr.mxu0 0.0
        %1566 = vmatpush1.msra.mxu0 0.0
        %1567 = vmatprep.subr.mxu0 0.0
        %1568 = vmatpush1.msra.mxu0 0.0
        %1569 = vmatprep.subr.mxu0 0.0
        %1570 = vmatpush1.msra.mxu0 0.0
        %1571 = vmatprep.subr.mxu0 0.0
        %1572 = vmatpush1.msra.mxu0 0.0
        %1573 = vmatprep.subr.mxu0 0.0
        %1574 = vmatpush1.msra.mxu0 0.0
        %1575 = vmatprep.subr.mxu0 0.0
        %1576 = vmatpush1.msra.mxu0 0.0
        %1577 = vmatprep.subr.mxu0 0.0
        %1578 = vmatpush1.msra.mxu0 0.0
        %1579 = vmatprep.subr.mxu0 0.0
        %1580 = vmatpush1.msra.mxu0 0.0
        %1581 = vmatprep.subr.mxu0 0.0
        %1582 = vmatpush1.msra.mxu0 0.0
        %1583 = vmatprep.subr.mxu0 0.0
        %1584 = vmatpush1.msra.mxu0 0.0
        %1585 = vmatprep.subr.mxu0 0.0
        %1586 = vmatpush1.msra.mxu0 0.0
        %1587 = vmatprep.subr.mxu0 0.0
        %1588 = vmatpush1.msra.mxu0 0.0
        %1589 = vmatprep.subr.mxu0 0.0
        %1590 = vmatpush1.msra.mxu0 0.0
        %1591 = vmatprep.subr.mxu0 0.0
        %1592 = vmatpush1.msra.mxu0 0.0
        %1593 = vmatprep.subr.mxu0 0.0
        %1594 = vmatpush1.msra.mxu0 0.0
        %1595 = vmatprep.subr.mxu0 0.0
        %1596 = vmatpush1.msra.mxu0 0.0
        %1597 = vmatprep.subr.mxu0 0.0
        %1598 = vmatpush1.msra.mxu0 0.0
        %1599 = vmatprep.subr.mxu0 0.0
        %1600 = vmatpush1.msra.mxu0 0.0
        %1601 = vmatprep.subr.mxu0 0.0
        %1602 = vmatpush1.msra.mxu0 0.0
        %1603 = vmatprep.subr.mxu0 0.0
        %1604 = vmatpush1.msra.mxu0 0.0
        %1605 = vmatprep.subr.mxu0 0.0
        %1606 = vmatpush1.msra.mxu0 0.0
        %1607 = vmatprep.subr.mxu0 0.0
        %1608 = vmatpush1.msra.mxu0 0.0
        %1609 = vmatprep.subr.mxu0 0.0
        %1610 = vmatpush1.msra.mxu0 0.0
        %1611 = vmatprep.subr.mxu0 0.0
        %1612 = vmatpush1.msra.mxu0 0.0
        %1613 = vmatprep.subr.mxu0 0.0
        %1614 = vmatpush1.msra.mxu0 0.0
        %1615 = vmatprep.subr.mxu0 0.0
        %1616 = vmatpush1.msra.mxu0 0.0
        %1617 = vmatprep.subr.mxu0 0.0
        %1618 = vmatpush1.msra.mxu0 0.0
        %1619 = vmatprep.subr.mxu0 0.0
        %1620 = vmatpush1.msra.mxu0 0.0
        %1621 = vmatprep.subr.mxu0 0.0
        %1622 = vmatpush1.msra.mxu0 0.0
        %1623 = vmatprep.mubr.f32.mxu0 0.0
        %1624 = vmatmul.mubr.f32.gmra.mrb[0].mxu0 %v1557
        %v1625 = vpop.f32.mrb[0].mxu0
        %v1626 = vadd.f32 0.0, %v1625
        %v1627 = vpop.f32.mrb[0].mxu0
        %1628 = vdwg.mxu0
        %1630 = vrot.lane.b32.xlu0 %v1045, 96
        %v1631 = vpop.permute.xlu0 %1630
        %v1634 = vsel %vm1203, %v1551, 0
        %1636 = vmatprep.subr.mxu0 0.0
        %1637 = vmatpush1.msra.mxu0 %v1631
        %1638 = vmatprep.subr.mxu0 0.0
        %1639 = vmatpush1.msra.mxu0 0.0
        %1640 = vmatprep.subr.mxu0 0.0
        %1641 = vmatpush1.msra.mxu0 0.0
        %1642 = vmatprep.subr.mxu0 0.0
        %1643 = vmatpush1.msra.mxu0 0.0
        %1644 = vmatprep.subr.mxu0 0.0
        %1645 = vmatpush1.msra.mxu0 0.0
        %1646 = vmatprep.subr.mxu0 0.0
        %1647 = vmatpush1.msra.mxu0 0.0
        %1648 = vmatprep.subr.mxu0 0.0
        %1649 = vmatpush1.msra.mxu0 0.0
        %1650 = vmatprep.subr.mxu0 0.0
        %1651 = vmatpush1.msra.mxu0 0.0
        %1652 = vmatprep.subr.mxu0 0.0
        %1653 = vmatpush1.msra.mxu0 0.0
        %1654 = vmatprep.subr.mxu0 0.0
        %1655 = vmatpush1.msra.mxu0 0.0
        %1656 = vmatprep.subr.mxu0 0.0
        %1657 = vmatpush1.msra.mxu0 0.0
        %1658 = vmatprep.subr.mxu0 0.0
        %1659 = vmatpush1.msra.mxu0 0.0
        %1660 = vmatprep.subr.mxu0 0.0
        %1661 = vmatpush1.msra.mxu0 0.0
        %1662 = vmatprep.subr.mxu0 0.0
        %1663 = vmatpush1.msra.mxu0 0.0
        %1664 = vmatprep.subr.mxu0 0.0
        %1665 = vmatpush1.msra.mxu0 0.0
        %1666 = vmatprep.subr.mxu0 0.0
        %1667 = vmatpush1.msra.mxu0 0.0
        %1668 = vmatprep.subr.mxu0 0.0
        %1669 = vmatpush1.msra.mxu0 0.0
        %1670 = vmatprep.subr.mxu0 0.0
        %1671 = vmatpush1.msra.mxu0 0.0
        %1672 = vmatprep.subr.mxu0 0.0
        %1673 = vmatpush1.msra.mxu0 0.0
        %1674 = vmatprep.subr.mxu0 0.0
        %1675 = vmatpush1.msra.mxu0 0.0
        %1676 = vmatprep.subr.mxu0 0.0
        %1677 = vmatpush1.msra.mxu0 0.0
        %1678 = vmatprep.subr.mxu0 0.0
        %1679 = vmatpush1.msra.mxu0 0.0
        %1680 = vmatprep.subr.mxu0 0.0
        %1681 = vmatpush1.msra.mxu0 0.0
        %1682 = vmatprep.subr.mxu0 0.0
        %1683 = vmatpush1.msra.mxu0 0.0
        %1684 = vmatprep.subr.mxu0 0.0
        %1685 = vmatpush1.msra.mxu0 0.0
        %1686 = vmatprep.subr.mxu0 0.0
        %1687 = vmatpush1.msra.mxu0 0.0
        %1688 = vmatprep.subr.mxu0 0.0
        %1689 = vmatpush1.msra.mxu0 0.0
        %1690 = vmatprep.subr.mxu0 0.0
        %1691 = vmatpush1.msra.mxu0 0.0
        %1692 = vmatprep.subr.mxu0 0.0
        %1693 = vmatpush1.msra.mxu0 0.0
        %1694 = vmatprep.subr.mxu0 0.0
        %1695 = vmatpush1.msra.mxu0 0.0
        %1696 = vmatprep.subr.mxu0 0.0
        %1697 = vmatpush1.msra.mxu0 0.0
        %1698 = vmatprep.subr.mxu0 0.0
        %1699 = vmatpush1.msra.mxu0 0.0
        %1700 = vmatprep.mubr.f32.mxu0 0.0
        %1701 = vmatmul.mubr.f32.gmra.mrb[0].mxu0 %v1634
        %v1702 = vpop.f32.mrb[0].mxu0
        %v1703 = vadd.f32 0.0, %v1702
        %v1704 = vpop.f32.mrb[0].mxu0
        %1705 = vdwg.mxu0
        %1706 = vrot.lane.b32.xlu0 %v999, 64
        %v1707 = vpop.permute.xlu0 %1706
        %1708 = vrot.lane.b32.xlu0 %v1001, 64
        %v1709 = vpop.permute.xlu0 %1708
        %v1710 = vsel %vm1048, %v1707, 0
        %v1712 = vsel %vm1048, %v1709, 0
        %1714 = vmatprep.subr.mxu0 0.0
        %1715 = vmatpush1.xpose.msra.mxu0 %v1712
        %1716 = vmatprep.subr.mxu0 0.0
        %1717 = vmatpush1.xpose.msra.mxu0 0.0
        %1718 = vmatprep.subr.mxu0 0.0
        %1719 = vmatpush1.xpose.msra.mxu0 0.0
        %1720 = vmatprep.subr.mxu0 0.0
        %1721 = vmatpush1.xpose.msra.mxu0 0.0
        %1722 = vmatprep.subr.mxu0 0.0
        %1723 = vmatpush1.xpose.msra.mxu0 0.0
        %1724 = vmatprep.subr.mxu0 0.0
        %1725 = vmatpush1.xpose.msra.mxu0 0.0
        %1726 = vmatprep.subr.mxu0 0.0
        %1727 = vmatpush1.xpose.msra.mxu0 0.0
        %1728 = vmatprep.subr.mxu0 0.0
        %1729 = vmatpush1.xpose.msra.mxu0 0.0
        %1730 = vmatprep.subr.mxu0 0.0
        %1731 = vmatpush1.xpose.msra.mxu0 0.0
        %1732 = vmatprep.subr.mxu0 0.0
        %1733 = vmatpush1.xpose.msra.mxu0 0.0
        %1734 = vmatprep.subr.mxu0 0.0
        %1735 = vmatpush1.xpose.msra.mxu0 0.0
        %1736 = vmatprep.subr.mxu0 0.0
        %1737 = vmatpush1.xpose.msra.mxu0 0.0
        %1738 = vmatprep.subr.mxu0 0.0
        %1739 = vmatpush1.xpose.msra.mxu0 0.0
        %1740 = vmatprep.subr.mxu0 0.0
        %1741 = vmatpush1.xpose.msra.mxu0 0.0
        %1742 = vmatprep.subr.mxu0 0.0
        %1743 = vmatpush1.xpose.msra.mxu0 0.0
        %1744 = vmatprep.subr.mxu0 0.0
        %1745 = vmatpush1.xpose.msra.mxu0 0.0
        %1746 = vmatprep.subr.mxu0 0.0
        %1747 = vmatpush1.xpose.msra.mxu0 0.0
        %1748 = vmatprep.subr.mxu0 0.0
        %1749 = vmatpush1.xpose.msra.mxu0 0.0
        %1750 = vmatprep.subr.mxu0 0.0
        %1751 = vmatpush1.xpose.msra.mxu0 0.0
        %1752 = vmatprep.subr.mxu0 0.0
        %1753 = vmatpush1.xpose.msra.mxu0 0.0
        %1754 = vmatprep.subr.mxu0 0.0
        %1755 = vmatpush1.xpose.msra.mxu0 0.0
        %1756 = vmatprep.subr.mxu0 0.0
        %1757 = vmatpush1.xpose.msra.mxu0 0.0
        %1758 = vmatprep.subr.mxu0 0.0
        %1759 = vmatpush1.xpose.msra.mxu0 0.0
        %1760 = vmatprep.subr.mxu0 0.0
        %1761 = vmatpush1.xpose.msra.mxu0 0.0
        %1762 = vmatprep.subr.mxu0 0.0
        %1763 = vmatpush1.xpose.msra.mxu0 0.0
        %1764 = vmatprep.subr.mxu0 0.0
        %1765 = vmatpush1.xpose.msra.mxu0 0.0
        %1766 = vmatprep.subr.mxu0 0.0
        %1767 = vmatpush1.xpose.msra.mxu0 0.0
        %1768 = vmatprep.subr.mxu0 0.0
        %1769 = vmatpush1.xpose.msra.mxu0 0.0
        %1770 = vmatprep.subr.mxu0 0.0
        %1771 = vmatpush1.xpose.msra.mxu0 0.0
        %1772 = vmatprep.subr.mxu0 0.0
        %1773 = vmatpush1.xpose.msra.mxu0 0.0
        %1774 = vmatprep.subr.mxu0 0.0
        %1775 = vmatpush1.xpose.msra.mxu0 0.0
        %1776 = vmatprep.subr.mxu0 0.0
        %1777 = vmatpush1.xpose.msra.mxu0 0.0
        %1778 = vmatprep.mubr.f32.mxu0 0.0
        %1779 = vmatmul.mubr.f32.gmra.mrb[0].mxu0 %v1710
        %v1780 = vpop.f32.mrb[0].mxu0
        %v1781 = vadd.f32 0.0, %v1780
        %v1782 = vpop.f32.mrb[0].mxu0
        %1783 = vdwg.mxu0
        %1784 = vrot.lane.b32.xlu0 %v1003, 64
        %v1785 = vpop.permute.xlu0 %1784
        %1786 = vrot.lane.b32.xlu0 %v1005, 64
        %v1787 = vpop.permute.xlu0 %1786
        %v1788 = vsel %vm1048, %v1785, 0
        %v1790 = vsel %vm1048, %v1787, 0
        %1792 = vmatprep.subr.mxu0 0.0
        %1793 = vmatpush1.xpose.msra.mxu0 %v1790
        %1794 = vmatprep.subr.mxu0 0.0
        %1795 = vmatpush1.xpose.msra.mxu0 0.0
        %1796 = vmatprep.subr.mxu0 0.0
        %1797 = vmatpush1.xpose.msra.mxu0 0.0
        %1798 = vmatprep.subr.mxu0 0.0
        %1799 = vmatpush1.xpose.msra.mxu0 0.0
        %1800 = vmatprep.subr.mxu0 0.0
        %1801 = vmatpush1.xpose.msra.mxu0 0.0
        %1802 = vmatprep.subr.mxu0 0.0
        %1803 = vmatpush1.xpose.msra.mxu0 0.0
        %1804 = vmatprep.subr.mxu0 0.0
        %1805 = vmatpush1.xpose.msra.mxu0 0.0
        %1806 = vmatprep.subr.mxu0 0.0
        %1807 = vmatpush1.xpose.msra.mxu0 0.0
        %1808 = vmatprep.subr.mxu0 0.0
        %1809 = vmatpush1.xpose.msra.mxu0 0.0
        %1810 = vmatprep.subr.mxu0 0.0
        %1811 = vmatpush1.xpose.msra.mxu0 0.0
        %1812 = vmatprep.subr.mxu0 0.0
        %1813 = vmatpush1.xpose.msra.mxu0 0.0
        %1814 = vmatprep.subr.mxu0 0.0
        %1815 = vmatpush1.xpose.msra.mxu0 0.0
        %1816 = vmatprep.subr.mxu0 0.0
        %1817 = vmatpush1.xpose.msra.mxu0 0.0
        %1818 = vmatprep.subr.mxu0 0.0
        %1819 = vmatpush1.xpose.msra.mxu0 0.0
        %1820 = vmatprep.subr.mxu0 0.0
        %1821 = vmatpush1.xpose.msra.mxu0 0.0
        %1822 = vmatprep.subr.mxu0 0.0
        %1823 = vmatpush1.xpose.msra.mxu0 0.0
        %1824 = vmatprep.subr.mxu0 0.0
        %1825 = vmatpush1.xpose.msra.mxu0 0.0
        %1826 = vmatprep.subr.mxu0 0.0
        %1827 = vmatpush1.xpose.msra.mxu0 0.0
        %1828 = vmatprep.subr.mxu0 0.0
        %1829 = vmatpush1.xpose.msra.mxu0 0.0
        %1830 = vmatprep.subr.mxu0 0.0
        %1831 = vmatpush1.xpose.msra.mxu0 0.0
        %1832 = vmatprep.subr.mxu0 0.0
        %1833 = vmatpush1.xpose.msra.mxu0 0.0
        %1834 = vmatprep.subr.mxu0 0.0
        %1835 = vmatpush1.xpose.msra.mxu0 0.0
        %1836 = vmatprep.subr.mxu0 0.0
        %1837 = vmatpush1.xpose.msra.mxu0 0.0
        %1838 = vmatprep.subr.mxu0 0.0
        %1839 = vmatpush1.xpose.msra.mxu0 0.0
        %1840 = vmatprep.subr.mxu0 0.0
        %1841 = vmatpush1.xpose.msra.mxu0 0.0
        %1842 = vmatprep.subr.mxu0 0.0
        %1843 = vmatpush1.xpose.msra.mxu0 0.0
        %1844 = vmatprep.subr.mxu0 0.0
        %1845 = vmatpush1.xpose.msra.mxu0 0.0
        %1846 = vmatprep.subr.mxu0 0.0
        %1847 = vmatpush1.xpose.msra.mxu0 0.0
        %1848 = vmatprep.subr.mxu0 0.0
        %1849 = vmatpush1.xpose.msra.mxu0 0.0
        %1850 = vmatprep.subr.mxu0 0.0
        %1851 = vmatpush1.xpose.msra.mxu0 0.0
        %1852 = vmatprep.subr.mxu0 0.0
        %1853 = vmatpush1.xpose.msra.mxu0 0.0
        %1854 = vmatprep.subr.mxu0 0.0
        %1855 = vmatpush1.xpose.msra.mxu0 0.0
        %1856 = vmatprep.mubr.f32.mxu0 0.0
        %1857 = vmatmul.mubr.f32.gmra.mrb[0].mxu0 %v1788
        %v1858 = vpop.f32.mrb[0].mxu0
        %v1859 = vadd.f32 0.0, %v1858
        %v1860 = vpop.f32.mrb[0].mxu0
        %1861 = vdwg.mxu0
        %v1862 = vmul.f32 %v1781, 0.17677669
        %v1863 = vmul.f32 %v1859, 0.17677669
        %v1864 = vsel %vm1203, %v1862, -inf
        %1865 = vmax.xlane.f32.xlu0 %v1864
        %v1866 = vpop.xlane.xlu0 %1865
        %v1867 = vsel %vm1203, %v1863, -inf
        %1868 = vmax.xlane.f32.xlu0 %v1867
        %v1869 = vpop.xlane.xlu0 %1868
        %v1870 = vsub.f32 %v1862, %v1866
        %v1871 = vsub.f32 %v1863, %v1869
        %v1872 = vmul.f32 %v1870, 1.442695
        %v1873 = vpow.pop %v1872
        %v1874 = vmul.f32 %v1871, 1.442695
        %v1875 = vpow.pop %v1874
        %v1876 = vsel %vm1203, %v1873, 0.0
        %1877 = vadd.xlane.f32.xlu0 %v1876
        %v1878 = vpop.xlane.xlu0 %1877
        %v1879 = vsel %vm1203, %v1875, 0.0
        %1880 = vadd.xlane.f32.xlu0 %v1879
        %v1881 = vpop.xlane.xlu0 %1880
        %v1882 = vrcp.pop %v1878
        %v1883 = vmul.f32 %v1873, %v1882
        %v1884 = vrcp.pop %v1881
        %v1885 = vmul.f32 %v1875, %v1884
        %1886 = vrot.lane.b32.xlu0 %v1042, 64
        %v1887 = vpop.permute.xlu0 %1886
        %v1890 = vsel %vm1203, %v1883, 0
        %1892 = vmatprep.subr.mxu0 0.0
        %1893 = vmatpush1.msra.mxu0 %v1887
        %1894 = vmatprep.subr.mxu0 0.0
        %1895 = vmatpush1.msra.mxu0 0.0
        %1896 = vmatprep.subr.mxu0 0.0
        %1897 = vmatpush1.msra.mxu0 0.0
        %1898 = vmatprep.subr.mxu0 0.0
        %1899 = vmatpush1.msra.mxu0 0.0
        %1900 = vmatprep.subr.mxu0 0.0
        %1901 = vmatpush1.msra.mxu0 0.0
        %1902 = vmatprep.subr.mxu0 0.0
        %1903 = vmatpush1.msra.mxu0 0.0
        %1904 = vmatprep.subr.mxu0 0.0
        %1905 = vmatpush1.msra.mxu0 0.0
        %1906 = vmatprep.subr.mxu0 0.0
        %1907 = vmatpush1.msra.mxu0 0.0
        %1908 = vmatprep.subr.mxu0 0.0
        %1909 = vmatpush1.msra.mxu0 0.0
        %1910 = vmatprep.subr.mxu0 0.0
        %1911 = vmatpush1.msra.mxu0 0.0
        %1912 = vmatprep.subr.mxu0 0.0
        %1913 = vmatpush1.msra.mxu0 0.0
        %1914 = vmatprep.subr.mxu0 0.0
        %1915 = vmatpush1.msra.mxu0 0.0
        %1916 = vmatprep.subr.mxu0 0.0
        %1917 = vmatpush1.msra.mxu0 0.0
        %1918 = vmatprep.subr.mxu0 0.0
        %1919 = vmatpush1.msra.mxu0 0.0
        %1920 = vmatprep.subr.mxu0 0.0
        %1921 = vmatpush1.msra.mxu0 0.0
        %1922 = vmatprep.subr.mxu0 0.0
        %1923 = vmatpush1.msra.mxu0 0.0
        %1924 = vmatprep.subr.mxu0 0.0
        %1925 = vmatpush1.msra.mxu0 0.0
        %1926 = vmatprep.subr.mxu0 0.0
        %1927 = vmatpush1.msra.mxu0 0.0
        %1928 = vmatprep.subr.mxu0 0.0
        %1929 = vmatpush1.msra.mxu0 0.0
        %1930 = vmatprep.subr.mxu0 0.0
        %1931 = vmatpush1.msra.mxu0 0.0
        %1932 = vmatprep.subr.mxu0 0.0
        %1933 = vmatpush1.msra.mxu0 0.0
        %1934 = vmatprep.subr.mxu0 0.0
        %1935 = vmatpush1.msra.mxu0 0.0
        %1936 = vmatprep.subr.mxu0 0.0
        %1937 = vmatpush1.msra.mxu0 0.0
        %1938 = vmatprep.subr.mxu0 0.0
        %1939 = vmatpush1.msra.mxu0 0.0
        %1940 = vmatprep.subr.mxu0 0.0
        %1941 = vmatpush1.msra.mxu0 0.0
        %1942 = vmatprep.subr.mxu0 0.0
        %1943 = vmatpush1.msra.mxu0 0.0
        %1944 = vmatprep.subr.mxu0 0.0
        %1945 = vmatpush1.msra.mxu0 0.0
        %1946 = vmatprep.subr.mxu0 0.0
        %1947 = vmatpush1.msra.mxu0 0.0
        %1948 = vmatprep.subr.mxu0 0.0
        %1949 = vmatpush1.msra.mxu0 0.0
        %1950 = vmatprep.subr.mxu0 0.0
        %1951 = vmatpush1.msra.mxu0 0.0
        %1952 = vmatprep.subr.mxu0 0.0
        %1953 = vmatpush1.msra.mxu0 0.0
        %1954 = vmatprep.subr.mxu0 0.0
        %1955 = vmatpush1.msra.mxu0 0.0
        %1956 = vmatprep.mubr.f32.mxu0 0.0
        %1957 = vmatmul.mubr.f32.gmra.mrb[0].mxu0 %v1890
        %v1958 = vpop.f32.mrb[0].mxu0
        %v1959 = vadd.f32 0.0, %v1958
        %v1960 = vpop.f32.mrb[0].mxu0
        %1961 = vdwg.mxu0
        %1962 = vrot.lane.b32.xlu0 %v1045, 64
        %v1963 = vpop.permute.xlu0 %1962
        %v1966 = vsel %vm1203, %v1885, 0
        %1968 = vmatprep.subr.mxu0 0.0
        %1969 = vmatpush1.msra.mxu0 %v1963
        %1970 = vmatprep.subr.mxu0 0.0
        %1971 = vmatpush1.msra.mxu0 0.0
        %1972 = vmatprep.subr.mxu0 0.0
        %1973 = vmatpush1.msra.mxu0 0.0
        %1974 = vmatprep.subr.mxu0 0.0
        %1975 = vmatpush1.msra.mxu0 0.0
        %1976 = vmatprep.subr.mxu0 0.0
        %1977 = vmatpush1.msra.mxu0 0.0
        %1978 = vmatprep.subr.mxu0 0.0
        %1979 = vmatpush1.msra.mxu0 0.0
        %1980 = vmatprep.subr.mxu0 0.0
        %1981 = vmatpush1.msra.mxu0 0.0
        %1982 = vmatprep.subr.mxu0 0.0
        %1983 = vmatpush1.msra.mxu0 0.0
        %1984 = vmatprep.subr.mxu0 0.0
        %1985 = vmatpush1.msra.mxu0 0.0
        %1986 = vmatprep.subr.mxu0 0.0
        %1987 = vmatpush1.msra.mxu0 0.0
        %1988 = vmatprep.subr.mxu0 0.0
        %1989 = vmatpush1.msra.mxu0 0.0
        %1990 = vmatprep.subr.mxu0 0.0
        %1991 = vmatpush1.msra.mxu0 0.0
        %1992 = vmatprep.subr.mxu0 0.0
        %1993 = vmatpush1.msra.mxu0 0.0
        %1994 = vmatprep.subr.mxu0 0.0
        %1995 = vmatpush1.msra.mxu0 0.0
        %1996 = vmatprep.subr.mxu0 0.0
        %1997 = vmatpush1.msra.mxu0 0.0
        %1998 = vmatprep.subr.mxu0 0.0
        %1999 = vmatpush1.msra.mxu0 0.0
        %2000 = vmatprep.subr.mxu0 0.0
        %2001 = vmatpush1.msra.mxu0 0.0
        %2002 = vmatprep.subr.mxu0 0.0
        %2003 = vmatpush1.msra.mxu0 0.0
        %2004 = vmatprep.subr.mxu0 0.0
        %2005 = vmatpush1.msra.mxu0 0.0
        %2006 = vmatprep.subr.mxu0 0.0
        %2007 = vmatpush1.msra.mxu0 0.0
        %2008 = vmatprep.subr.mxu0 0.0
        %2009 = vmatpush1.msra.mxu0 0.0
        %2010 = vmatprep.subr.mxu0 0.0
        %2011 = vmatpush1.msra.mxu0 0.0
        %2012 = vmatprep.subr.mxu0 0.0
        %2013 = vmatpush1.msra.mxu0 0.0
        %2014 = vmatprep.subr.mxu0 0.0
        %2015 = vmatpush1.msra.mxu0 0.0
        %2016 = vmatprep.subr.mxu0 0.0
        %2017 = vmatpush1.msra.mxu0 0.0
        %2018 = vmatprep.subr.mxu0 0.0
        %2019 = vmatpush1.msra.mxu0 0.0
        %2020 = vmatprep.subr.mxu0 0.0
        %2021 = vmatpush1.msra.mxu0 0.0
        %2022 = vmatprep.subr.mxu0 0.0
        %2023 = vmatpush1.msra.mxu0 0.0
        %2024 = vmatprep.subr.mxu0 0.0
        %2025 = vmatpush1.msra.mxu0 0.0
        %2026 = vmatprep.subr.mxu0 0.0
        %2027 = vmatpush1.msra.mxu0 0.0
        %2028 = vmatprep.subr.mxu0 0.0
        %2029 = vmatpush1.msra.mxu0 0.0
        %2030 = vmatprep.subr.mxu0 0.0
        %2031 = vmatpush1.msra.mxu0 0.0
        %2032 = vmatprep.mubr.f32.mxu0 0.0
        %2033 = vmatmul.mubr.f32.gmra.mrb[0].mxu0 %v1966
        %v2034 = vpop.f32.mrb[0].mxu0
        %v2035 = vadd.f32 0.0, %v2034
        %v2036 = vpop.f32.mrb[0].mxu0
        %2037 = vdwg.mxu0
        %2038 = vrot.lane.b32.xlu0 %v999, 32
        %v2039 = vpop.permute.xlu0 %2038
        %2040 = vrot.lane.b32.xlu0 %v1001, 32
        %v2041 = vpop.permute.xlu0 %2040
        %v2042 = vsel %vm1048, %v2039, 0
        %v2044 = vsel %vm1048, %v2041, 0
        %2046 = vmatprep.subr.mxu0 0.0
        %2047 = vmatpush1.xpose.msra.mxu0 %v2044
        %2048 = vmatprep.subr.mxu0 0.0
        %2049 = vmatpush1.xpose.msra.mxu0 0.0
        %2050 = vmatprep.subr.mxu0 0.0
        %2051 = vmatpush1.xpose.msra.mxu0 0.0
        %2052 = vmatprep.subr.mxu0 0.0
        %2053 = vmatpush1.xpose.msra.mxu0 0.0
        %2054 = vmatprep.subr.mxu0 0.0
        %2055 = vmatpush1.xpose.msra.mxu0 0.0
        %2056 = vmatprep.subr.mxu0 0.0
        %2057 = vmatpush1.xpose.msra.mxu0 0.0
        %2058 = vmatprep.subr.mxu0 0.0
        %2059 = vmatpush1.xpose.msra.mxu0 0.0
        %2060 = vmatprep.subr.mxu0 0.0
        %2061 = vmatpush1.xpose.msra.mxu0 0.0
        %2062 = vmatprep.subr.mxu0 0.0
        %2063 = vmatpush1.xpose.msra.mxu0 0.0
        %2064 = vmatprep.subr.mxu0 0.0
        %2065 = vmatpush1.xpose.msra.mxu0 0.0
        %2066 = vmatprep.subr.mxu0 0.0
        %2067 = vmatpush1.xpose.msra.mxu0 0.0
        %2068 = vmatprep.subr.mxu0 0.0
        %2069 = vmatpush1.xpose.msra.mxu0 0.0
        %2070 = vmatprep.subr.mxu0 0.0
        %2071 = vmatpush1.xpose.msra.mxu0 0.0
        %2072 = vmatprep.subr.mxu0 0.0
        %2073 = vmatpush1.xpose.msra.mxu0 0.0
        %2074 = vmatprep.subr.mxu0 0.0
        %2075 = vmatpush1.xpose.msra.mxu0 0.0
        %2076 = vmatprep.subr.mxu0 0.0
        %2077 = vmatpush1.xpose.msra.mxu0 0.0
        %2078 = vmatprep.subr.mxu0 0.0
        %2079 = vmatpush1.xpose.msra.mxu0 0.0
        %2080 = vmatprep.subr.mxu0 0.0
        %2081 = vmatpush1.xpose.msra.mxu0 0.0
        %2082 = vmatprep.subr.mxu0 0.0
        %2083 = vmatpush1.xpose.msra.mxu0 0.0
        %2084 = vmatprep.subr.mxu0 0.0
        %2085 = vmatpush1.xpose.msra.mxu0 0.0
        %2086 = vmatprep.subr.mxu0 0.0
        %2087 = vmatpush1.xpose.msra.mxu0 0.0
        %2088 = vmatprep.subr.mxu0 0.0
        %2089 = vmatpush1.xpose.msra.mxu0 0.0
        %2090 = vmatprep.subr.mxu0 0.0
        %2091 = vmatpush1.xpose.msra.mxu0 0.0
        %2092 = vmatprep.subr.mxu0 0.0
        %2093 = vmatpush1.xpose.msra.mxu0 0.0
        %2094 = vmatprep.subr.mxu0 0.0
        %2095 = vmatpush1.xpose.msra.mxu0 0.0
        %2096 = vmatprep.subr.mxu0 0.0
        %2097 = vmatpush1.xpose.msra.mxu0 0.0
        %2098 = vmatprep.subr.mxu0 0.0
        %2099 = vmatpush1.xpose.msra.mxu0 0.0
        %2100 = vmatprep.subr.mxu0 0.0
        %2101 = vmatpush1.xpose.msra.mxu0 0.0
        %2102 = vmatprep.subr.mxu0 0.0
        %2103 = vmatpush1.xpose.msra.mxu0 0.0
        %2104 = vmatprep.subr.mxu0 0.0
        %2105 = vmatpush1.xpose.msra.mxu0 0.0
        %2106 = vmatprep.subr.mxu0 0.0
        %2107 = vmatpush1.xpose.msra.mxu0 0.0
        %2108 = vmatprep.subr.mxu0 0.0
        %2109 = vmatpush1.xpose.msra.mxu0 0.0
        %2110 = vmatprep.mubr.f32.mxu0 0.0
        %2111 = vmatmul.mubr.f32.gmra.mrb[0].mxu0 %v2042
        %v2112 = vpop.f32.mrb[0].mxu0
        %v2113 = vadd.f32 0.0, %v2112
        %v2114 = vpop.f32.mrb[0].mxu0
        %2115 = vdwg.mxu0
        %2116 = vrot.lane.b32.xlu0 %v1003, 32
        %v2117 = vpop.permute.xlu0 %2116
        %2118 = vrot.lane.b32.xlu0 %v1005, 32
        %v2119 = vpop.permute.xlu0 %2118
        %v2120 = vsel %vm1048, %v2117, 0
        %v2122 = vsel %vm1048, %v2119, 0
        %2124 = vmatprep.subr.mxu0 0.0
        %2125 = vmatpush1.xpose.msra.mxu0 %v2122
        %2126 = vmatprep.subr.mxu0 0.0
        %2127 = vmatpush1.xpose.msra.mxu0 0.0
        %2128 = vmatprep.subr.mxu0 0.0
        %2129 = vmatpush1.xpose.msra.mxu0 0.0
        %2130 = vmatprep.subr.mxu0 0.0
        %2131 = vmatpush1.xpose.msra.mxu0 0.0
        %2132 = vmatprep.subr.mxu0 0.0
        %2133 = vmatpush1.xpose.msra.mxu0 0.0
        %2134 = vmatprep.subr.mxu0 0.0
        %2135 = vmatpush1.xpose.msra.mxu0 0.0
        %2136 = vmatprep.subr.mxu0 0.0
        %2137 = vmatpush1.xpose.msra.mxu0 0.0
        %2138 = vmatprep.subr.mxu0 0.0
        %2139 = vmatpush1.xpose.msra.mxu0 0.0
        %2140 = vmatprep.subr.mxu0 0.0
        %2141 = vmatpush1.xpose.msra.mxu0 0.0
        %2142 = vmatprep.subr.mxu0 0.0
        %2143 = vmatpush1.xpose.msra.mxu0 0.0
        %2144 = vmatprep.subr.mxu0 0.0
        %2145 = vmatpush1.xpose.msra.mxu0 0.0
        %2146 = vmatprep.subr.mxu0 0.0
        %2147 = vmatpush1.xpose.msra.mxu0 0.0
        %2148 = vmatprep.subr.mxu0 0.0
        %2149 = vmatpush1.xpose.msra.mxu0 0.0
        %2150 = vmatprep.subr.mxu0 0.0
        %2151 = vmatpush1.xpose.msra.mxu0 0.0
        %2152 = vmatprep.subr.mxu0 0.0
        %2153 = vmatpush1.xpose.msra.mxu0 0.0
        %2154 = vmatprep.subr.mxu0 0.0
        %2155 = vmatpush1.xpose.msra.mxu0 0.0
        %2156 = vmatprep.subr.mxu0 0.0
        %2157 = vmatpush1.xpose.msra.mxu0 0.0
        %2158 = vmatprep.subr.mxu0 0.0
        %2159 = vmatpush1.xpose.msra.mxu0 0.0
        %2160 = vmatprep.subr.mxu0 0.0
        %2161 = vmatpush1.xpose.msra.mxu0 0.0
        %2162 = vmatprep.subr.mxu0 0.0
        %2163 = vmatpush1.xpose.msra.mxu0 0.0
        %2164 = vmatprep.subr.mxu0 0.0
        %2165 = vmatpush1.xpose.msra.mxu0 0.0
        %2166 = vmatprep.subr.mxu0 0.0
        %2167 = vmatpush1.xpose.msra.mxu0 0.0
        %2168 = vmatprep.subr.mxu0 0.0
        %2169 = vmatpush1.xpose.msra.mxu0 0.0
        %2170 = vmatprep.subr.mxu0 0.0
        %2171 = vmatpush1.xpose.msra.mxu0 0.0
        %2172 = vmatprep.subr.mxu0 0.0
        %2173 = vmatpush1.xpose.msra.mxu0 0.0
        %2174 = vmatprep.subr.mxu0 0.0
        %2175 = vmatpush1.xpose.msra.mxu0 0.0
        %2176 = vmatprep.subr.mxu0 0.0
        %2177 = vmatpush1.xpose.msra.mxu0 0.0
        %2178 = vmatprep.subr.mxu0 0.0
        %2179 = vmatpush1.xpose.msra.mxu0 0.0
        %2180 = vmatprep.subr.mxu0 0.0
        %2181 = vmatpush1.xpose.msra.mxu0 0.0
        %2182 = vmatprep.subr.mxu0 0.0
        %2183 = vmatpush1.xpose.msra.mxu0 0.0
        %2184 = vmatprep.subr.mxu0 0.0
        %2185 = vmatpush1.xpose.msra.mxu0 0.0
        %2186 = vmatprep.subr.mxu0 0.0
        %2187 = vmatpush1.xpose.msra.mxu0 0.0
        %2188 = vmatprep.mubr.f32.mxu0 0.0
        %2189 = vmatmul.mubr.f32.gmra.mrb[0].mxu0 %v2120
        %v2190 = vpop.f32.mrb[0].mxu0
        %v2191 = vadd.f32 0.0, %v2190
        %v2192 = vpop.f32.mrb[0].mxu0
        %2193 = vdwg.mxu0
        %v2194 = vmul.f32 %v2113, 0.17677669
        %v2195 = vmul.f32 %v2191, 0.17677669
        %v2196 = vsel %vm1203, %v2194, -inf
        %2197 = vmax.xlane.f32.xlu0 %v2196
        %v2198 = vpop.xlane.xlu0 %2197
        %v2199 = vsel %vm1203, %v2195, -inf
        %2200 = vmax.xlane.f32.xlu0 %v2199
        %v2201 = vpop.xlane.xlu0 %2200
        %v2202 = vsub.f32 %v2194, %v2198
        %v2203 = vsub.f32 %v2195, %v2201
        %v2204 = vmul.f32 %v2202, 1.442695
        %v2205 = vpow.pop %v2204
        %v2206 = vmul.f32 %v2203, 1.442695
        %v2207 = vpow.pop %v2206
        %v2208 = vsel %vm1203, %v2205, 0.0
        %2209 = vadd.xlane.f32.xlu0 %v2208
        %v2210 = vpop.xlane.xlu0 %2209
        %v2211 = vsel %vm1203, %v2207, 0.0
        %2212 = vadd.xlane.f32.xlu0 %v2211
        %v2213 = vpop.xlane.xlu0 %2212
        %v2214 = vrcp.pop %v2210
        %v2215 = vmul.f32 %v2205, %v2214
        %v2216 = vrcp.pop %v2213
        %v2217 = vmul.f32 %v2207, %v2216
        %2218 = vrot.lane.b32.xlu0 %v1042, 32
        %v2219 = vpop.permute.xlu0 %2218
        %v2222 = vsel %vm1203, %v2215, 0
        %2224 = vmatprep.subr.mxu0 0.0
        %2225 = vmatpush1.msra.mxu0 %v2219
        %2226 = vmatprep.subr.mxu0 0.0
        %2227 = vmatpush1.msra.mxu0 0.0
        %2228 = vmatprep.subr.mxu0 0.0
        %2229 = vmatpush1.msra.mxu0 0.0
        %2230 = vmatprep.subr.mxu0 0.0
        %2231 = vmatpush1.msra.mxu0 0.0
        %2232 = vmatprep.subr.mxu0 0.0
        %2233 = vmatpush1.msra.mxu0 0.0
        %2234 = vmatprep.subr.mxu0 0.0
        %2235 = vmatpush1.msra.mxu0 0.0
        %2236 = vmatprep.subr.mxu0 0.0
        %2237 = vmatpush1.msra.mxu0 0.0
        %2238 = vmatprep.subr.mxu0 0.0
        %2239 = vmatpush1.msra.mxu0 0.0
        %2240 = vmatprep.subr.mxu0 0.0
        %2241 = vmatpush1.msra.mxu0 0.0
        %2242 = vmatprep.subr.mxu0 0.0
        %2243 = vmatpush1.msra.mxu0 0.0
        %2244 = vmatprep.subr.mxu0 0.0
        %2245 = vmatpush1.msra.mxu0 0.0
        %2246 = vmatprep.subr.mxu0 0.0
        %2247 = vmatpush1.msra.mxu0 0.0
        %2248 = vmatprep.subr.mxu0 0.0
        %2249 = vmatpush1.msra.mxu0 0.0
        %2250 = vmatprep.subr.mxu0 0.0
        %2251 = vmatpush1.msra.mxu0 0.0
        %2252 = vmatprep.subr.mxu0 0.0
        %2253 = vmatpush1.msra.mxu0 0.0
        %2254 = vmatprep.subr.mxu0 0.0
        %2255 = vmatpush1.msra.mxu0 0.0
        %2256 = vmatprep.subr.mxu0 0.0
        %2257 = vmatpush1.msra.mxu0 0.0
        %2258 = vmatprep.subr.mxu0 0.0
        %2259 = vmatpush1.msra.mxu0 0.0
        %2260 = vmatprep.subr.mxu0 0.0
        %2261 = vmatpush1.msra.mxu0 0.0
        %2262 = vmatprep.subr.mxu0 0.0
        %2263 = vmatpush1.msra.mxu0 0.0
        %2264 = vmatprep.subr.mxu0 0.0
        %2265 = vmatpush1.msra.mxu0 0.0
        %2266 = vmatprep.subr.mxu0 0.0
        %2267 = vmatpush1.msra.mxu0 0.0
        %2268 = vmatprep.subr.mxu0 0.0
        %2269 = vmatpush1.msra.mxu0 0.0
        %2270 = vmatprep.subr.mxu0 0.0
        %2271 = vmatpush1.msra.mxu0 0.0
        %2272 = vmatprep.subr.mxu0 0.0
        %2273 = vmatpush1.msra.mxu0 0.0
        %2274 = vmatprep.subr.mxu0 0.0
        %2275 = vmatpush1.msra.mxu0 0.0
        %2276 = vmatprep.subr.mxu0 0.0
        %2277 = vmatpush1.msra.mxu0 0.0
        %2278 = vmatprep.subr.mxu0 0.0
        %2279 = vmatpush1.msra.mxu0 0.0
        %2280 = vmatprep.subr.mxu0 0.0
        %2281 = vmatpush1.msra.mxu0 0.0
        %2282 = vmatprep.subr.mxu0 0.0
        %2283 = vmatpush1.msra.mxu0 0.0
        %2284 = vmatprep.subr.mxu0 0.0
        %2285 = vmatpush1.msra.mxu0 0.0
        %2286 = vmatprep.subr.mxu0 0.0
        %2287 = vmatpush1.msra.mxu0 0.0
        %2288 = vmatprep.mubr.f32.mxu0 0.0
        %2289 = vmatmul.mubr.f32.gmra.mrb[0].mxu0 %v2222
        %v2290 = vpop.f32.mrb[0].mxu0
        %v2291 = vadd.f32 0.0, %v2290
        %v2292 = vpop.f32.mrb[0].mxu0
        %2293 = vdwg.mxu0
        %2294 = vrot.lane.b32.xlu0 %v1045, 32
        %v2295 = vpop.permute.xlu0 %2294
        %v2298 = vsel %vm1203, %v2217, 0
        %2300 = vmatprep.subr.mxu0 0.0
        %2301 = vmatpush1.msra.mxu0 %v2295
        %2302 = vmatprep.subr.mxu0 0.0
        %2303 = vmatpush1.msra.mxu0 0.0
        %2304 = vmatprep.subr.mxu0 0.0
        %2305 = vmatpush1.msra.mxu0 0.0
        %2306 = vmatprep.subr.mxu0 0.0
        %2307 = vmatpush1.msra.mxu0 0.0
        %2308 = vmatprep.subr.mxu0 0.0
        %2309 = vmatpush1.msra.mxu0 0.0
        %2310 = vmatprep.subr.mxu0 0.0
        %2311 = vmatpush1.msra.mxu0 0.0
        %2312 = vmatprep.subr.mxu0 0.0
        %2313 = vmatpush1.msra.mxu0 0.0
        %2314 = vmatprep.subr.mxu0 0.0
        %2315 = vmatpush1.msra.mxu0 0.0
        %2316 = vmatprep.subr.mxu0 0.0
        %2317 = vmatpush1.msra.mxu0 0.0
        %2318 = vmatprep.subr.mxu0 0.0
        %2319 = vmatpush1.msra.mxu0 0.0
        %2320 = vmatprep.subr.mxu0 0.0
        %2321 = vmatpush1.msra.mxu0 0.0
        %2322 = vmatprep.subr.mxu0 0.0
        %2323 = vmatpush1.msra.mxu0 0.0
        %2324 = vmatprep.subr.mxu0 0.0
        %2325 = vmatpush1.msra.mxu0 0.0
        %2326 = vmatprep.subr.mxu0 0.0
        %2327 = vmatpush1.msra.mxu0 0.0
        %2328 = vmatprep.subr.mxu0 0.0
        %2329 = vmatpush1.msra.mxu0 0.0
        %2330 = vmatprep.subr.mxu0 0.0
        %2331 = vmatpush1.msra.mxu0 0.0
        %2332 = vmatprep.subr.mxu0 0.0
        %2333 = vmatpush1.msra.mxu0 0.0
        %2334 = vmatprep.subr.mxu0 0.0
        %2335 = vmatpush1.msra.mxu0 0.0
        %2336 = vmatprep.subr.mxu0 0.0
        %2337 = vmatpush1.msra.mxu0 0.0
        %2338 = vmatprep.subr.mxu0 0.0
        %2339 = vmatpush1.msra.mxu0 0.0
        %2340 = vmatprep.subr.mxu0 0.0
        %2341 = vmatpush1.msra.mxu0 0.0
        %2342 = vmatprep.subr.mxu0 0.0
        %2343 = vmatpush1.msra.mxu0 0.0
        %2344 = vmatprep.subr.mxu0 0.0
        %2345 = vmatpush1.msra.mxu0 0.0
        %2346 = vmatprep.subr.mxu0 0.0
        %2347 = vmatpush1.msra.mxu0 0.0
        %2348 = vmatprep.subr.mxu0 0.0
        %2349 = vmatpush1.msra.mxu0 0.0
        %2350 = vmatprep.subr.mxu0 0.0
        %2351 = vmatpush1.msra.mxu0 0.0
        %2352 = vmatprep.subr.mxu0 0.0
        %2353 = vmatpush1.msra.mxu0 0.0
        %2354 = vmatprep.subr.mxu0 0.0
        %2355 = vmatpush1.msra.mxu0 0.0
        %2356 = vmatprep.subr.mxu0 0.0
        %2357 = vmatpush1.msra.mxu0 0.0
        %2358 = vmatprep.subr.mxu0 0.0
        %2359 = vmatpush1.msra.mxu0 0.0
        %2360 = vmatprep.subr.mxu0 0.0
        %2361 = vmatpush1.msra.mxu0 0.0
        %2362 = vmatprep.subr.mxu0 0.0
        %2363 = vmatpush1.msra.mxu0 0.0
        %2364 = vmatprep.mubr.f32.mxu0 0.0
        %2365 = vmatmul.mubr.f32.gmra.mrb[0].mxu0 %v2298
        %v2366 = vpop.f32.mrb[0].mxu0
        %v2367 = vadd.f32 0.0, %v2366
        %v2368 = vpop.f32.mrb[0].mxu0
        %2369 = vdwg.mxu0
        %2372 = vrot.lane.b32.xlu0 %v1626, 32
        %v2373 = vpop.permute.xlu0 %2372
        %2374 = vrot.lane.b32.xlu0 %v1703, 32
        %v2375 = vpop.permute.xlu0 %2374
        %2380 = vrot.lane.b32.xlu0 %v1959, 64
        %v2381 = vpop.permute.xlu0 %2380
        %2382 = vrot.lane.b32.xlu0 %v2035, 64
        %v2383 = vpop.permute.xlu0 %2382
        %2388 = vrot.lane.b32.xlu0 %v2291, 96
        %v2389 = vpop.permute.xlu0 %2388
        %2390 = vrot.lane.b32.xlu0 %v2367, 96
        %v2391 = vpop.permute.xlu0 %2390
        %v2394 = vsel %vm1048, %v1296, %v2373
        %v2395 = vsel %vm1048, %v1369, %v2375
        %vm2396 = vcmask 523264
        %v2397 = vsel %vm2396, %v2394, %v2381
        %v2398 = vsel %vm2396, %v2395, %v2383
        %vm2399 = vcmask 785408
        %v2400 = vsel %vm2399, %v2397, %v2389
        %v2401 = vsel %vm2399, %v2398, %v2391
        %v2402 = vpack.c.bf16 %v2401, %v2400
        %v2403 = vld [vmem:[%s634] sm:$0xf]
        %v2404 = vld [vmem:[%s634 + $0x4] sm:$0xf]
        %v2405 = vld [vmem:[%s634 + $0x8] sm:$0xf]
        %v2406 = vld [vmem:[%s634 + $0xc] sm:$0xf]
        %v2407 = vld [vmem:[%s634 + $0x10] sm:$0xf]
        %v2408 = vld [vmem:[%s634 + $0x14] sm:$0xf]
        %v2409 = vld [vmem:[%s634 + $0x18] sm:$0xf]
        %v2410 = vld [vmem:[%s634 + $0x1c] sm:$0xf]
        %v2411 = vld [vmem:[%s634 + $0x20] sm:$0xf]
        %v2412 = vld [vmem:[%s634 + $0x24] sm:$0xf]
        %v2413 = vld [vmem:[%s634 + $0x28] sm:$0xf]
        %v2414 = vld [vmem:[%s634 + $0x2c] sm:$0xf]
        %v2415 = vld [vmem:[%s634 + $0x30] sm:$0xf]
        %v2416 = vld [vmem:[%s634 + $0x34] sm:$0xf]
        %v2417 = vld [vmem:[%s634 + $0x38] sm:$0xf]
        %v2418 = vld [vmem:[%s634 + $0x3c] sm:$0xf]
        %v2419 = vld [vmem:[%s737] sm:$0x1]
        %v2421 = vlaneseq
        %v2422 = vshrl.u32 %v2421, 7
        %v2423 = vsub.s32 0, %v2422
        %v2424 = vrot.slane %v2419, %v2423
        %v2442 = vunpack.c.l.b16 %v2403
        %v2443 = vunpack.c.l.b16 %v2404
        %v2444 = vunpack.c.l.b16 %v2405
        %v2445 = vunpack.c.l.b16 %v2406
        %v2446 = vunpack.c.l.b16 %v2407
        %v2447 = vunpack.c.l.b16 %v2408
        %v2448 = vunpack.c.l.b16 %v2409
        %v2449 = vunpack.c.l.b16 %v2410
        %v2450 = vunpack.c.l.b16 %v2411
        %v2451 = vunpack.c.l.b16 %v2412
        %v2452 = vunpack.c.l.b16 %v2413
        %v2453 = vunpack.c.l.b16 %v2414
        %v2454 = vunpack.c.l.b16 %v2415
        %v2455 = vunpack.c.l.b16 %v2416
        %v2456 = vunpack.c.l.b16 %v2417
        %v2457 = vunpack.c.l.b16 %v2418
        %v2458 = vpack.c.b16 %v2443, %v2442
        %v2459 = vpack.c.b16 %v2445, %v2444
        %v2460 = vpack.c.b16 %v2447, %v2446
        %v2461 = vpack.c.b16 %v2449, %v2448
        %v2462 = vpack.c.b16 %v2451, %v2450
        %v2463 = vpack.c.b16 %v2453, %v2452
        %v2464 = vpack.c.b16 %v2455, %v2454
        %v2465 = vpack.c.b16 %v2457, %v2456
        %2474 = vmatprep.subr.bf16.mxu0 0
        %2475 = vmatpush1.bf16.msra.mxu0 %v2458
        %2476 = vmatprep.subr.bf16.mxu0 0
        %2477 = vmatpush1.bf16.msra.mxu0 %v2459
        %2478 = vmatprep.subr.bf16.mxu0 0
        %2479 = vmatpush1.bf16.msra.mxu0 %v2460
        %2480 = vmatprep.subr.bf16.mxu0 0
        %2481 = vmatpush1.bf16.msra.mxu0 %v2461
        %2482 = vmatprep.subr.bf16.mxu0 0
        %2483 = vmatpush1.bf16.msra.mxu0 %v2462
        %2484 = vmatprep.subr.bf16.mxu0 0
        %2485 = vmatpush1.bf16.msra.mxu0 %v2463
        %2486 = vmatprep.subr.bf16.mxu0 0
        %2487 = vmatpush1.bf16.msra.mxu0 %v2464
        %2488 = vmatprep.subr.bf16.mxu0 0
        %2489 = vmatpush1.bf16.msra.mxu0 %v2465
        %2490 = vmatprep.subr.bf16.mxu0 0
        %2491 = vmatpush1.bf16.msra.mxu0 0
        %2492 = vmatprep.subr.bf16.mxu0 0
        %2493 = vmatpush1.bf16.msra.mxu0 0
        %2494 = vmatprep.subr.bf16.mxu0 0
        %2495 = vmatpush1.bf16.msra.mxu0 0
        %2496 = vmatprep.subr.bf16.mxu0 0
        %2497 = vmatpush1.bf16.msra.mxu0 0
        %2498 = vmatprep.subr.bf16.mxu0 0
        %2499 = vmatpush1.bf16.msra.mxu0 0
        %2500 = vmatprep.subr.bf16.mxu0 0
        %2501 = vmatpush1.bf16.msra.mxu0 0
        %2502 = vmatprep.subr.bf16.mxu0 0
        %2503 = vmatpush1.bf16.msra.mxu0 0
        %2504 = vmatprep.subr.bf16.mxu0 0
        %2505 = vmatpush1.bf16.msra.mxu0 0
        %2506 = vmatprep.mubr.bf16.mxu0 0
        %2507 = vmatmul.mubr.bf16.gmra.mrb[0].mxu0 %v2402
        %v2508 = vpop.f32.mrb[0].mxu0
        %v2509 = vadd.f32 %v2424, %v2508
        %v2510 = vpop.f32.mrb[0].mxu0
        %v2511 = vpop.f32.mrb[0].mxu0
        %v2512 = vadd.f32 %v2424, %v2511
        %v2513 = vpop.f32.mrb[0].mxu0
        %2514 = vdwg.mxu0
        %v2515 = vadd.f32 %v760, %v2509
        %v2516 = vadd.f32 %v761, %v2512
        %v2517 = vld [vmem:[%s1] sm:$0x1]
        %v2518 = vld [vmem:[%s1 + $0x1] sm:$0x1]
        %v2521 = vlaneseq
        %v2522 = vshrl.u32 %v2521, 7
        %v2523 = vsub.s32 0, %v2522
        %v2524 = vrot.slane %v2517, %v2523
        %v2525 = vlaneseq
        %v2526 = vshrl.u32 %v2525, 7
        %v2527 = vsub.s32 0, %v2526
        %v2528 = vrot.slane %v2518, %v2527
        %v2531 = vadd.f32 %v2515, %v2524
        %v2532 = vadd.f32 %v2516, %v2528
        %v2533 = vld [vmem:[%s740] sm:$0x1]
        %v2534 = vld [vmem:[%s743] sm:$0x1]
        %2535 = vadd.xlane.f32.xlu0 %v2531
        %v2536 = vpop.xlane.xlu0 %2535
        %2537 = vadd.xlane.f32.xlu0 %v2532
        %v2538 = vpop.xlane.xlu0 %2537
        %v2539 = vmul.f32 %v2536, %v768
        %v2540 = vmul.f32 %v2538, %v768
        %v2541 = vsub.f32 %v2531, %v2539
        %v2542 = vsub.f32 %v2532, %v2540
        %v2543 = vmul.f32 %v2541, %v2541
        %v2544 = vmul.f32 %v2542, %v2542
        %2545 = vadd.xlane.f32.xlu0 %v2543
        %v2546 = vpop.xlane.xlu0 %2545
        %2547 = vadd.xlane.f32.xlu0 %v2544
        %v2548 = vpop.xlane.xlu0 %2547
        %v2549 = vmul.f32 %v2546, %v768
        %v2550 = vmul.f32 %v2548, %v768
        %v2551 = vadd.f32 %v2549, 1e-05
        %v2552 = vadd.f32 %v2550, 1e-05
        %v2553 = vrsqrt.pop %v2551
        %v2554 = vrsqrt.pop %v2552
        %v2555 = vmul.f32 %v2541, %v2553
        %v2556 = vmul.f32 %v2542, %v2554
        %v2558 = vlaneseq
        %v2559 = vshrl.u32 %v2558, 7
        %v2560 = vsub.s32 0, %v2559
        %v2561 = vrot.slane %v2533, %v2560
        %v2563 = vmul.f32 %v2555, %v2561
        %v2564 = vmul.f32 %v2556, %v2561
        %v2566 = vlaneseq
        %v2567 = vshrl.u32 %v2566, 7
        %v2568 = vsub.s32 0, %v2567
        %v2569 = vrot.slane %v2534, %v2568
        %v2571 = vadd.f32 %v2563, %v2569
        %v2572 = vadd.f32 %v2564, %v2569
        %v2573 = vpack.c.bf16 %v2572, %v2571
        %v2574 = vld [vmem:[%s643] sm:$0xff]
        %v2575 = vld [vmem:[%s643 + $0x8] sm:$0xff]
        %v2576 = vld [vmem:[%s643 + $0x10] sm:$0xff]
        %v2577 = vld [vmem:[%s643 + $0x18] sm:$0xff]
        %v2578 = vld [vmem:[%s643 + $0x20] sm:$0xff]
        %v2579 = vld [vmem:[%s643 + $0x28] sm:$0xff]
        %v2580 = vld [vmem:[%s643 + $0x30] sm:$0xff]
        %v2581 = vld [vmem:[%s643 + $0x38] sm:$0xff]
        %v2582 = vld [vmem:[%s643 + $0x40] sm:$0xff]
        %v2583 = vld [vmem:[%s643 + $0x48] sm:$0xff]
        %v2584 = vld [vmem:[%s643 + $0x50] sm:$0xff]
        %v2585 = vld [vmem:[%s643 + $0x58] sm:$0xff]
        %v2586 = vld [vmem:[%s643 + $0x60] sm:$0xff]
        %v2587 = vld [vmem:[%s643 + $0x68] sm:$0xff]
        %v2588 = vld [vmem:[%s643 + $0x70] sm:$0xff]
        %v2589 = vld [vmem:[%s643 + $0x78] sm:$0xff]
        %v2590 = vld [vmem:[%s747] sm:$0x3]
        %v2592 = vlaneseq
        %v2593 = vshrl.u32 %v2592, 7
        %v2594 = vsub.s32 0, %v2593
        %v2595 = vrot.slane %v2590, %v2594
        %v2596 = vlaneseq
        %v2597 = vshrl.u32 %v2596, 7
        %v2598 = vsub.s32 1, %v2597
        %v2599 = vrot.slane %v2590, %v2598
        %v2618 = vunpack.c.l.b16 %v2574
        %v2619 = vunpack.c.h.b16 %v2574
        %v2620 = vunpack.c.l.b16 %v2575
        %v2621 = vunpack.c.h.b16 %v2575
        %v2622 = vunpack.c.l.b16 %v2576
        %v2623 = vunpack.c.h.b16 %v2576
        %v2624 = vunpack.c.l.b16 %v2577
        %v2625 = vunpack.c.h.b16 %v2577
        %v2626 = vunpack.c.l.b16 %v2578
        %v2627 = vunpack.c.h.b16 %v2578
        %v2628 = vunpack.c.l.b16 %v2579
        %v2629 = vunpack.c.h.b16 %v2579
        %v2630 = vunpack.c.l.b16 %v2580
        %v2631 = vunpack.c.h.b16 %v2580
        %v2632 = vunpack.c.l.b16 %v2581
        %v2633 = vunpack.c.h.b16 %v2581
        %v2634 = vunpack.c.l.b16 %v2582
        %v2635 = vunpack.c.h.b16 %v2582
        %v2636 = vunpack.c.l.b16 %v2583
        %v2637 = vunpack.c.h.b16 %v2583
        %v2638 = vunpack.c.l.b16 %v2584
        %v2639 = vunpack.c.h.b16 %v2584
        %v2640 = vunpack.c.l.b16 %v2585
        %v2641 = vunpack.c.h.b16 %v2585
        %v2642 = vunpack.c.l.b16 %v2586
        %v2643 = vunpack.c.h.b16 %v2586
        %v2644 = vunpack.c.l.b16 %v2587
        %v2645 = vunpack.c.h.b16 %v2587
        %v2646 = vunpack.c.l.b16 %v2588
        %v2647 = vunpack.c.h.b16 %v2588
        %v2648 = vunpack.c.l.b16 %v2589
        %v2649 = vunpack.c.h.b16 %v2589
        %v2650 = vpack.c.b16 %v2620, %v2618
        %v2651 = vpack.c.b16 %v2621, %v2619
        %v2652 = vpack.c.b16 %v2624, %v2622
        %v2653 = vpack.c.b16 %v2625, %v2623
        %v2654 = vpack.c.b16 %v2628, %v2626
        %v2655 = vpack.c.b16 %v2629, %v2627
        %v2656 = vpack.c.b16 %v2632, %v2630
        %v2657 = vpack.c.b16 %v2633, %v2631
        %v2658 = vpack.c.b16 %v2636, %v2634
        %v2659 = vpack.c.b16 %v2637, %v2635
        %v2660 = vpack.c.b16 %v2640, %v2638
        %v2661 = vpack.c.b16 %v2641, %v2639
        %v2662 = vpack.c.b16 %v2644, %v2642
        %v2663 = vpack.c.b16 %v2645, %v2643
        %v2664 = vpack.c.b16 %v2648, %v2646
        %v2665 = vpack.c.b16 %v2649, %v2647
        %2682 = vmatprep.subr.bf16.mxu0 %v2651
        %2683 = vmatpush1.bf16.msra.mxu0 %v2650
        %2684 = vmatprep.subr.bf16.mxu0 %v2653
        %2685 = vmatpush1.bf16.msra.mxu0 %v2652
        %2686 = vmatprep.subr.bf16.mxu0 %v2655
        %2687 = vmatpush1.bf16.msra.mxu0 %v2654
        %2688 = vmatprep.subr.bf16.mxu0 %v2657
        %2689 = vmatpush1.bf16.msra.mxu0 %v2656
        %2690 = vmatprep.subr.bf16.mxu0 %v2659
        %2691 = vmatpush1.bf16.msra.mxu0 %v2658
        %2692 = vmatprep.subr.bf16.mxu0 %v2661
        %2693 = vmatpush1.bf16.msra.mxu0 %v2660
        %2694 = vmatprep.subr.bf16.mxu0 %v2663
        %2695 = vmatpush1.bf16.msra.mxu0 %v2662
        %2696 = vmatprep.subr.bf16.mxu0 %v2665
        %2697 = vmatpush1.bf16.msra.mxu0 %v2664
        %2698 = vmatprep.subr.bf16.mxu0 0
        %2699 = vmatpush1.bf16.msra.mxu0 0
        %2700 = vmatprep.subr.bf16.mxu0 0
        %2701 = vmatpush1.bf16.msra.mxu0 0
        %2702 = vmatprep.subr.bf16.mxu0 0
        %2703 = vmatpush1.bf16.msra.mxu0 0
        %2704 = vmatprep.subr.bf16.mxu0 0
        %2705 = vmatpush1.bf16.msra.mxu0 0
        %2706 = vmatprep.subr.bf16.mxu0 0
        %2707 = vmatpush1.bf16.msra.mxu0 0
        %2708 = vmatprep.subr.bf16.mxu0 0
        %2709 = vmatpush1.bf16.msra.mxu0 0
        %2710 = vmatprep.subr.bf16.mxu0 0
        %2711 = vmatpush1.bf16.msra.mxu0 0
        %2712 = vmatprep.subr.bf16.mxu0 0
        %2713 = vmatpush1.bf16.msra.mxu0 0
        %2714 = vmatprep.mubr.bf16.mxu0 0
        %2715 = vmatmul.mubr.bf16.gmra.mrb[0].mxu0 %v2573
        %v2716 = vpop.f32.mrb[0].mxu0
        %v2717 = vadd.f32 %v2595, %v2716
        %v2718 = vpop.f32.mrb[0].mxu0
        %v2719 = vadd.f32 %v2599, %v2718
        %v2720 = vpop.f32.mrb[0].mxu0
        %v2721 = vadd.f32 %v2595, %v2720
        %v2722 = vpop.f32.mrb[0].mxu0
        %v2723 = vadd.f32 %v2599, %v2722
        %2724 = vdwg.mxu0
        %v2725 = vmul.f32 %v2717, 0.5
        %v2726 = vmul.f32 %v2719, 0.5
        %v2727 = vmul.f32 %v2721, 0.5
        %v2728 = vmul.f32 %v2723, 0.5
        %v2729 = vmul.f32 %v2717, 0.70710677
        %v2730 = vmul.f32 %v2719, 0.70710677
        %v2731 = vmul.f32 %v2721, 0.70710677
        %v2732 = vmul.f32 %v2723, 0.70710677
        %v2733 = verf.f32.pop %v2729
        %v2734 = verf.f32.pop %v2730
        %v2735 = verf.f32.pop %v2731
        %v2736 = verf.f32.pop %v2732
        %v2737 = vadd.f32 %v2733, 1.0
        %v2738 = vadd.f32 %v2734, 1.0
        %v2739 = vadd.f32 %v2735, 1.0
        %v2740 = vadd.f32 %v2736, 1.0
        %v2741 = vmul.f32 %v2725, %v2737
        %v2742 = vmul.f32 %v2726, %v2738
        %v2743 = vmul.f32 %v2727, %v2739
        %v2744 = vmul.f32 %v2728, %v2740
        %v2745 = vpack.c.bf16 %v2743, %v2741
        %v2746 = vpack.c.bf16 %v2744, %v2742
        %v2747 = vld [vmem:[%s652] sm:$0xf]
        %v2748 = vld [vmem:[%s652 + $0x4] sm:$0xf]
        %v2749 = vld [vmem:[%s652 + $0x8] sm:$0xf]
        %v2750 = vld [vmem:[%s652 + $0xc] sm:$0xf]
        %v2751 = vld [vmem:[%s652 + $0x10] sm:$0xf]
        %v2752 = vld [vmem:[%s652 + $0x14] sm:$0xf]
        %v2753 = vld [vmem:[%s652 + $0x18] sm:$0xf]
        %v2754 = vld [vmem:[%s652 + $0x1c] sm:$0xf]
        %v2755 = vld [vmem:[%s652 + $0x20] sm:$0xf]
        %v2756 = vld [vmem:[%s652 + $0x24] sm:$0xf]
        %v2757 = vld [vmem:[%s652 + $0x28] sm:$0xf]
        %v2758 = vld [vmem:[%s652 + $0x2c] sm:$0xf]
        %v2759 = vld [vmem:[%s652 + $0x30] sm:$0xf]
        %v2760 = vld [vmem:[%s652 + $0x34] sm:$0xf]
        %v2761 = vld [vmem:[%s652 + $0x38] sm:$0xf]
        %v2762 = vld [vmem:[%s652 + $0x3c] sm:$0xf]
        %v2763 = vld [vmem:[%s652 + $0x40] sm:$0xf]
        %v2764 = vld [vmem:[%s652 + $0x44] sm:$0xf]
        %v2765 = vld [vmem:[%s652 + $0x48] sm:$0xf]
        %v2766 = vld [vmem:[%s652 + $0x4c] sm:$0xf]
        %v2767 = vld [vmem:[%s652 + $0x50] sm:$0xf]
        %v2768 = vld [vmem:[%s652 + $0x54] sm:$0xf]
        %v2769 = vld [vmem:[%s652 + $0x58] sm:$0xf]
        %v2770 = vld [vmem:[%s652 + $0x5c] sm:$0xf]
        %v2771 = vld [vmem:[%s652 + $0x60] sm:$0xf]
        %v2772 = vld [vmem:[%s652 + $0x64] sm:$0xf]
        %v2773 = vld [vmem:[%s652 + $0x68] sm:$0xf]
        %v2774 = vld [vmem:[%s652 + $0x6c] sm:$0xf]
        %v2775 = vld [vmem:[%s652 + $0x70] sm:$0xf]
        %v2776 = vld [vmem:[%s652 + $0x74] sm:$0xf]
        %v2777 = vld [vmem:[%s652 + $0x78] sm:$0xf]
        %v2778 = vld [vmem:[%s652 + $0x7c] sm:$0xf]
        %v2779 = vld [vmem:[%s750] sm:$0x1]
        %v2781 = vlaneseq
        %v2782 = vshrl.u32 %v2781, 7
        %v2783 = vsub.s32 0, %v2782
        %v2784 = vrot.slane %v2779, %v2783
        %v2818 = vunpack.c.l.b16 %v2747
        %v2819 = vunpack.c.l.b16 %v2748
        %v2820 = vunpack.c.l.b16 %v2749
        %v2821 = vunpack.c.l.b16 %v2750
        %v2822 = vunpack.c.l.b16 %v2751
        %v2823 = vunpack.c.l.b16 %v2752
        %v2824 = vunpack.c.l.b16 %v2753
        %v2825 = vunpack.c.l.b16 %v2754
        %v2826 = vunpack.c.l.b16 %v2755
        %v2827 = vunpack.c.l.b16 %v2756
        %v2828 = vunpack.c.l.b16 %v2757
        %v2829 = vunpack.c.l.b16 %v2758
        %v2830 = vunpack.c.l.b16 %v2759
        %v2831 = vunpack.c.l.b16 %v2760
        %v2832 = vunpack.c.l.b16 %v2761
        %v2833 = vunpack.c.l.b16 %v2762
        %v2834 = vunpack.c.l.b16 %v2763
        %v2835 = vunpack.c.l.b16 %v2764
        %v2836 = vunpack.c.l.b16 %v2765
        %v2837 = vunpack.c.l.b16 %v2766
        %v2838 = vunpack.c.l.b16 %v2767
        %v2839 = vunpack.c.l.b16 %v2768
        %v2840 = vunpack.c.l.b16 %v2769
        %v2841 = vunpack.c.l.b16 %v2770
        %v2842 = vunpack.c.l.b16 %v2771
        %v2843 = vunpack.c.l.b16 %v2772
        %v2844 = vunpack.c.l.b16 %v2773
        %v2845 = vunpack.c.l.b16 %v2774
        %v2846 = vunpack.c.l.b16 %v2775
        %v2847 = vunpack.c.l.b16 %v2776
        %v2848 = vunpack.c.l.b16 %v2777
        %v2849 = vunpack.c.l.b16 %v2778
        %v2850 = vpack.c.b16 %v2819, %v2818
        %v2851 = vpack.c.b16 %v2821, %v2820
        %v2852 = vpack.c.b16 %v2823, %v2822
        %v2853 = vpack.c.b16 %v2825, %v2824
        %v2854 = vpack.c.b16 %v2827, %v2826
        %v2855 = vpack.c.b16 %v2829, %v2828
        %v2856 = vpack.c.b16 %v2831, %v2830
        %v2857 = vpack.c.b16 %v2833, %v2832
        %v2858 = vpack.c.b16 %v2835, %v2834
        %v2859 = vpack.c.b16 %v2837, %v2836
        %v2860 = vpack.c.b16 %v2839, %v2838
        %v2861 = vpack.c.b16 %v2841, %v2840
        %v2862 = vpack.c.b16 %v2843, %v2842
        %v2863 = vpack.c.b16 %v2845, %v2844
        %v2864 = vpack.c.b16 %v2847, %v2846
        %v2865 = vpack.c.b16 %v2849, %v2848
        %2882 = vmatprep.subr.bf16.mxu0 0
        %2883 = vmatpush1.bf16.msra.mxu0 %v2850
        %2884 = vmatprep.subr.bf16.mxu0 0
        %2885 = vmatpush1.bf16.msra.mxu0 %v2851
        %2886 = vmatprep.subr.bf16.mxu0 0
        %2887 = vmatpush1.bf16.msra.mxu0 %v2852
        %2888 = vmatprep.subr.bf16.mxu0 0
        %2889 = vmatpush1.bf16.msra.mxu0 %v2853
        %2890 = vmatprep.subr.bf16.mxu0 0
        %2891 = vmatpush1.bf16.msra.mxu0 %v2854
        %2892 = vmatprep.subr.bf16.mxu0 0
        %2893 = vmatpush1.bf16.msra.mxu0 %v2855
        %2894 = vmatprep.subr.bf16.mxu0 0
        %2895 = vmatpush1.bf16.msra.mxu0 %v2856
        %2896 = vmatprep.subr.bf16.mxu0 0
        %2897 = vmatpush1.bf16.msra.mxu0 %v2857
        %2898 = vmatprep.subr.bf16.mxu0 0
        %2899 = vmatpush1.bf16.msra.mxu0 %v2858
        %2900 = vmatprep.subr.bf16.mxu0 0
        %2901 = vmatpush1.bf16.msra.mxu0 %v2859
        %2902 = vmatprep.subr.bf16.mxu0 0
        %2903 = vmatpush1.bf16.msra.mxu0 %v2860
        %2904 = vmatprep.subr.bf16.mxu0 0
        %2905 = vmatpush1.bf16.msra.mxu0 %v2861
        %2906 = vmatprep.subr.bf16.mxu0 0
        %2907 = vmatpush1.bf16.msra.mxu0 %v2862
        %2908 = vmatprep.subr.bf16.mxu0 0
        %2909 = vmatpush1.bf16.msra.mxu0 %v2863
        %2910 = vmatprep.subr.bf16.mxu0 0
        %2911 = vmatpush1.bf16.msra.mxu0 %v2864
        %2912 = vmatprep.subr.bf16.mxu0 0
        %2913 = vmatpush1.bf16.msra.mxu0 %v2865
        %2914 = vmatprep.mubr.bf16.mxu0 %v2746
        %2915 = vmatmul.mubr.bf16.gmra.mrb[0].mxu0 %v2745
        %v2916 = vpop.f32.mrb[0].mxu0
        %v2917 = vadd.f32 %v2784, %v2916
        %v2918 = vpop.f32.mrb[0].mxu0
        %v2919 = vpop.f32.mrb[0].mxu0
        %v2920 = vadd.f32 %v2784, %v2919
        %v2921 = vpop.f32.mrb[0].mxu0
        %2922 = vdwg.mxu0
        %v2923 = vadd.f32 %v2515, %v2917
        %v2924 = vadd.f32 %v2516, %v2920
        %p2925 = scmp.ne.s32.totalorder %s37, 1
        // Predicated region
        $region109: #{tpu_custom_call.1} parent=79 // pred_check
          %p2926 = pneg %p2925
        $region110: #{tpu_custom_call.1} parent=79 // pred_check_branch
          %2928 = sbr.rel (%p2926) target = $region112
        $region111: #{tpu_custom_call.1} parent=79 // pred_region
          %2929 = vst [vmem:[#allocation13] sm:$0xff] %v2923
          %2930 = vst [vmem:[#allocation13 + $0x8] sm:$0xff] %v2924
        $region112: #{tpu_custom_call.1} parent=79 // pred_fallthru
          _
        %p2931 = scmp.eq.s32.totalorder %s37, 1
        // Predicated region
        $region113: #{tpu_custom_call.1} parent=79 // pred_check
          %p2932 = pneg %p2931
        $region114: #{tpu_custom_call.1} parent=79 // pred_check_branch
          %2934 = sbr.rel (%p2932) target = $region116
        $region115: #{tpu_custom_call.1} parent=79 // pred_region
          %v2935 = vld [vmem:[%s13] sm:$0x1]
          %v2936 = vld [vmem:[%s14] sm:$0x1]
          %2937 = vadd.xlane.f32.xlu0 %v2923
          %v2938 = vpop.xlane.xlu0 %2937
          %2939 = vadd.xlane.f32.xlu0 %v2924
          %v2940 = vpop.xlane.xlu0 %2939
          %v2941 = vmul.f32 %v2938, %v768
          %v2942 = vmul.f32 %v2940, %v768
          %v2943 = vsub.f32 %v2923, %v2941
          %v2944 = vsub.f32 %v2924, %v2942
          %v2945 = vmul.f32 %v2943, %v2943
          %v2946 = vmul.f32 %v2944, %v2944
          %2947 = vadd.xlane.f32.xlu0 %v2945
          %v2948 = vpop.xlane.xlu0 %2947
          %2949 = vadd.xlane.f32.xlu0 %v2946
          %v2950 = vpop.xlane.xlu0 %2949
          %v2951 = vmul.f32 %v2948, %v768
          %v2952 = vmul.f32 %v2950, %v768
          %v2953 = vadd.f32 %v2951, 1e-05
          %v2954 = vadd.f32 %v2952, 1e-05
          %v2955 = vrsqrt.pop %v2953
          %v2956 = vrsqrt.pop %v2954
          %v2957 = vmul.f32 %v2943, %v2955
          %v2958 = vmul.f32 %v2944, %v2956
          %v2960 = vlaneseq
          %v2961 = vshrl.u32 %v2960, 7
          %v2962 = vsub.s32 0, %v2961
          %v2963 = vrot.slane %v2935, %v2962
          %v2965 = vmul.f32 %v2957, %v2963
          %v2966 = vmul.f32 %v2958, %v2963
          %v2968 = vlaneseq
          %v2969 = vshrl.u32 %v2968, 7
          %v2970 = vsub.s32 0, %v2969
          %v2971 = vrot.slane %v2936, %v2970
          %v2973 = vadd.f32 %v2965, %v2971
          %v2974 = vadd.f32 %v2966, %v2971
          %2975 = vst [vmem:[#allocation13] sm:$0xff] %v2973
          %2976 = vst [vmem:[#allocation13 + $0x8] sm:$0xff] %v2974
        $region116: #{tpu_custom_call.1} parent=79 // pred_fallthru
          _
        // Predicated region
        $region117: #{tpu_custom_call.1} parent=79 // pred_check
          %p2977 = pneg %p420
        $region118: #{tpu_custom_call.1} parent=79 // pred_check_branch
          %2979 = sbr.rel (%p2977) target = $region120
        $region119: #{tpu_custom_call.1} parent=79 // pred_region
          %s2981 = ssub.s32 256, 256
          %2982 = vsyncadd [#allocation4], %s2981
          %s2983 = sshll.u32 [#allocation13], 4
          %s2984 = int_to_ptr.vmem [resolvable:$true] %s2983
          %2989 = dma.vmem_to_hbm [thread:$0]  %s2984, 256, %s15, [#allocation4], 128, 128, 8
        $region120: #{tpu_custom_call.1} parent=79 // pred_fallthru
          _
        // Predicated region
        $region121: #{tpu_custom_call.1} parent=79 // pred_check
          %p2990 = pneg %p420
        $region122: #{tpu_custom_call.1} parent=79 // pred_check_branch
          %2992 = sbr.rel (%p2990) target = $region124
        $region123: #{tpu_custom_call.1} parent=79 // pred_region
          %2993 = dma.done [#allocation4], 256
        $region124: #{tpu_custom_call.1} parent=79 // pred_fallthru
          _
      $region80: #{tpu_custom_call.1} parent=5 // pred_fallthru
        _
      %p2994 = scmp.le.s32.totalorder 2, %s32
      // Predicated region
      $region125: #{tpu_custom_call.1} parent=5 // pred_check
        %p2995 = pneg %p2994
      $region126: #{tpu_custom_call.1} parent=5 // pred_check_branch
        %2997 = sbr.rel (%p2995) target = $region128
      $region127: #{tpu_custom_call.1} parent=5 // pred_region
        %s2998 = ssub.s32 %s32, 2
      $region128: #{tpu_custom_call.1} parent=5 // pred_fallthru
        _
    $region6: #{tpu_custom_call.1} parent=1 // loop_footer
      %s36 = sadd.s32 1, %s32
    $region7: #{tpu_custom_call.1} parent=1 // loop_footer_branch
      %31 = sbr.rel target = $region3
    $region8: #{tpu_custom_call.1} parent=1 // loop_exit
      _
    %2999 = vsyncpa [#allocation3], 1
    %s3000 = scalar_lea.sflag [#allocation3], 1
    %3001 = vsyncpa %s3000, 1
    %3002 = vsyncpa [#allocation6], 1
    %s3003 = scalar_lea.sflag [#allocation6], 1
    %3004 = vsyncpa %s3003, 1
    %3005 = vsyncpa [#allocation9], 1
    %s3006 = scalar_lea.sflag [#allocation9], 1
    %3007 = vsyncpa %s3006, 1
    %3008 = vsyncpa [#allocation12], 1
    %s3009 = scalar_lea.sflag [#allocation12], 1
    %3010 = vsyncpa %s3009, 1
    %3011 = vsyncpa [#allocation4], 1
    %s3012 = scalar_lea.sflag [#allocation4], 1
    %3013 = vsyncpa %s3012, 1

</llo_original>
